<compile_context>
chip_gen: v7x
topology: tpu7x:2x2x1
jax: 0.10.0
libtpu: 0.0.40
codegen_flags: <defaults>
</compile_context>

<pallas_src>
import functools
from types import SimpleNamespace

import jax
import jax.numpy as jnp
from jax.experimental import pallas as pl
from jax.experimental.pallas import tpu as pltpu

BF16 = jnp.bfloat16
F32 = jnp.float32


# ------------------------------------------------------------------ helpers --

def _bn_rows(x, gamma, beta, eps=1e-5):
    """Training-mode BatchNorm1d over the row (node) dimension of a single block."""
    mean = jnp.mean(x, axis=0, keepdims=True)
    xc = x - mean
    var = jnp.mean(xc * xc, axis=0, keepdims=True)        # biased variance (train mode)
    return xc * jax.lax.rsqrt(var + eps) * gamma + beta


def _dot(a, b):
    """bf16 MXU matmul with f32 accumulation."""
    return jnp.dot(a.astype(BF16), b.astype(BF16), preferred_element_type=F32)


# ------------------------------------------------------------------- kernel --

def _fused_kernel(node_in_ref, emb_w1_ref, emb_w2_ref, emb_vec_ref,
                  src_ref, dst_ref, dstT_ref, ef_ref, var_ref,
                  wm1_ij_ref, wm1_e_ref, wm2_ref, wu1_ha_ref, wu2_ref, vec_ref,
                  hw1_ref, hb1_ref, hw2_ref, hb2_ref, ulast_ref, dt_ref,
                  o_ref, h_scr, gath_scr, scat_scr, hw_scr):
    layer = pl.program_id(0)
    n_layers = pl.num_programs(0)
    N, H = h_scr.shape
    E = ef_ref.shape[0]

    # ---- phase 0 (runs once): embedding MLP + one-time gather/scatter operators ----
    @pl.when(layer == 0)
    def _():
        y = _dot(node_in_ref[...], emb_w1_ref[...]) + emb_vec_ref[0:1, :]
        y = jnp.maximum(_bn_rows(y, emb_vec_ref[1:2, :], emb_vec_ref[2:3, :]), 0.0)
        y = _dot(y, emb_w2_ref[...]) + emb_vec_ref[3:4, :]
        h_scr[...] = _bn_rows(y, emb_vec_ref[4:5, :], emb_vec_ref[5:6, :])

        # Combined gather one-hot (E, 2N): cols [0,N) pick x_i = h[dst], cols [N,2N) pick x_j = h[src].
        col2 = jax.lax.broadcasted_iota(jnp.int32, (E, 2 * N), 1)
        hit_g = (dst_ref[...] == col2) | ((src_ref[...] + N) == col2)
        gath_scr[...] = jnp.where(hit_g, 1.0, 0.0).astype(BF16)

        # Scatter-mean one-hot (N, E): rows pre-scaled by 1/max(in-degree, 1)
        # (PyG aggr='mean'; isolated nodes -> 0). Degree computed in-kernel.
        row = jax.lax.broadcasted_iota(jnp.int32, (N, E), 0)
        hit_s = jnp.where(dstT_ref[...] == row, 1.0, 0.0)               # (N, E) f32
        deg = jnp.sum(hit_s, axis=1, keepdims=True)
        scat_scr[...] = (hit_s * (1.0 / jnp.maximum(deg, 1.0))).astype(BF16)

    # ------------------------------- one GNN layer ----------------------------------
    h = h_scr[...]                                          # (N, H) f32, VMEM-resident carry

    # message_net_1: cat(x_i, x_j, u_i-u_j, dx, dy, var_i) @ Wm1 + b, computed as a
    # single K=2N gather matmul over stacked [h@Wi ; h@Wj] plus the edge-feature matmul.
    hw = _dot(h, wm1_ij_ref[...])                           # (N, 2H) = [h@Wi | h@Wj]
    hw_scr[0:N, :] = hw[:, :H].astype(BF16)                 # x_i rows
    hw_scr[N:2 * N, :] = hw[:, H:].astype(BF16)             # x_j rows
    m = (_dot(gath_scr[...], hw_scr[...])
         + _dot(ef_ref[...], wm1_e_ref[...]) + vec_ref[0:1, :])
    m = jnp.maximum(m, 0.0)
    m = jnp.maximum(_dot(m, wm2_ref[...]) + vec_ref[1:2, :], 0.0)        # (E, H)

    # mean aggregation over incoming edges (inv-degree already folded into scat_scr)
    agg = _dot(scat_scr[...], m)                            # (N, H)

    # update nets: single K=2H matmul over [h | agg]; variables block is a (N,1)x(1,H)
    # outer product on the VPU (n_variables == 1 path).
    up = (_dot(jnp.concatenate([h, agg], axis=-1), wu1_ha_ref[...])
          + var_ref[...] * vec_ref[2:3, :] + vec_ref[3:4, :])
    up = jnp.maximum(up, 0.0)
    up = jnp.maximum(_dot(up, wu2_ref[...]) + vec_ref[4:5, :], 0.0)

    # residual + train-mode BatchNorm (whole node set is one block)
    h_new = _bn_rows(h + up, vec_ref[5:6, :], vec_ref[6:7, :])
    h_scr[...] = h_new

    # ---- phase L-1 (runs once): output conv head as banded matmuls, lane-dense store ----
    @pl.when(layer == n_layers - 1)
    def _():
        y = jnp.maximum(_dot(h_new, hw1_ref[...]) + hb1_ref[...], 0.0)
        diff = _dot(y, hw2_ref[...]) + hb2_ref[...]
        o_ref[...] = (ulast_ref[...] + dt_ref[...] * diff).astype(o_ref.dtype)


# ----------------------------------------------------------- pallas wrapper --

def fused_forward_call(node_input, src, dst, edge_feat, variables, u_last, prep):
    N, EMB_IN = node_input.shape
    E = src.shape[0]
    EF = edge_feat.shape[1]
    H = prep["emb_w2"].shape[0]
    L = prep["wm1_ij"].shape[0]
    TWp = prep["head_w2"].shape[1]

    def const(shape):
        return pl.BlockSpec(shape, lambda l: (0,) * len(shape))

    def per_layer(r, c):
        return pl.BlockSpec((None, r, c), lambda l: (l, 0, 0))

    in_specs = [
        const((N, EMB_IN)),                 # node_input (embedding, used once)
        const(prep["emb_w1"].shape),        # embedding Linear1 weight
        const(prep["emb_w2"].shape),        # embedding Linear2 weight
        const(prep["emb_vec"].shape),       # packed embedding biases / BN params (8, H)
        const((E, 1)),                      # src indices (int32, used once)
        const((E, 1)),                      # dst indices (int32, used once)
        const((1, E)),                      # dst indices, lane-major (int32, used once)
        const((E, EF)),                     # per-edge features [du, dx, dy, var_i]
        const((N, 1)),                      # variables (= pos_t)
        per_layer(H, 2 * H),                # [Wi | Wj] of message_net_1
        per_layer(EF, H),                   # edge-feature block of message_net_1
        per_layer(H, H),                    # message_net_2 weight
        per_layer(2 * H, H),                # stacked [h ; agg] block of update_net_1
        per_layer(H, H),                    # update_net_2 weight
        per_layer(8, H),                    # packed per-layer vectors (bm1,bm2,wu1_v,bu1,bu2,bn_g,bn_b,0)
        const(prep["head_w1"].shape),       # head conv1 banded matrix
        const(prep["head_b1"].shape),
        const(prep["head_w2"].shape),       # head conv2 banded matrix
        const(prep["head_b2"].shape),
        const((N, 1)),                      # u[:, -1]
        const(prep["dt_pad"].shape),        # cumsum(dt), lane-padded
    ]

    return pl.pallas_call(
        _fused_kernel,
        out_shape=jax.ShapeDtypeStruct((N, TWp), F32),
        grid=(L,),
        in_specs=in_specs,
        out_specs=pl.BlockSpec((N, TWp), lambda l: (0, 0)),
        scratch_shapes=[
            pltpu.VMEM((N, H), F32),          # h carry
            pltpu.VMEM((E, 2 * N), BF16),     # combined gather one-hot
            pltpu.VMEM((N, E), BF16),         # scatter-mean one-hot (degree-scaled)
            pltpu.VMEM((2 * N, H), BF16),     # stacked [h@Wi ; h@Wj]
        ],
        compiler_params=pltpu.CompilerParams(
            dimension_semantics=("arbitrary",),          # h carries across layers
            vmem_limit_bytes=32 * 1024 * 1024,           # explicit budget; safe on v5e/v6e/v7x
        ),
    )(node_input, prep["emb_w1"], prep["emb_w2"], prep["emb_vec"],
      src.reshape(E, 1), dst.reshape(E, 1), dst.reshape(1, E),
      edge_feat, variables,
      prep["wm1_ij"], prep["wm1_e"], prep["wm2"], prep["wu1_ha"], prep["wu2"], prep["vec"],
      prep["head_w1"], prep["head_b1"], prep["head_w2"], prep["head_b2"],
      u_last, prep["dt_pad"])


# ------------------------------------------------------------ model wiring --

def init_params(key, time_window, hidden, n_layers, n_vars):
    emb_in = time_window + 3                    # u + pos_x + pos_y + variables
    m1_in = 2 * hidden + time_window + 2 + n_vars
    u1_in = 2 * hidden + n_vars

    def w(key, shape, scale=0.1):
        return jax.random.normal(key, shape, F32) * scale

    keys = jax.random.split(key, 6 + 8 * n_layers)
    ki = iter(keys)
    params = {
        "emb_w1": w(next(ki), (emb_in, hidden)), "emb_b1": jnp.zeros((hidden,)),
        "emb_bn1_g": jnp.ones((hidden,)), "emb_bn1_b": jnp.zeros((hidden,)),
        "emb_w2": w(next(ki), (hidden, hidden)), "emb_b2": jnp.zeros((hidden,)),
        "emb_bn2_g": jnp.ones((hidden,)), "emb_bn2_b": jnp.zeros((hidden,)),
        # output_mlp: Conv1d(1,8,16) weight (8,1,16) stored as (16,8); Conv1d(8,1,14) as (8,14)
        "c1_w": w(next(ki), (16, 8)), "c1_b": jnp.zeros((8,)),
        "c2_w": w(next(ki), (8, 14)), "c2_b": jnp.zeros((1,)),
        "gnn": [],
    }
    for _ in range(n_layers):
        params["gnn"].append({
            "m1_w": w(next(ki), (m1_in, hidden)), "m1_b": jnp.zeros((hidden,)),
            "m2_w": w(next(ki), (hidden, hidden)), "m2_b": jnp.zeros((hidden,)),
            "u1_w": w(next(ki), (u1_in, hidden)), "u1_b": jnp.zeros((hidden,)),
            "u2_w": w(next(ki), (hidden, hidden)), "u2_b": jnp.zeros((hidden,)),
            "bn_g": jnp.ones((hidden,)), "bn_b": jnp.zeros((hidden,)),
        })
    return params


def prepare_params(params, pde, time_window, hidden):
    """Split / stack / pack / cast weights for the single fused kernel (done once)."""
    H = hidden

    prep = {
        "emb_w1": params["emb_w1"].astype(BF16),
        "emb_w2": params["emb_w2"].astype(BF16),
        "emb_vec": jnp.stack([
            params["emb_b1"], params["emb_bn1_g"], params["emb_bn1_b"],
            params["emb_b2"], params["emb_bn2_g"], params["emb_bn2_b"],
            jnp.zeros((H,)), jnp.zeros((H,))], axis=0).astype(F32),      # (8, H)
    }

    gnn = params["gnn"]
    stack = lambda fn, dt: jnp.stack([fn(lp) for lp in gnn], axis=0).astype(dt)
    # message_net_1 split: rows [0:H) x_i, [H:2H) x_j, [2H:) edge features.
    prep["wm1_ij"] = stack(
        lambda p: jnp.concatenate([p["m1_w"][:H], p["m1_w"][H:2 * H]], axis=1), BF16)  # (L, H, 2H)
    prep["wm1_e"] = stack(lambda p: p["m1_w"][2 * H:], BF16)                            # (L, EF, H)
    prep["wm2"] = stack(lambda p: p["m2_w"], BF16)                                      # (L, H, H)
    # update_net_1 split: rows [0:2H) stacked [h ; agg], row [2H] variables.
    prep["wu1_ha"] = stack(lambda p: p["u1_w"][:2 * H], BF16)                           # (L, 2H, H)
    prep["wu2"] = stack(lambda p: p["u2_w"], BF16)                                      # (L, H, H)
    prep["vec"] = stack(lambda p: jnp.stack([
        p["m1_b"], p["m2_b"], p["u1_w"][2 * H], p["u1_b"], p["u2_b"],
        p["bn_g"], p["bn_b"], jnp.zeros_like(p["bn_b"])], axis=0), F32)                 # (L, 8, H)

    # ---- output_mlp as banded matrices: Conv1d(1,8,16,s=5) -> ReLU -> Conv1d(8,1,14,s=2)
    L1 = (hidden - 16) // 5 + 1
    TW = (L1 - 14) // 2 + 1
    assert TW == time_window, "hidden_features / time_window mismatch for output_mlp"
    C1 = L1 * 8
    C1p = ((C1 + 127) // 128) * 128     # lane-pad conv1 (positions x channels)
    TWp = 128                           # lane-pad the final output (lane-dense store)

    c1_w = params["c1_w"].astype(F32)   # (16, 8)  [k, c]
    c1_b = params["c1_b"].astype(F32)   # (8,)
    c2_w = params["c2_w"].astype(F32)   # (8, 14)  [c, k]
    c2_b = params["c2_b"].astype(F32)   # (1,)

    li = jnp.arange(L1)[:, None, None]
    ki = jnp.arange(16)[None, :, None]
    ci = jnp.arange(8)[None, None, :]
    rows1 = jnp.broadcast_to(li * 5 + ki, (L1, 16, 8)).reshape(-1)
    cols1 = jnp.broadcast_to(li * 8 + ci, (L1, 16, 8)).reshape(-1)
    vals1 = jnp.broadcast_to(c1_w[None, :, :], (L1, 16, 8)).reshape(-1)
    w1_full = jnp.zeros((hidden, C1p), F32).at[rows1, cols1].set(vals1)
    bcols = (jnp.arange(L1)[:, None] * 8 + jnp.arange(8)[None, :]).reshape(-1)
    bvals = jnp.broadcast_to(c1_b[None, :], (L1, 8)).reshape(-1)
    b1_full = jnp.zeros((1, C1p), F32).at[0, bcols].set(bvals)

    ti = jnp.arange(TW)[:, None, None]
    ci2 = jnp.arange(8)[None, :, None]
    ki2 = jnp.arange(14)[None, None, :]
    rows2 = jnp.broadcast_to((2 * ti + ki2) * 8 + ci2, (TW, 8, 14)).reshape(-1)
    cols2 = jnp.broadcast_to(ti, (TW, 8, 14)).reshape(-1)
    vals2 = jnp.broadcast_to(c2_w[None, :, :], (TW, 8, 14)).reshape(-1)
    w2_full = jnp.zeros((C1p, TWp), F32).at[rows2, cols2].set(vals2)
    b2_full = jnp.zeros((1, TWp), F32).at[0, :TW].set(jnp.full((TW,), c2_b[0]))

    dt = jnp.cumsum(jnp.full((TW,), pde.dt * 0.1, F32))
    dt_pad = jnp.zeros((1, TWp), F32).at[0, :TW].set(dt)

    prep["head_w1"] = w1_full.astype(BF16)
    prep["head_b1"] = b1_full
    prep["head_w2"] = w2_full.astype(BF16)
    prep["head_b2"] = b2_full
    prep["dt_pad"] = dt_pad
    return prep


def npde_gnn_forward(prep, u, pos, edge_index, pde, time_window):
    pos_x = pos[:, 1:2] / pde.Lx
    pos_y = pos[:, 2:3] / pde.Ly
    pos_t = pos[:, 0:1] / pde.tmax
    variables = pos_t                                     # n_variables = 1

    node_input = jnp.concatenate([u, pos_x, pos_y, variables], axis=-1).astype(F32)

    # per-edge constants, computed once (PyG: j = edge_index[0] src, i = edge_index[1] dst)
    src = edge_index[0].astype(jnp.int32)
    dst = edge_index[1].astype(jnp.int32)
    edge_feat = jnp.concatenate(
        [u[dst] - u[src], pos_x[dst] - pos_x[src], pos_y[dst] - pos_y[src], variables[dst]],
        axis=-1).astype(BF16)

    # ---- whole network in ONE pallas_call (embedding + L GNN layers + conv head) ----
    out_full = fused_forward_call(node_input, src, dst, edge_feat, variables,
                                  u[:, -1:].astype(F32), prep)
    out = out_full[:, :time_window]
    out_virtual = jnp.zeros_like(out)
    # TODO(synk): 'cayley-cgp' edge_mode output split not implemented (default 'RadiusOnly').
    return out, out_virtual


# --------------------------------------------------------------------- main --

if __name__ == "__main__":
    # Small shapes consistent with the module's output_mlp arithmetic:
    # hidden=128 -> conv1 len 23 -> conv2 len 5 == time_window
    N, E = 64, 256
    time_window = 5
    hidden = 128
    n_layers = 3
    n_vars = 1
    pde = SimpleNamespace(Lx=16.0, Ly=16.0, tmax=4.0, dt=0.25)

    key = jax.random.PRNGKey(0)
    k_u, k_pos, k_src, k_dst, k_par = jax.random.split(key, 5)
    u = jax.random.normal(k_u, (N, time_window), F32)
    pos = jax.random.uniform(k_pos, (N, 3), F32, minval=0.0, maxval=4.0)
    edge_index = jnp.stack([
        jax.random.randint(k_src, (E,), 0, N),
        jax.random.randint(k_dst, (E,), 0, N),
    ])

    params = init_params(k_par, time_window, hidden, n_layers, n_vars)
    prep = prepare_params(params, pde, time_window, hidden)

    fwd = jax.jit(functools.partial(npde_gnn_forward, pde=pde, time_window=time_window))
    out, out_virtual = fwd(prep, u, pos, edge_index)
    jax.block_until_ready((out, out_virtual))
    assert out.shape == (N, time_window) and out_virtual.shape == (N, time_window)
    assert bool(jnp.all(jnp.isfinite(out)))
    print("KERNEL_OK")
</pallas_src>

<mosaic_0001>
module attributes {stable_mosaic.version = 11 : i64} {
  func.func @_fused_kernel(%arg0: i32, %arg1: memref<64x8xf32, #tpu.memory_space<vmem>>, %arg2: memref<8x128xbf16, #tpu.memory_space<vmem>>, %arg3: memref<128x128xbf16, #tpu.memory_space<vmem>>, %arg4: memref<8x128xf32, #tpu.memory_space<vmem>>, %arg5: memref<256x1xi32, #tpu.memory_space<vmem>>, %arg6: memref<256x1xi32, #tpu.memory_space<vmem>>, %arg7: memref<1x256xi32, #tpu.memory_space<vmem>>, %arg8: memref<256x8xbf16, #tpu.memory_space<vmem>>, %arg9: memref<64x1xf32, #tpu.memory_space<vmem>>, %arg10: memref<1x128x256xbf16, #tpu.memory_space<vmem>>, %arg11: memref<1x8x128xbf16, #tpu.memory_space<vmem>>, %arg12: memref<1x128x128xbf16, #tpu.memory_space<vmem>>, %arg13: memref<1x256x128xbf16, #tpu.memory_space<vmem>>, %arg14: memref<1x128x128xbf16, #tpu.memory_space<vmem>>, %arg15: memref<1x8x128xf32, #tpu.memory_space<vmem>>, %arg16: memref<128x256xbf16, #tpu.memory_space<vmem>>, %arg17: memref<1x256xf32, #tpu.memory_space<vmem>>, %arg18: memref<256x128xbf16, #tpu.memory_space<vmem>>, %arg19: memref<1x128xf32, #tpu.memory_space<vmem>>, %arg20: memref<64x1xf32, #tpu.memory_space<vmem>>, %arg21: memref<1x128xf32, #tpu.memory_space<vmem>>, %arg22: memref<64x128xf32, #tpu.memory_space<vmem>>, %arg23: memref<64x128xf32, #tpu.memory_space<vmem>>, %arg24: memref<256x128xbf16, #tpu.memory_space<vmem>>, %arg25: memref<64x256xbf16, #tpu.memory_space<vmem>>, %arg26: memref<128x128xbf16, #tpu.memory_space<vmem>>) attributes {dimension_semantics = [#tpu.dimension_semantics<arbitrary>], iteration_bounds = array<i64: 3>, scalar_prefetch = 0 : i64, scratch_operands = 4 : i64, tpu.core_type = #tpu.core_type<tc>, window_params = [{pipeline_mode = #tpu.pipeline_mode<synchronous>, transform_indices = @transform_0, window_bounds = array<i64: 64, 8>}, {pipeline_mode = #tpu.pipeline_mode<synchronous>, transform_indices = @transform_1, window_bounds = array<i64: 8, 128>}, {pipeline_mode = #tpu.pipeline_mode<synchronous>, transform_indices = @transform_2, window_bounds = array<i64: 128, 128>}, {pipeline_mode = #tpu.pipeline_mode<synchronous>, transform_indices = @transform_3, window_bounds = array<i64: 8, 128>}, {pipeline_mode = #tpu.pipeline_mode<synchronous>, transform_indices = @transform_4, window_bounds = array<i64: 256, 1>}, {pipeline_mode = #tpu.pipeline_mode<synchronous>, transform_indices = @transform_5, window_bounds = array<i64: 256, 1>}, {pipeline_mode = #tpu.pipeline_mode<synchronous>, transform_indices = @transform_6, window_bounds = array<i64: 1, 256>}, {pipeline_mode = #tpu.pipeline_mode<synchronous>, transform_indices = @transform_7, window_bounds = array<i64: 256, 8>}, {pipeline_mode = #tpu.pipeline_mode<synchronous>, transform_indices = @transform_8, window_bounds = array<i64: 64, 1>}, {transform_indices = @transform_9, window_bounds = array<i64: 1, 128, 256>}, {transform_indices = @transform_10, window_bounds = array<i64: 1, 8, 128>}, {transform_indices = @transform_11, window_bounds = array<i64: 1, 128, 128>}, {transform_indices = @transform_12, window_bounds = array<i64: 1, 256, 128>}, {transform_indices = @transform_13, window_bounds = array<i64: 1, 128, 128>}, {transform_indices = @transform_14, window_bounds = array<i64: 1, 8, 128>}, {pipeline_mode = #tpu.pipeline_mode<synchronous>, transform_indices = @transform_15, window_bounds = array<i64: 128, 256>}, {pipeline_mode = #tpu.pipeline_mode<synchronous>, transform_indices = @transform_16, window_bounds = array<i64: 1, 256>}, {pipeline_mode = #tpu.pipeline_mode<synchronous>, transform_indices = @transform_17, window_bounds = array<i64: 256, 128>}, {pipeline_mode = #tpu.pipeline_mode<synchronous>, transform_indices = @transform_18, window_bounds = array<i64: 1, 128>}, {pipeline_mode = #tpu.pipeline_mode<synchronous>, transform_indices = @transform_19, window_bounds = array<i64: 64, 1>}, {pipeline_mode = #tpu.pipeline_mode<synchronous>, transform_indices = @transform_20, window_bounds = array<i64: 1, 128>}, {pipeline_mode = #tpu.pipeline_mode<synchronous>, transform_indices = @transform_21, window_bounds = array<i64: 64, 128>}]} {
    %c0_i32 = arith.constant 0 : i32
    %0 = arith.cmpi eq, %arg0, %c0_i32 : i32
    %1 = arith.extui %0 : i1 to i32
    %c0_i32_0 = arith.constant 0 : i32
    %2 = arith.cmpi ne, %1, %c0_i32_0 : i32
    scf.if %2 {
      %c0_63 = arith.constant 0 : index
      %c0_64 = arith.constant 0 : index
      %98 = vector.load %arg1[%c0_63, %c0_64] : memref<64x8xf32, #tpu.memory_space<vmem>>, vector<64x8xf32>
      %c0_65 = arith.constant 0 : index
      %c0_66 = arith.constant 0 : index
      %99 = vector.load %arg2[%c0_65, %c0_66] : memref<8x128xbf16, #tpu.memory_space<vmem>>, vector<8x128xbf16>
      %100 = arith.truncf %98 : vector<64x8xf32> to vector<64x8xbf16>
      %cst_67 = arith.constant dense<0.000000e+00> : vector<64x128xf32>
      %101 = tpu.matmul %100, %99, %cst_67 {dimension_numbers = #tpu.dot_dimension_numbers<[1], [0], [0], [1], [0, 0, 1, 1], [], []>} : vector<64x8xbf16>, vector<8x128xbf16>, vector<64x128xf32> -> vector<64x128xf32>
      %c0_68 = arith.constant 0 : index
      %c0_69 = arith.constant 0 : index
      %102 = vector.load %arg4[%c0_68, %c0_69] : memref<8x128xf32, #tpu.memory_space<vmem>>, vector<1x128xf32>
      %103 = vector.broadcast %102 : vector<1x128xf32> to vector<64x128xf32>
      %104 = arith.addf %101, %103 : vector<64x128xf32>
      %c1_70 = arith.constant 1 : index
      %c0_71 = arith.constant 0 : index
      %105 = vector.load %arg4[%c1_70, %c0_71] : memref<8x128xf32, #tpu.memory_space<vmem>>, vector<1x128xf32>
      %c2_72 = arith.constant 2 : index
      %c0_73 = arith.constant 0 : index
      %106 = vector.load %arg4[%c2_72, %c0_73] : memref<8x128xf32, #tpu.memory_space<vmem>>, vector<1x128xf32>
      %cst_74 = arith.constant dense<0.000000e+00> : vector<128xf32>
      %107 = vector.multi_reduction <add>, %104, %cst_74 [0] : vector<64x128xf32> to vector<128xf32>
      %108 = vector.shape_cast %107 : vector<128xf32> to vector<1x128xf32>
      %cst_75 = arith.constant 6.400000e+01 : f32
      %109 = vector.broadcast %cst_75 : f32 to vector<1x128xf32>
      %110 = arith.divf %108, %109 : vector<1x128xf32>
      %111 = vector.broadcast %110 : vector<1x128xf32> to vector<64x128xf32>
      %112 = arith.subf %104, %111 : vector<64x128xf32>
      %113 = arith.mulf %112, %112 : vector<64x128xf32>
      %cst_76 = arith.constant dense<0.000000e+00> : vector<128xf32>
      %114 = vector.multi_reduction <add>, %113, %cst_76 [0] : vector<64x128xf32> to vector<128xf32>
      %115 = vector.shape_cast %114 : vector<128xf32> to vector<1x128xf32>
      %cst_77 = arith.constant 6.400000e+01 : f32
      %116 = vector.broadcast %cst_77 : f32 to vector<1x128xf32>
      %117 = arith.divf %115, %116 : vector<1x128xf32>
      %cst_78 = arith.constant 9.99999974E-6 : f32
      %118 = vector.broadcast %cst_78 : f32 to vector<1x128xf32>
      %119 = arith.addf %117, %118 : vector<1x128xf32>
      %120 = math.rsqrt %119 : vector<1x128xf32>
      %121 = vector.broadcast %120 : vector<1x128xf32> to vector<64x128xf32>
      %122 = arith.mulf %112, %121 : vector<64x128xf32>
      %123 = vector.broadcast %105 : vector<1x128xf32> to vector<64x128xf32>
      %124 = arith.mulf %122, %123 : vector<64x128xf32>
      %125 = vector.broadcast %106 : vector<1x128xf32> to vector<64x128xf32>
      %126 = arith.addf %124, %125 : vector<64x128xf32>
      %cst_79 = arith.constant 0.000000e+00 : f32
      %127 = vector.broadcast %cst_79 : f32 to vector<64x128xf32>
      %128 = arith.maximumf %126, %127 : vector<64x128xf32>
      %c0_80 = arith.constant 0 : index
      %c0_81 = arith.constant 0 : index
      %129 = vector.load %arg3[%c0_80, %c0_81] : memref<128x128xbf16, #tpu.memory_space<vmem>>, vector<128x128xbf16>
      %130 = arith.truncf %128 : vector<64x128xf32> to vector<64x128xbf16>
      %cst_82 = arith.constant dense<0.000000e+00> : vector<64x128xf32>
      %131 = tpu.matmul %130, %129, %cst_82 {dimension_numbers = #tpu.dot_dimension_numbers<[1], [0], [0], [1], [0, 0, 1, 1], [], []>} : vector<64x128xbf16>, vector<128x128xbf16>, vector<64x128xf32> -> vector<64x128xf32>
      %c3_83 = arith.constant 3 : index
      %c0_84 = arith.constant 0 : index
      %132 = vector.load %arg4[%c3_83, %c0_84] : memref<8x128xf32, #tpu.memory_space<vmem>>, vector<1x128xf32>
      %133 = vector.broadcast %132 : vector<1x128xf32> to vector<64x128xf32>
      %134 = arith.addf %131, %133 : vector<64x128xf32>
      %c4_85 = arith.constant 4 : index
      %c0_86 = arith.constant 0 : index
      %135 = vector.load %arg4[%c4_85, %c0_86] : memref<8x128xf32, #tpu.memory_space<vmem>>, vector<1x128xf32>
      %c5_87 = arith.constant 5 : index
      %c0_88 = arith.constant 0 : index
      %136 = vector.load %arg4[%c5_87, %c0_88] : memref<8x128xf32, #tpu.memory_space<vmem>>, vector<1x128xf32>
      %cst_89 = arith.constant dense<0.000000e+00> : vector<128xf32>
      %137 = vector.multi_reduction <add>, %134, %cst_89 [0] : vector<64x128xf32> to vector<128xf32>
      %138 = vector.shape_cast %137 : vector<128xf32> to vector<1x128xf32>
      %cst_90 = arith.constant 6.400000e+01 : f32
      %139 = vector.broadcast %cst_90 : f32 to vector<1x128xf32>
      %140 = arith.divf %138, %139 : vector<1x128xf32>
      %141 = vector.broadcast %140 : vector<1x128xf32> to vector<64x128xf32>
      %142 = arith.subf %134, %141 : vector<64x128xf32>
      %143 = arith.mulf %142, %142 : vector<64x128xf32>
      %cst_91 = arith.constant dense<0.000000e+00> : vector<128xf32>
      %144 = vector.multi_reduction <add>, %143, %cst_91 [0] : vector<64x128xf32> to vector<128xf32>
      %145 = vector.shape_cast %144 : vector<128xf32> to vector<1x128xf32>
      %cst_92 = arith.constant 6.400000e+01 : f32
      %146 = vector.broadcast %cst_92 : f32 to vector<1x128xf32>
      %147 = arith.divf %145, %146 : vector<1x128xf32>
      %cst_93 = arith.constant 9.99999974E-6 : f32
      %148 = vector.broadcast %cst_93 : f32 to vector<1x128xf32>
      %149 = arith.addf %147, %148 : vector<1x128xf32>
      %150 = math.rsqrt %149 : vector<1x128xf32>
      %151 = vector.broadcast %150 : vector<1x128xf32> to vector<64x128xf32>
      %152 = arith.mulf %142, %151 : vector<64x128xf32>
      %153 = vector.broadcast %135 : vector<1x128xf32> to vector<64x128xf32>
      %154 = arith.mulf %152, %153 : vector<64x128xf32>
      %155 = vector.broadcast %136 : vector<1x128xf32> to vector<64x128xf32>
      %156 = arith.addf %154, %155 : vector<64x128xf32>
      %c0_94 = arith.constant 0 : index
      %c0_95 = arith.constant 0 : index
      %157 = vector.load %arg23[%c0_94, %c0_95] : memref<64x128xf32, #tpu.memory_space<vmem>>, vector<64x128xf32>
      tpu.vector_store %arg23[%c0_94, %c0_95], %156 {strides = array<i32>} : memref<64x128xf32, #tpu.memory_space<vmem>>, vector<64x128xf32>,
      %158 = tpu.iota {dimensions = array<i32: 1>} : vector<256x128xi32>
      %c0_96 = arith.constant 0 : index
      %c0_97 = arith.constant 0 : index
      %159 = vector.load %arg6[%c0_96, %c0_97] : memref<256x1xi32, #tpu.memory_space<vmem>>, vector<256x1xi32>
      %160 = vector.broadcast %159 : vector<256x1xi32> to vector<256x128xi32>
      %161 = arith.cmpi eq, %160, %158 : vector<256x128xi32>
      %c0_98 = arith.constant 0 : index
      %c0_99 = arith.constant 0 : index
      %162 = vector.load %arg5[%c0_98, %c0_99] : memref<256x1xi32, #tpu.memory_space<vmem>>, vector<256x1xi32>
      %c64_i32 = arith.constant 64 : i32
      %163 = vector.broadcast %c64_i32 : i32 to vector<256x1xi32>
      %164 = arith.addi %162, %163 : vector<256x1xi32>
      %165 = vector.broadcast %164 : vector<256x1xi32> to vector<256x128xi32>
      %166 = arith.cmpi eq, %165, %158 : vector<256x128xi32>
      %167 = arith.ori %161, %166 : vector<256x128xi1>
      %cst_100 = arith.constant 1.000000e+00 : f32
      %cst_101 = arith.constant 0.000000e+00 : f32
      %168 = vector.broadcast %cst_100 : f32 to vector<256x128xf32>
      %169 = vector.broadcast %cst_101 : f32 to vector<256x128xf32>
      %170 = arith.select %167, %168, %169 : vector<256x128xi1>, vector<256x128xf32>
      %171 = arith.truncf %170 : vector<256x128xf32> to vector<256x128xbf16>
      %c0_102 = arith.constant 0 : index
      %c0_103 = arith.constant 0 : index
      %172 = vector.load %arg24[%c0_102, %c0_103] : memref<256x128xbf16, #tpu.memory_space<vmem>>, vector<256x128xbf16>
      tpu.vector_store %arg24[%c0_102, %c0_103], %171 {strides = array<i32>} : memref<256x128xbf16, #tpu.memory_space<vmem>>, vector<256x128xbf16>,
      %173 = tpu.iota {dimensions = array<i32: 0>} : vector<64x256xi32>
      %c0_104 = arith.constant 0 : index
      %c0_105 = arith.constant 0 : index
      %174 = vector.load %arg7[%c0_104, %c0_105] : memref<1x256xi32, #tpu.memory_space<vmem>>, vector<1x256xi32>
      %175 = vector.broadcast %174 : vector<1x256xi32> to vector<64x256xi32>
      %176 = arith.cmpi eq, %175, %173 : vector<64x256xi32>
      %cst_106 = arith.constant 1.000000e+00 : f32
      %cst_107 = arith.constant 0.000000e+00 : f32
      %177 = vector.broadcast %cst_106 : f32 to vector<64x256xf32>
      %178 = vector.broadcast %cst_107 : f32 to vector<64x256xf32>
      %179 = arith.select %176, %177, %178 : vector<64x256xi1>, vector<64x256xf32>
      %cst_108 = arith.constant dense<0.000000e+00> : vector<64xf32>
      %180 = vector.multi_reduction <add>, %179, %cst_108 [1] : vector<64x256xf32> to vector<64xf32>
      %181 = vector.shape_cast %180 : vector<64xf32> to vector<64x1xf32>
      %cst_109 = arith.constant 1.000000e+00 : f32
      %182 = vector.broadcast %cst_109 : f32 to vector<64x1xf32>
      %183 = arith.maximumf %181, %182 : vector<64x1xf32>
      %cst_110 = arith.constant 1.000000e+00 : f32
      %184 = vector.broadcast %cst_110 : f32 to vector<64x1xf32>
      %185 = arith.divf %184, %183 : vector<64x1xf32>
      %186 = vector.broadcast %185 : vector<64x1xf32> to vector<64x256xf32>
      %187 = arith.mulf %179, %186 : vector<64x256xf32>
      %188 = arith.truncf %187 : vector<64x256xf32> to vector<64x256xbf16>
      %c0_111 = arith.constant 0 : index
      %c0_112 = arith.constant 0 : index
      %189 = vector.load %arg25[%c0_111, %c0_112] : memref<64x256xbf16, #tpu.memory_space<vmem>>, vector<64x256xbf16>
      tpu.vector_store %arg25[%c0_111, %c0_112], %188 {strides = array<i32>} : memref<64x256xbf16, #tpu.memory_space<vmem>>, vector<64x256xbf16>,
    } else {
    }
    %c0 = arith.constant 0 : index
    %c0_1 = arith.constant 0 : index
    %3 = vector.load %arg23[%c0, %c0_1] : memref<64x128xf32, #tpu.memory_space<vmem>>, vector<64x128xf32>
    %c0_2 = arith.constant 0 : index
    %c0_3 = arith.constant 0 : index
    %c0_4 = arith.constant 0 : index
    %4 = vector.load %arg10[%c0_2, %c0_3, %c0_4] : memref<1x128x256xbf16, #tpu.memory_space<vmem>>, vector<1x128x256xbf16>
    %5 = vector.shape_cast %4 : vector<1x128x256xbf16> to vector<128x256xbf16>
    %6 = arith.truncf %3 : vector<64x128xf32> to vector<64x128xbf16>
    %cst = arith.constant dense<0.000000e+00> : vector<64x256xf32>
    %7 = tpu.matmul %6, %5, %cst {dimension_numbers = #tpu.dot_dimension_numbers<[1], [0], [0], [1], [0, 0, 1, 1], [], []>} : vector<64x128xbf16>, vector<128x256xbf16>, vector<64x256xf32> -> vector<64x256xf32>
    %8 = vector.extract_strided_slice %7 {offsets = [0, 0], sizes = [64, 128], strides = [1, 1]} : vector<64x256xf32> to vector<64x128xf32>
    %9 = arith.truncf %8 : vector<64x128xf32> to vector<64x128xbf16>
    %c0_5 = arith.constant 0 : index
    %c0_6 = arith.constant 0 : index
    %10 = vector.load %arg26[%c0_5, %c0_6] : memref<128x128xbf16, #tpu.memory_space<vmem>>, vector<64x128xbf16>
    tpu.vector_store %arg26[%c0_5, %c0_6], %9 {strides = array<i32>} : memref<128x128xbf16, #tpu.memory_space<vmem>>, vector<64x128xbf16>,
    %11 = vector.extract_strided_slice %7 {offsets = [0, 128], sizes = [64, 128], strides = [1, 1]} : vector<64x256xf32> to vector<64x128xf32>
    %12 = arith.truncf %11 : vector<64x128xf32> to vector<64x128xbf16>
    %c64 = arith.constant 64 : index
    %c0_7 = arith.constant 0 : index
    %13 = vector.load %arg26[%c64, %c0_7] : memref<128x128xbf16, #tpu.memory_space<vmem>>, vector<64x128xbf16>
    tpu.vector_store %arg26[%c64, %c0_7], %12 {strides = array<i32>} : memref<128x128xbf16, #tpu.memory_space<vmem>>, vector<64x128xbf16>,
    %c0_8 = arith.constant 0 : index
    %c0_9 = arith.constant 0 : index
    %14 = vector.load %arg24[%c0_8, %c0_9] : memref<256x128xbf16, #tpu.memory_space<vmem>>, vector<256x128xbf16>
    %c0_10 = arith.constant 0 : index
    %c0_11 = arith.constant 0 : index
    %15 = vector.load %arg26[%c0_10, %c0_11] : memref<128x128xbf16, #tpu.memory_space<vmem>>, vector<128x128xbf16>
    %cst_12 = arith.constant dense<0.000000e+00> : vector<256x128xf32>
    %16 = tpu.matmul %14, %15, %cst_12 {dimension_numbers = #tpu.dot_dimension_numbers<[1], [0], [0], [1], [0, 0, 1, 1], [], []>} : vector<256x128xbf16>, vector<128x128xbf16>, vector<256x128xf32> -> vector<256x128xf32>
    %c0_13 = arith.constant 0 : index
    %c0_14 = arith.constant 0 : index
    %17 = vector.load %arg8[%c0_13, %c0_14] : memref<256x8xbf16, #tpu.memory_space<vmem>>, vector<256x8xbf16>
    %c0_15 = arith.constant 0 : index
    %c0_16 = arith.constant 0 : index
    %c0_17 = arith.constant 0 : index
    %18 = vector.load %arg11[%c0_15, %c0_16, %c0_17] : memref<1x8x128xbf16, #tpu.memory_space<vmem>>, vector<1x8x128xbf16>
    %19 = vector.shape_cast %18 : vector<1x8x128xbf16> to vector<8x128xbf16>
    %cst_18 = arith.constant dense<0.000000e+00> : vector<256x128xf32>
    %20 = tpu.matmul %17, %19, %cst_18 {dimension_numbers = #tpu.dot_dimension_numbers<[1], [0], [0], [1], [0, 0, 1, 1], [], []>} : vector<256x8xbf16>, vector<8x128xbf16>, vector<256x128xf32> -> vector<256x128xf32>
    %21 = arith.addf %16, %20 : vector<256x128xf32>
    %c0_19 = arith.constant 0 : index
    %c0_20 = arith.constant 0 : index
    %c0_21 = arith.constant 0 : index
    %22 = vector.load %arg15[%c0_19, %c0_20, %c0_21] : memref<1x8x128xf32, #tpu.memory_space<vmem>>, vector<1x1x128xf32>
    %23 = vector.shape_cast %22 : vector<1x1x128xf32> to vector<1x128xf32>
    %24 = vector.broadcast %23 : vector<1x128xf32> to vector<256x128xf32>
    %25 = arith.addf %21, %24 : vector<256x128xf32>
    %cst_22 = arith.constant 0.000000e+00 : f32
    %26 = vector.broadcast %cst_22 : f32 to vector<256x128xf32>
    %27 = arith.maximumf %25, %26 : vector<256x128xf32>
    %c0_23 = arith.constant 0 : index
    %c0_24 = arith.constant 0 : index
    %c0_25 = arith.constant 0 : index
    %28 = vector.load %arg12[%c0_23, %c0_24, %c0_25] : memref<1x128x128xbf16, #tpu.memory_space<vmem>>, vector<1x128x128xbf16>
    %29 = vector.shape_cast %28 : vector<1x128x128xbf16> to vector<128x128xbf16>
    %30 = arith.truncf %27 : vector<256x128xf32> to vector<256x128xbf16>
    %cst_26 = arith.constant dense<0.000000e+00> : vector<256x128xf32>
    %31 = tpu.matmul %30, %29, %cst_26 {dimension_numbers = #tpu.dot_dimension_numbers<[1], [0], [0], [1], [0, 0, 1, 1], [], []>} : vector<256x128xbf16>, vector<128x128xbf16>, vector<256x128xf32> -> vector<256x128xf32>
    %c0_27 = arith.constant 0 : index
    %c1 = arith.constant 1 : index
    %c0_28 = arith.constant 0 : index
    %32 = vector.load %arg15[%c0_27, %c1, %c0_28] : memref<1x8x128xf32, #tpu.memory_space<vmem>>, vector<1x1x128xf32>
    %33 = vector.shape_cast %32 : vector<1x1x128xf32> to vector<1x128xf32>
    %34 = vector.broadcast %33 : vector<1x128xf32> to vector<256x128xf32>
    %35 = arith.addf %31, %34 : vector<256x128xf32>
    %cst_29 = arith.constant 0.000000e+00 : f32
    %36 = vector.broadcast %cst_29 : f32 to vector<256x128xf32>
    %37 = arith.maximumf %35, %36 : vector<256x128xf32>
    %c0_30 = arith.constant 0 : index
    %c0_31 = arith.constant 0 : index
    %38 = vector.load %arg25[%c0_30, %c0_31] : memref<64x256xbf16, #tpu.memory_space<vmem>>, vector<64x256xbf16>
    %39 = arith.truncf %37 : vector<256x128xf32> to vector<256x128xbf16>
    %cst_32 = arith.constant dense<0.000000e+00> : vector<64x128xf32>
    %40 = tpu.matmul %38, %39, %cst_32 {dimension_numbers = #tpu.dot_dimension_numbers<[1], [0], [0], [1], [0, 0, 1, 1], [], []>} : vector<64x256xbf16>, vector<256x128xbf16>, vector<64x128xf32> -> vector<64x128xf32>
    %41 = tpu.concatenate %3, %40 in 1 : vector<64x128xf32>, vector<64x128xf32> -> vector<64x256xf32>
    %c0_33 = arith.constant 0 : index
    %c0_34 = arith.constant 0 : index
    %c0_35 = arith.constant 0 : index
    %42 = vector.load %arg13[%c0_33, %c0_34, %c0_35] : memref<1x256x128xbf16, #tpu.memory_space<vmem>>, vector<1x256x128xbf16>
    %43 = vector.shape_cast %42 : vector<1x256x128xbf16> to vector<256x128xbf16>
    %44 = arith.truncf %41 : vector<64x256xf32> to vector<64x256xbf16>
    %cst_36 = arith.constant dense<0.000000e+00> : vector<64x128xf32>
    %45 = tpu.matmul %44, %43, %cst_36 {dimension_numbers = #tpu.dot_dimension_numbers<[1], [0], [0], [1], [0, 0, 1, 1], [], []>} : vector<64x256xbf16>, vector<256x128xbf16>, vector<64x128xf32> -> vector<64x128xf32>
    %c0_37 = arith.constant 0 : index
    %c0_38 = arith.constant 0 : index
    %46 = vector.load %arg9[%c0_37, %c0_38] : memref<64x1xf32, #tpu.memory_space<vmem>>, vector<64x1xf32>
    %c0_39 = arith.constant 0 : index
    %c2 = arith.constant 2 : index
    %c0_40 = arith.constant 0 : index
    %47 = vector.load %arg15[%c0_39, %c2, %c0_40] : memref<1x8x128xf32, #tpu.memory_space<vmem>>, vector<1x1x128xf32>
    %48 = vector.shape_cast %47 : vector<1x1x128xf32> to vector<1x128xf32>
    %49 = vector.broadcast %46 : vector<64x1xf32> to vector<64x128xf32>
    %50 = vector.broadcast %48 : vector<1x128xf32> to vector<64x128xf32>
    %51 = arith.mulf %49, %50 : vector<64x128xf32>
    %52 = arith.addf %45, %51 : vector<64x128xf32>
    %c0_41 = arith.constant 0 : index
    %c3 = arith.constant 3 : index
    %c0_42 = arith.constant 0 : index
    %53 = vector.load %arg15[%c0_41, %c3, %c0_42] : memref<1x8x128xf32, #tpu.memory_space<vmem>>, vector<1x1x128xf32>
    %54 = vector.shape_cast %53 : vector<1x1x128xf32> to vector<1x128xf32>
    %55 = vector.broadcast %54 : vector<1x128xf32> to vector<64x128xf32>
    %56 = arith.addf %52, %55 : vector<64x128xf32>
    %cst_43 = arith.constant 0.000000e+00 : f32
    %57 = vector.broadcast %cst_43 : f32 to vector<64x128xf32>
    %58 = arith.maximumf %56, %57 : vector<64x128xf32>
    %c0_44 = arith.constant 0 : index
    %c0_45 = arith.constant 0 : index
    %c0_46 = arith.constant 0 : index
    %59 = vector.load %arg14[%c0_44, %c0_45, %c0_46] : memref<1x128x128xbf16, #tpu.memory_space<vmem>>, vector<1x128x128xbf16>
    %60 = vector.shape_cast %59 : vector<1x128x128xbf16> to vector<128x128xbf16>
    %61 = arith.truncf %58 : vector<64x128xf32> to vector<64x128xbf16>
    %cst_47 = arith.constant dense<0.000000e+00> : vector<64x128xf32>
    %62 = tpu.matmul %61, %60, %cst_47 {dimension_numbers = #tpu.dot_dimension_numbers<[1], [0], [0], [1], [0, 0, 1, 1], [], []>} : vector<64x128xbf16>, vector<128x128xbf16>, vector<64x128xf32> -> vector<64x128xf32>
    %c0_48 = arith.constant 0 : index
    %c4 = arith.constant 4 : index
    %c0_49 = arith.constant 0 : index
    %63 = vector.load %arg15[%c0_48, %c4, %c0_49] : memref<1x8x128xf32, #tpu.memory_space<vmem>>, vector<1x1x128xf32>
    %64 = vector.shape_cast %63 : vector<1x1x128xf32> to vector<1x128xf32>
    %65 = vector.broadcast %64 : vector<1x128xf32> to vector<64x128xf32>
    %66 = arith.addf %62, %65 : vector<64x128xf32>
    %cst_50 = arith.constant 0.000000e+00 : f32
    %67 = vector.broadcast %cst_50 : f32 to vector<64x128xf32>
    %68 = arith.maximumf %66, %67 : vector<64x128xf32>
    %69 = arith.addf %3, %68 : vector<64x128xf32>
    %c0_51 = arith.constant 0 : index
    %c5 = arith.constant 5 : index
    %c0_52 = arith.constant 0 : index
    %70 = vector.load %arg15[%c0_51, %c5, %c0_52] : memref<1x8x128xf32, #tpu.memory_space<vmem>>, vector<1x1x128xf32>
    %71 = vector.shape_cast %70 : vector<1x1x128xf32> to vector<1x128xf32>
    %c0_53 = arith.constant 0 : index
    %c6 = arith.constant 6 : index
    %c0_54 = arith.constant 0 : index
    %72 = vector.load %arg15[%c0_53, %c6, %c0_54] : memref<1x8x128xf32, #tpu.memory_space<vmem>>, vector<1x1x128xf32>
    %73 = vector.shape_cast %72 : vector<1x1x128xf32> to vector<1x128xf32>
    %cst_55 = arith.constant dense<0.000000e+00> : vector<128xf32>
    %74 = vector.multi_reduction <add>, %69, %cst_55 [0] : vector<64x128xf32> to vector<128xf32>
    %75 = vector.shape_cast %74 : vector<128xf32> to vector<1x128xf32>
    %cst_56 = arith.constant 6.400000e+01 : f32
    %76 = vector.broadcast %cst_56 : f32 to vector<1x128xf32>
    %77 = arith.divf %75, %76 : vector<1x128xf32>
    %78 = vector.broadcast %77 : vector<1x128xf32> to vector<64x128xf32>
    %79 = arith.subf %69, %78 : vector<64x128xf32>
    %80 = arith.mulf %79, %79 : vector<64x128xf32>
    %cst_57 = arith.constant dense<0.000000e+00> : vector<128xf32>
    %81 = vector.multi_reduction <add>, %80, %cst_57 [0] : vector<64x128xf32> to vector<128xf32>
    %82 = vector.shape_cast %81 : vector<128xf32> to vector<1x128xf32>
    %cst_58 = arith.constant 6.400000e+01 : f32
    %83 = vector.broadcast %cst_58 : f32 to vector<1x128xf32>
    %84 = arith.divf %82, %83 : vector<1x128xf32>
    %cst_59 = arith.constant 9.99999974E-6 : f32
    %85 = vector.broadcast %cst_59 : f32 to vector<1x128xf32>
    %86 = arith.addf %84, %85 : vector<1x128xf32>
    %87 = math.rsqrt %86 : vector<1x128xf32>
    %88 = vector.broadcast %87 : vector<1x128xf32> to vector<64x128xf32>
    %89 = arith.mulf %79, %88 : vector<64x128xf32>
    %90 = vector.broadcast %71 : vector<1x128xf32> to vector<64x128xf32>
    %91 = arith.mulf %89, %90 : vector<64x128xf32>
    %92 = vector.broadcast %73 : vector<1x128xf32> to vector<64x128xf32>
    %93 = arith.addf %91, %92 : vector<64x128xf32>
    %c0_60 = arith.constant 0 : index
    %c0_61 = arith.constant 0 : index
    %94 = vector.load %arg23[%c0_60, %c0_61] : memref<64x128xf32, #tpu.memory_space<vmem>>, vector<64x128xf32>
    tpu.vector_store %arg23[%c0_60, %c0_61], %93 {strides = array<i32>} : memref<64x128xf32, #tpu.memory_space<vmem>>, vector<64x128xf32>,
    %c2_i32 = arith.constant 2 : i32
    %95 = arith.cmpi eq, %arg0, %c2_i32 : i32
    %96 = arith.extui %95 : i1 to i32
    %c0_i32_62 = arith.constant 0 : i32
    %97 = arith.cmpi ne, %96, %c0_i32_62 : i32
    scf.if %97 {
      %c0_63 = arith.constant 0 : index
      %c0_64 = arith.constant 0 : index
      %98 = vector.load %arg16[%c0_63, %c0_64] : memref<128x256xbf16, #tpu.memory_space<vmem>>, vector<128x256xbf16>
      %99 = arith.truncf %93 : vector<64x128xf32> to vector<64x128xbf16>
      %cst_65 = arith.constant dense<0.000000e+00> : vector<64x256xf32>
      %100 = tpu.matmul %99, %98, %cst_65 {dimension_numbers = #tpu.dot_dimension_numbers<[1], [0], [0], [1], [0, 0, 1, 1], [], []>} : vector<64x128xbf16>, vector<128x256xbf16>, vector<64x256xf32> -> vector<64x256xf32>
      %c0_66 = arith.constant 0 : index
      %c0_67 = arith.constant 0 : index
      %101 = vector.load %arg17[%c0_66, %c0_67] : memref<1x256xf32, #tpu.memory_space<vmem>>, vector<1x256xf32>
      %102 = vector.broadcast %101 : vector<1x256xf32> to vector<64x256xf32>
      %103 = arith.addf %100, %102 : vector<64x256xf32>
      %cst_68 = arith.constant 0.000000e+00 : f32
      %104 = vector.broadcast %cst_68 : f32 to vector<64x256xf32>
      %105 = arith.maximumf %103, %104 : vector<64x256xf32>
      %c0_69 = arith.constant 0 : index
      %c0_70 = arith.constant 0 : index
      %106 = vector.load %arg18[%c0_69, %c0_70] : memref<256x128xbf16, #tpu.memory_space<vmem>>, vector<256x128xbf16>
      %107 = arith.truncf %105 : vector<64x256xf32> to vector<64x256xbf16>
      %cst_71 = arith.constant dense<0.000000e+00> : vector<64x128xf32>
      %108 = tpu.matmul %107, %106, %cst_71 {dimension_numbers = #tpu.dot_dimension_numbers<[1], [0], [0], [1], [0, 0, 1, 1], [], []>} : vector<64x256xbf16>, vector<256x128xbf16>, vector<64x128xf32> -> vector<64x128xf32>
      %c0_72 = arith.constant 0 : index
      %c0_73 = arith.constant 0 : index
      %109 = vector.load %arg19[%c0_72, %c0_73] : memref<1x128xf32, #tpu.memory_space<vmem>>, vector<1x128xf32>
      %110 = vector.broadcast %109 : vector<1x128xf32> to vector<64x128xf32>
      %111 = arith.addf %108, %110 : vector<64x128xf32>
      %c0_74 = arith.constant 0 : index
      %c0_75 = arith.constant 0 : index
      %112 = vector.load %arg20[%c0_74, %c0_75] : memref<64x1xf32, #tpu.memory_space<vmem>>, vector<64x1xf32>
      %c0_76 = arith.constant 0 : index
      %c0_77 = arith.constant 0 : index
      %113 = vector.load %arg21[%c0_76, %c0_77] : memref<1x128xf32, #tpu.memory_space<vmem>>, vector<1x128xf32>
      %114 = vector.broadcast %113 : vector<1x128xf32> to vector<64x128xf32>
      %115 = arith.mulf %114, %111 : vector<64x128xf32>
      %116 = vector.broadcast %112 : vector<64x1xf32> to vector<64x128xf32>
      %117 = arith.addf %116, %115 : vector<64x128xf32>
      %c0_78 = arith.constant 0 : index
      %c0_79 = arith.constant 0 : index
      %118 = vector.load %arg22[%c0_78, %c0_79] : memref<64x128xf32, #tpu.memory_space<vmem>>, vector<64x128xf32>
      tpu.vector_store %arg22[%c0_78, %c0_79], %117 {strides = array<i32>} : memref<64x128xf32, #tpu.memory_space<vmem>>, vector<64x128xf32>,
    } else {
    }
    return
  }
  func.func @transform_0(%arg0: i32) -> (i32, i32) {
    %c0_i32 = arith.constant 0 : i32
    %c0_i32_0 = arith.constant 0 : i32
    %c0_i32_1 = arith.constant 0 : i32
    return %c0_i32, %c0_i32_0 : i32, i32
  }
  func.func @transform_1(%arg0: i32) -> (i32, i32) {
    %c0_i32 = arith.constant 0 : i32
    %c0_i32_0 = arith.constant 0 : i32
    %c0_i32_1 = arith.constant 0 : i32
    return %c0_i32, %c0_i32_0 : i32, i32
  }
  func.func @transform_2(%arg0: i32) -> (i32, i32) {
    %c0_i32 = arith.constant 0 : i32
    %c0_i32_0 = arith.constant 0 : i32
    %c0_i32_1 = arith.constant 0 : i32
    return %c0_i32, %c0_i32_0 : i32, i32
  }
  func.func @transform_3(%arg0: i32) -> (i32, i32) {
    %c0_i32 = arith.constant 0 : i32
    %c0_i32_0 = arith.constant 0 : i32
    %c0_i32_1 = arith.constant 0 : i32
    return %c0_i32, %c0_i32_0 : i32, i32
  }
  func.func @transform_4(%arg0: i32) -> (i32, i32) {
    %c0_i32 = arith.constant 0 : i32
    %c0_i32_0 = arith.constant 0 : i32
    %c0_i32_1 = arith.constant 0 : i32
    return %c0_i32, %c0_i32_0 : i32, i32
  }
  func.func @transform_5(%arg0: i32) -> (i32, i32) {
    %c0_i32 = arith.constant 0 : i32
    %c0_i32_0 = arith.constant 0 : i32
    %c0_i32_1 = arith.constant 0 : i32
    return %c0_i32, %c0_i32_0 : i32, i32
  }
  func.func @transform_6(%arg0: i32) -> (i32, i32) {
    %c0_i32 = arith.constant 0 : i32
    %c0_i32_0 = arith.constant 0 : i32
    %c0_i32_1 = arith.constant 0 : i32
    return %c0_i32, %c0_i32_0 : i32, i32
  }
  func.func @transform_7(%arg0: i32) -> (i32, i32) {
    %c0_i32 = arith.constant 0 : i32
    %c0_i32_0 = arith.constant 0 : i32
    %c0_i32_1 = arith.constant 0 : i32
    return %c0_i32, %c0_i32_0 : i32, i32
  }
  func.func @transform_8(%arg0: i32) -> (i32, i32) {
    %c0_i32 = arith.constant 0 : i32
    %c0_i32_0 = arith.constant 0 : i32
    %c0_i32_1 = arith.constant 0 : i32
    return %c0_i32, %c0_i32_0 : i32, i32
  }
  func.func @transform_9(%arg0: i32) -> (i32, i32, i32) {
    %c0_i32 = arith.constant 0 : i32
    %c0_i32_0 = arith.constant 0 : i32
    %c0_i32_1 = arith.constant 0 : i32
    return %arg0, %c0_i32, %c0_i32_0 : i32, i32, i32
  }
  func.func @transform_10(%arg0: i32) -> (i32, i32, i32) {
    %c0_i32 = arith.constant 0 : i32
    %c0_i32_0 = arith.constant 0 : i32
    %c0_i32_1 = arith.constant 0 : i32
    return %arg0, %c0_i32, %c0_i32_0 : i32, i32, i32
  }
  func.func @transform_11(%arg0: i32) -> (i32, i32, i32) {
    %c0_i32 = arith.constant 0 : i32
    %c0_i32_0 = arith.constant 0 : i32
    %c0_i32_1 = arith.constant 0 : i32
    return %arg0, %c0_i32, %c0_i32_0 : i32, i32, i32
  }
  func.func @transform_12(%arg0: i32) -> (i32, i32, i32) {
    %c0_i32 = arith.constant 0 : i32
    %c0_i32_0 = arith.constant 0 : i32
    %c0_i32_1 = arith.constant 0 : i32
    return %arg0, %c0_i32, %c0_i32_0 : i32, i32, i32
  }
  func.func @transform_13(%arg0: i32) -> (i32, i32, i32) {
    %c0_i32 = arith.constant 0 : i32
    %c0_i32_0 = arith.constant 0 : i32
    %c0_i32_1 = arith.constant 0 : i32
    return %arg0, %c0_i32, %c0_i32_0 : i32, i32, i32
  }
  func.func @transform_14(%arg0: i32) -> (i32, i32, i32) {
    %c0_i32 = arith.constant 0 : i32
    %c0_i32_0 = arith.constant 0 : i32
    %c0_i32_1 = arith.constant 0 : i32
    return %arg0, %c0_i32, %c0_i32_0 : i32, i32, i32
  }
  func.func @transform_15(%arg0: i32) -> (i32, i32) {
    %c0_i32 = arith.constant 0 : i32
    %c0_i32_0 = arith.constant 0 : i32
    %c0_i32_1 = arith.constant 0 : i32
    return %c0_i32, %c0_i32_0 : i32, i32
  }
  func.func @transform_16(%arg0: i32) -> (i32, i32) {
    %c0_i32 = arith.constant 0 : i32
    %c0_i32_0 = arith.constant 0 : i32
    %c0_i32_1 = arith.constant 0 : i32
    return %c0_i32, %c0_i32_0 : i32, i32
  }
  func.func @transform_17(%arg0: i32) -> (i32, i32) {
    %c0_i32 = arith.constant 0 : i32
    %c0_i32_0 = arith.constant 0 : i32
    %c0_i32_1 = arith.constant 0 : i32
    return %c0_i32, %c0_i32_0 : i32, i32
  }
  func.func @transform_18(%arg0: i32) -> (i32, i32) {
    %c0_i32 = arith.constant 0 : i32
    %c0_i32_0 = arith.constant 0 : i32
    %c0_i32_1 = arith.constant 0 : i32
    return %c0_i32, %c0_i32_0 : i32, i32
  }
  func.func @transform_19(%arg0: i32) -> (i32, i32) {
    %c0_i32 = arith.constant 0 : i32
    %c0_i32_0 = arith.constant 0 : i32
    %c0_i32_1 = arith.constant 0 : i32
    return %c0_i32, %c0_i32_0 : i32, i32
  }
  func.func @transform_20(%arg0: i32) -> (i32, i32) {
    %c0_i32 = arith.constant 0 : i32
    %c0_i32_0 = arith.constant 0 : i32
    %c0_i32_1 = arith.constant 0 : i32
    return %c0_i32, %c0_i32_0 : i32, i32
  }
  func.func @transform_21(%arg0: i32) -> (i32, i32) {
    %c0_i32 = arith.constant 0 : i32
    %c0_i32_0 = arith.constant 0 : i32
    %c0_i32_1 = arith.constant 0 : i32
    return %c0_i32, %c0_i32_0 : i32, i32
  }
}

</mosaic_0001>

<llo_original>
// kernel: sub.3
$region0: #{sub.3}
  #allocation0 [shape = 's32[1]{0}', space=sflag, size = 0x4, scoped, tag = 'scoped memory for sub.3']
  %s0 = inlined_call_operand.vmem [shape: f32[256,5], index: 0, kind: input, shape index: {}]
  %s1 = inlined_call_operand.vmem [shape: f32[256,5], index: 1, kind: input, shape index: {}]
  %s2 = inlined_call_operand.vmem [shape: bf16[256,5], index: 2, kind: output, shape index: {}]
  %v3 = vld [vmem:[%s0] sm:$0xff]
  %v4 = vld [vmem:[%s1] sm:$0xff]
  %5 = xla_tuple %v3, %v4
  %6 = xla_tuple %5
  %v7 = vsub.f32 %v3, %v4
  %8 = xla_tuple %v7
  %v9 = vpack.c.bf16 0.0, %v7
  %10 = vst [vmem:[%s2] sm:$0xf] %v9
  %s11 = scalar_lea.vmem %s0, 8
  %v12 = vld [vmem:[%s11] sm:$0xff]
  %s13 = scalar_lea.vmem %s1, 8
  %v14 = vld [vmem:[%s13] sm:$0xff]
  %15 = xla_tuple %v12, %v14
  %16 = xla_tuple %15
  %v17 = vsub.f32 %v12, %v14
  %18 = xla_tuple %v17
  %s19 = scalar_lea.vmem %s2, 4
  %v20 = vpack.c.bf16 0.0, %v17
  %21 = vst [vmem:[%s19] sm:$0xf] %v20
  %s22 = scalar_lea.vmem %s0, 16
  %v23 = vld [vmem:[%s22] sm:$0xff]
  %s24 = scalar_lea.vmem %s1, 16
  %v25 = vld [vmem:[%s24] sm:$0xff]
  %26 = xla_tuple %v23, %v25
  %27 = xla_tuple %26
  %v28 = vsub.f32 %v23, %v25
  %29 = xla_tuple %v28
  %s30 = scalar_lea.vmem %s2, 8
  %v31 = vpack.c.bf16 0.0, %v28
  %32 = vst [vmem:[%s30] sm:$0xf] %v31
  %s33 = scalar_lea.vmem %s0, 24
  %v34 = vld [vmem:[%s33] sm:$0xff]
  %s35 = scalar_lea.vmem %s1, 24
  %v36 = vld [vmem:[%s35] sm:$0xff]
  %37 = xla_tuple %v34, %v36
  %38 = xla_tuple %37
  %v39 = vsub.f32 %v34, %v36
  %40 = xla_tuple %v39
  %s41 = scalar_lea.vmem %s2, 12
  %v42 = vpack.c.bf16 0.0, %v39
  %43 = vst [vmem:[%s41] sm:$0xf] %v42
  %s44 = scalar_lea.vmem %s0, 32
  %v45 = vld [vmem:[%s44] sm:$0xff]
  %s46 = scalar_lea.vmem %s1, 32
  %v47 = vld [vmem:[%s46] sm:$0xff]
  %48 = xla_tuple %v45, %v47
  %49 = xla_tuple %48
  %v50 = vsub.f32 %v45, %v47
  %51 = xla_tuple %v50
  %s52 = scalar_lea.vmem %s2, 16
  %v53 = vpack.c.bf16 0.0, %v50
  %54 = vst [vmem:[%s52] sm:$0xf] %v53
  %s55 = scalar_lea.vmem %s0, 40
  %v56 = vld [vmem:[%s55] sm:$0xff]
  %s57 = scalar_lea.vmem %s1, 40
  %v58 = vld [vmem:[%s57] sm:$0xff]
  %59 = xla_tuple %v56, %v58
  %60 = xla_tuple %59
  %v61 = vsub.f32 %v56, %v58
  %62 = xla_tuple %v61
  %s63 = scalar_lea.vmem %s2, 20
  %v64 = vpack.c.bf16 0.0, %v61
  %65 = vst [vmem:[%s63] sm:$0xf] %v64
  %s66 = scalar_lea.vmem %s0, 48
  %v67 = vld [vmem:[%s66] sm:$0xff]
  %s68 = scalar_lea.vmem %s1, 48
  %v69 = vld [vmem:[%s68] sm:$0xff]
  %70 = xla_tuple %v67, %v69
  %71 = xla_tuple %70
  %v72 = vsub.f32 %v67, %v69
  %73 = xla_tuple %v72
  %s74 = scalar_lea.vmem %s2, 24
  %v75 = vpack.c.bf16 0.0, %v72
  %76 = vst [vmem:[%s74] sm:$0xf] %v75
  %s77 = scalar_lea.vmem %s0, 56
  %v78 = vld [vmem:[%s77] sm:$0xff]
  %s79 = scalar_lea.vmem %s1, 56
  %v80 = vld [vmem:[%s79] sm:$0xff]
  %81 = xla_tuple %v78, %v80
  %82 = xla_tuple %81
  %v83 = vsub.f32 %v78, %v80
  %84 = xla_tuple %v83
  %s85 = scalar_lea.vmem %s2, 28
  %v86 = vpack.c.bf16 0.0, %v83
  %87 = vst [vmem:[%s85] sm:$0xf] %v86
  %s88 = scalar_lea.vmem %s0, 64
  %v89 = vld [vmem:[%s88] sm:$0xff]
  %s90 = scalar_lea.vmem %s1, 64
  %v91 = vld [vmem:[%s90] sm:$0xff]
  %92 = xla_tuple %v89, %v91
  %93 = xla_tuple %92
  %v94 = vsub.f32 %v89, %v91
  %95 = xla_tuple %v94
  %s96 = scalar_lea.vmem %s2, 32
  %v97 = vpack.c.bf16 0.0, %v94
  %98 = vst [vmem:[%s96] sm:$0xf] %v97
  %s99 = scalar_lea.vmem %s0, 72
  %v100 = vld [vmem:[%s99] sm:$0xff]
  %s101 = scalar_lea.vmem %s1, 72
  %v102 = vld [vmem:[%s101] sm:$0xff]
  %103 = xla_tuple %v100, %v102
  %104 = xla_tuple %103
  %v105 = vsub.f32 %v100, %v102
  %106 = xla_tuple %v105
  %s107 = scalar_lea.vmem %s2, 36
  %v108 = vpack.c.bf16 0.0, %v105
  %109 = vst [vmem:[%s107] sm:$0xf] %v108
  %s110 = scalar_lea.vmem %s0, 80
  %v111 = vld [vmem:[%s110] sm:$0xff]
  %s112 = scalar_lea.vmem %s1, 80
  %v113 = vld [vmem:[%s112] sm:$0xff]
  %114 = xla_tuple %v111, %v113
  %115 = xla_tuple %114
  %v116 = vsub.f32 %v111, %v113
  %117 = xla_tuple %v116
  %s118 = scalar_lea.vmem %s2, 40
  %v119 = vpack.c.bf16 0.0, %v116
  %120 = vst [vmem:[%s118] sm:$0xf] %v119
  %s121 = scalar_lea.vmem %s0, 88
  %v122 = vld [vmem:[%s121] sm:$0xff]
  %s123 = scalar_lea.vmem %s1, 88
  %v124 = vld [vmem:[%s123] sm:$0xff]
  %125 = xla_tuple %v122, %v124
  %126 = xla_tuple %125
  %v127 = vsub.f32 %v122, %v124
  %128 = xla_tuple %v127
  %s129 = scalar_lea.vmem %s2, 44
  %v130 = vpack.c.bf16 0.0, %v127
  %131 = vst [vmem:[%s129] sm:$0xf] %v130
  %s132 = scalar_lea.vmem %s0, 96
  %v133 = vld [vmem:[%s132] sm:$0xff]
  %s134 = scalar_lea.vmem %s1, 96
  %v135 = vld [vmem:[%s134] sm:$0xff]
  %136 = xla_tuple %v133, %v135
  %137 = xla_tuple %136
  %v138 = vsub.f32 %v133, %v135
  %139 = xla_tuple %v138
  %s140 = scalar_lea.vmem %s2, 48
  %v141 = vpack.c.bf16 0.0, %v138
  %142 = vst [vmem:[%s140] sm:$0xf] %v141
  %s143 = scalar_lea.vmem %s0, 104
  %v144 = vld [vmem:[%s143] sm:$0xff]
  %s145 = scalar_lea.vmem %s1, 104
  %v146 = vld [vmem:[%s145] sm:$0xff]
  %147 = xla_tuple %v144, %v146
  %148 = xla_tuple %147
  %v149 = vsub.f32 %v144, %v146
  %150 = xla_tuple %v149
  %s151 = scalar_lea.vmem %s2, 52
  %v152 = vpack.c.bf16 0.0, %v149
  %153 = vst [vmem:[%s151] sm:$0xf] %v152
  %s154 = scalar_lea.vmem %s0, 112
  %v155 = vld [vmem:[%s154] sm:$0xff]
  %s156 = scalar_lea.vmem %s1, 112
  %v157 = vld [vmem:[%s156] sm:$0xff]
  %158 = xla_tuple %v155, %v157
  %159 = xla_tuple %158
  %v160 = vsub.f32 %v155, %v157
  %161 = xla_tuple %v160
  %s162 = scalar_lea.vmem %s2, 56
  %v163 = vpack.c.bf16 0.0, %v160
  %164 = vst [vmem:[%s162] sm:$0xf] %v163
  %s165 = scalar_lea.vmem %s0, 120
  %v166 = vld [vmem:[%s165] sm:$0xff]
  %s167 = scalar_lea.vmem %s1, 120
  %v168 = vld [vmem:[%s167] sm:$0xff]
  %169 = xla_tuple %v166, %v168
  %170 = xla_tuple %169
  %v171 = vsub.f32 %v166, %v168
  %172 = xla_tuple %v171
  %s173 = scalar_lea.vmem %s2, 60
  %v174 = vpack.c.bf16 0.0, %v171
  %175 = vst [vmem:[%s173] sm:$0xf] %v174
  %s176 = scalar_lea.vmem %s0, 128
  %v177 = vld [vmem:[%s176] sm:$0xff]
  %s178 = scalar_lea.vmem %s1, 128
  %v179 = vld [vmem:[%s178] sm:$0xff]
  %180 = xla_tuple %v177, %v179
  %181 = xla_tuple %180
  %v182 = vsub.f32 %v177, %v179
  %183 = xla_tuple %v182
  %s184 = scalar_lea.vmem %s2, 64
  %v185 = vpack.c.bf16 0.0, %v182
  %186 = vst [vmem:[%s184] sm:$0xf] %v185
  %s187 = scalar_lea.vmem %s0, 136
  %v188 = vld [vmem:[%s187] sm:$0xff]
  %s189 = scalar_lea.vmem %s1, 136
  %v190 = vld [vmem:[%s189] sm:$0xff]
  %191 = xla_tuple %v188, %v190
  %192 = xla_tuple %191
  %v193 = vsub.f32 %v188, %v190
  %194 = xla_tuple %v193
  %s195 = scalar_lea.vmem %s2, 68
  %v196 = vpack.c.bf16 0.0, %v193
  %197 = vst [vmem:[%s195] sm:$0xf] %v196
  %s198 = scalar_lea.vmem %s0, 144
  %v199 = vld [vmem:[%s198] sm:$0xff]
  %s200 = scalar_lea.vmem %s1, 144
  %v201 = vld [vmem:[%s200] sm:$0xff]
  %202 = xla_tuple %v199, %v201
  %203 = xla_tuple %202
  %v204 = vsub.f32 %v199, %v201
  %205 = xla_tuple %v204
  %s206 = scalar_lea.vmem %s2, 72
  %v207 = vpack.c.bf16 0.0, %v204
  %208 = vst [vmem:[%s206] sm:$0xf] %v207
  %s209 = scalar_lea.vmem %s0, 152
  %v210 = vld [vmem:[%s209] sm:$0xff]
  %s211 = scalar_lea.vmem %s1, 152
  %v212 = vld [vmem:[%s211] sm:$0xff]
  %213 = xla_tuple %v210, %v212
  %214 = xla_tuple %213
  %v215 = vsub.f32 %v210, %v212
  %216 = xla_tuple %v215
  %s217 = scalar_lea.vmem %s2, 76
  %v218 = vpack.c.bf16 0.0, %v215
  %219 = vst [vmem:[%s217] sm:$0xf] %v218
  %s220 = scalar_lea.vmem %s0, 160
  %v221 = vld [vmem:[%s220] sm:$0xff]
  %s222 = scalar_lea.vmem %s1, 160
  %v223 = vld [vmem:[%s222] sm:$0xff]
  %224 = xla_tuple %v221, %v223
  %225 = xla_tuple %224
  %v226 = vsub.f32 %v221, %v223
  %227 = xla_tuple %v226
  %s228 = scalar_lea.vmem %s2, 80
  %v229 = vpack.c.bf16 0.0, %v226
  %230 = vst [vmem:[%s228] sm:$0xf] %v229
  %s231 = scalar_lea.vmem %s0, 168
  %v232 = vld [vmem:[%s231] sm:$0xff]
  %s233 = scalar_lea.vmem %s1, 168
  %v234 = vld [vmem:[%s233] sm:$0xff]
  %235 = xla_tuple %v232, %v234
  %236 = xla_tuple %235
  %v237 = vsub.f32 %v232, %v234
  %238 = xla_tuple %v237
  %s239 = scalar_lea.vmem %s2, 84
  %v240 = vpack.c.bf16 0.0, %v237
  %241 = vst [vmem:[%s239] sm:$0xf] %v240
  %s242 = scalar_lea.vmem %s0, 176
  %v243 = vld [vmem:[%s242] sm:$0xff]
  %s244 = scalar_lea.vmem %s1, 176
  %v245 = vld [vmem:[%s244] sm:$0xff]
  %246 = xla_tuple %v243, %v245
  %247 = xla_tuple %246
  %v248 = vsub.f32 %v243, %v245
  %249 = xla_tuple %v248
  %s250 = scalar_lea.vmem %s2, 88
  %v251 = vpack.c.bf16 0.0, %v248
  %252 = vst [vmem:[%s250] sm:$0xf] %v251
  %s253 = scalar_lea.vmem %s0, 184
  %v254 = vld [vmem:[%s253] sm:$0xff]
  %s255 = scalar_lea.vmem %s1, 184
  %v256 = vld [vmem:[%s255] sm:$0xff]
  %257 = xla_tuple %v254, %v256
  %258 = xla_tuple %257
  %v259 = vsub.f32 %v254, %v256
  %260 = xla_tuple %v259
  %s261 = scalar_lea.vmem %s2, 92
  %v262 = vpack.c.bf16 0.0, %v259
  %263 = vst [vmem:[%s261] sm:$0xf] %v262
  %s264 = scalar_lea.vmem %s0, 192
  %v265 = vld [vmem:[%s264] sm:$0xff]
  %s266 = scalar_lea.vmem %s1, 192
  %v267 = vld [vmem:[%s266] sm:$0xff]
  %268 = xla_tuple %v265, %v267
  %269 = xla_tuple %268
  %v270 = vsub.f32 %v265, %v267
  %271 = xla_tuple %v270
  %s272 = scalar_lea.vmem %s2, 96
  %v273 = vpack.c.bf16 0.0, %v270
  %274 = vst [vmem:[%s272] sm:$0xf] %v273
  %s275 = scalar_lea.vmem %s0, 200
  %v276 = vld [vmem:[%s275] sm:$0xff]
  %s277 = scalar_lea.vmem %s1, 200
  %v278 = vld [vmem:[%s277] sm:$0xff]
  %279 = xla_tuple %v276, %v278
  %280 = xla_tuple %279
  %v281 = vsub.f32 %v276, %v278
  %282 = xla_tuple %v281
  %s283 = scalar_lea.vmem %s2, 100
  %v284 = vpack.c.bf16 0.0, %v281
  %285 = vst [vmem:[%s283] sm:$0xf] %v284
  %s286 = scalar_lea.vmem %s0, 208
  %v287 = vld [vmem:[%s286] sm:$0xff]
  %s288 = scalar_lea.vmem %s1, 208
  %v289 = vld [vmem:[%s288] sm:$0xff]
  %290 = xla_tuple %v287, %v289
  %291 = xla_tuple %290
  %v292 = vsub.f32 %v287, %v289
  %293 = xla_tuple %v292
  %s294 = scalar_lea.vmem %s2, 104
  %v295 = vpack.c.bf16 0.0, %v292
  %296 = vst [vmem:[%s294] sm:$0xf] %v295
  %s297 = scalar_lea.vmem %s0, 216
  %v298 = vld [vmem:[%s297] sm:$0xff]
  %s299 = scalar_lea.vmem %s1, 216
  %v300 = vld [vmem:[%s299] sm:$0xff]
  %301 = xla_tuple %v298, %v300
  %302 = xla_tuple %301
  %v303 = vsub.f32 %v298, %v300
  %304 = xla_tuple %v303
  %s305 = scalar_lea.vmem %s2, 108
  %v306 = vpack.c.bf16 0.0, %v303
  %307 = vst [vmem:[%s305] sm:$0xf] %v306
  %s308 = scalar_lea.vmem %s0, 224
  %v309 = vld [vmem:[%s308] sm:$0xff]
  %s310 = scalar_lea.vmem %s1, 224
  %v311 = vld [vmem:[%s310] sm:$0xff]
  %312 = xla_tuple %v309, %v311
  %313 = xla_tuple %312
  %v314 = vsub.f32 %v309, %v311
  %315 = xla_tuple %v314
  %s316 = scalar_lea.vmem %s2, 112
  %v317 = vpack.c.bf16 0.0, %v314
  %318 = vst [vmem:[%s316] sm:$0xf] %v317
  %s319 = scalar_lea.vmem %s0, 232
  %v320 = vld [vmem:[%s319] sm:$0xff]
  %s321 = scalar_lea.vmem %s1, 232
  %v322 = vld [vmem:[%s321] sm:$0xff]
  %323 = xla_tuple %v320, %v322
  %324 = xla_tuple %323
  %v325 = vsub.f32 %v320, %v322
  %326 = xla_tuple %v325
  %s327 = scalar_lea.vmem %s2, 116
  %v328 = vpack.c.bf16 0.0, %v325
  %329 = vst [vmem:[%s327] sm:$0xf] %v328
  %s330 = scalar_lea.vmem %s0, 240
  %v331 = vld [vmem:[%s330] sm:$0xff]
  %s332 = scalar_lea.vmem %s1, 240
  %v333 = vld [vmem:[%s332] sm:$0xff]
  %334 = xla_tuple %v331, %v333
  %335 = xla_tuple %334
  %v336 = vsub.f32 %v331, %v333
  %337 = xla_tuple %v336
  %s338 = scalar_lea.vmem %s2, 120
  %v339 = vpack.c.bf16 0.0, %v336
  %340 = vst [vmem:[%s338] sm:$0xf] %v339
  %s341 = scalar_lea.vmem %s0, 248
  %v342 = vld [vmem:[%s341] sm:$0xff]
  %s343 = scalar_lea.vmem %s1, 248
  %v344 = vld [vmem:[%s343] sm:$0xff]
  %345 = xla_tuple %v342, %v344
  %346 = xla_tuple %345
  %v347 = vsub.f32 %v342, %v344
  %348 = xla_tuple %v347
  %s349 = scalar_lea.vmem %s2, 124
  %v350 = vpack.c.bf16 0.0, %v347
  %351 = vst [vmem:[%s349] sm:$0xf] %v350

// kernel: npde_gnn_forward.1
$region0: #{npde_gnn_forward.1}
  #allocation0 [shape = 'u32[]', space=smem, size = 0x4, offset = 0x4, fixed_abs, tag = 'smem constant byte address 0x4 - core index']
  #allocation1 [shape = 'u32[144,128]{1,0:T(1,128)}', space=vmem, size = 0x12000, scoped, tag = 'internal scratch']
  #allocation2 [shape = 'f32[64,128]{1,0:T(8,128)}', space=vmem, size = 0x8000, scoped, tag = 'scratch operand']
  #allocation3 [shape = 'bf16[256,128]{1,0:T(16,128)(2,1)}', space=vmem, size = 0x10000, scoped, tag = 'scratch operand']
  #allocation4 [shape = 'bf16[64,256]{1,0:T(16,128)(2,1)}', space=vmem, size = 0x8000, scoped, tag = 'scratch operand']
  #allocation5 [shape = 'bf16[128,128]{1,0:T(16,128)(2,1)}', space=vmem, size = 0x8000, scoped, tag = 'scratch operand']
  %s0 = inlined_call_operand.vmem [shape: f32[64,8], index: 0, kind: input, shape index: {}]
  %s1 = inlined_call_operand.vmem [shape: bf16[8,128], index: 1, kind: input, shape index: {}]
  %s2 = inlined_call_operand.vmem [shape: bf16[128,128], index: 2, kind: input, shape index: {}]
  %s3 = inlined_call_operand.vmem [shape: f32[8,128], index: 3, kind: input, shape index: {}]
  %s4 = inlined_call_operand.vmem [shape: s32[256,1], index: 4, kind: input, shape index: {}]
  %s5 = inlined_call_operand.vmem [shape: s32[256,1], index: 5, kind: input, shape index: {}]
  %s6 = inlined_call_operand.vmem [shape: s32[1,256], index: 6, kind: input, shape index: {}]
  %s7 = inlined_call_operand.vmem [shape: bf16[256,8], index: 7, kind: input, shape index: {}]
  %s8 = inlined_call_operand.vmem [shape: f32[64,1], index: 8, kind: input, shape index: {}]
  %s9 = inlined_call_operand.vmem [shape: bf16[3,128,256], index: 9, kind: input, shape index: {}]
  %s10 = inlined_call_operand.vmem [shape: bf16[3,8,128], index: 10, kind: input, shape index: {}]
  %s11 = inlined_call_operand.vmem [shape: bf16[3,128,128], index: 11, kind: input, shape index: {}]
  %s12 = inlined_call_operand.vmem [shape: bf16[3,256,128], index: 12, kind: input, shape index: {}]
  %s13 = inlined_call_operand.vmem [shape: bf16[3,128,128], index: 13, kind: input, shape index: {}]
  %s14 = inlined_call_operand.vmem [shape: f32[3,8,128], index: 14, kind: input, shape index: {}]
  %s15 = inlined_call_operand.vmem [shape: bf16[128,256], index: 15, kind: input, shape index: {}]
  %s16 = inlined_call_operand.vmem [shape: f32[1,256], index: 16, kind: input, shape index: {}]
  %s17 = inlined_call_operand.vmem [shape: bf16[256,128], index: 17, kind: input, shape index: {}]
  %s18 = inlined_call_operand.vmem [shape: f32[1,128], index: 18, kind: input, shape index: {}]
  %s19 = inlined_call_operand.vmem [shape: f32[64,1], index: 19, kind: input, shape index: {}]
  %s20 = inlined_call_operand.vmem [shape: f32[1,128], index: 20, kind: input, shape index: {}]
  %s21 = inlined_call_operand.vmem [shape: f32[64,128], index: 21, kind: output, shape index: {}]
  %s22 = sld [smem:[#allocation0]]
  $region125: #{npde_gnn_forward.1} parent=0
    _
  %s24 = ssub.s32 1, %s22
  %s25 = scalar_select 0, %s24, %s22
  loop: start=0, step=1, limit=5
  $region2: #{npde_gnn_forward.1} parent=0 // loop_pre_header
    _
  $region3: #{npde_gnn_forward.1} parent=0 // loop_header
    %s27 = sphi 0, %s31
    %p28 = scmp.ge.s32.totalorder %s27, 5
    %s35 = sphi 0, %s35
    %s37 = sphi 0, %s35
    %s38 = sphi 0, %s37
    %s52 = sphi 0, %s38
    %s56 = sphi 0, %s56
    %s58 = sphi 0, %s56
    %s59 = sphi 0, %s58
    %s73 = sphi 0, %s59
    %s77 = sphi 0, %s77
    %s79 = sphi 0, %s77
    %s80 = sphi 0, %s79
    %s94 = sphi 0, %s80
    %s98 = sphi 0, %s98
    %s100 = sphi 0, %s98
    %s101 = sphi 0, %s100
    %s115 = sphi 0, %s101
    %s119 = sphi 0, %s119
    %s121 = sphi 0, %s119
    %s122 = sphi 0, %s121
    %s136 = sphi 0, %s122
    %s140 = sphi 0, %s140
    %s142 = sphi 0, %s140
    %s143 = sphi 0, %s142
    %s157 = sphi 0, %s143
    %s161 = sphi 0, %s161
    %s163 = sphi 0, %s161
    %s164 = sphi 0, %s163
    %s178 = sphi 0, %s164
    %s182 = sphi 0, %s182
    %s184 = sphi 0, %s182
    %s185 = sphi 0, %s184
    %s199 = sphi 0, %s185
    %s203 = sphi 0, %s203
    %s205 = sphi 0, %s203
    %s206 = sphi 0, %s205
    %s220 = sphi 0, %s206
    %s226 = sphi 0, %s228
    %s229 = sphi 0, %s226
    %s230 = sphi 0, %s229
    %s246 = sphi 0, %s230
    %s252 = sphi 0, %s254
    %s255 = sphi 0, %s252
    %s256 = sphi 0, %s255
    %s272 = sphi 0, %s256
    %s278 = sphi 0, %s280
    %s281 = sphi 0, %s278
    %s282 = sphi 0, %s281
    %s298 = sphi 0, %s282
    %s304 = sphi 0, %s306
    %s307 = sphi 0, %s304
    %s308 = sphi 0, %s307
    %s324 = sphi 0, %s308
    %s330 = sphi 0, %s332
    %s333 = sphi 0, %s330
    %s334 = sphi 0, %s333
    %s350 = sphi 0, %s334
    %s356 = sphi 0, %s358
    %s359 = sphi 0, %s356
    %s360 = sphi 0, %s359
    %s376 = sphi 0, %s360
    %s380 = sphi 0, %s380
    %s382 = sphi 0, %s380
    %s383 = sphi 0, %s382
    %s397 = sphi 0, %s383
    %s401 = sphi 0, %s401
    %s403 = sphi 0, %s401
    %s404 = sphi 0, %s403
    %s418 = sphi 0, %s404
    %s422 = sphi 0, %s422
    %s424 = sphi 0, %s422
    %s425 = sphi 0, %s424
    %s439 = sphi 0, %s425
    %s443 = sphi 0, %s443
    %s445 = sphi 0, %s443
    %s446 = sphi 0, %s445
    %s460 = sphi 0, %s446
    %s464 = sphi 0, %s464
    %s466 = sphi 0, %s464
    %s467 = sphi 0, %s466
    %s481 = sphi 0, %s467
    %s485 = sphi 0, %s485
    %s487 = sphi 0, %s485
    %s488 = sphi 0, %s487
    %s502 = sphi 0, %s488
    %s506 = sphi 0, %s506
    %s508 = sphi 0, %s506
    %s509 = sphi 0, %s508
    %s523 = sphi 0, %s509
  $region4: #{npde_gnn_forward.1} parent=0 // loop_header_branch
    %30 = sbr.rel (%p28) target = $region8
  $region5: #{npde_gnn_forward.1} parent=0 // loop_body
    %s32 = ssub.s32 %s27, 1
    %s33 = ssub.s32 %s27, 2
    %s34 = sadd.s32 %s27, 1
    %s36 = sadd.s32 %s35, 1
    %p39 = scmp.eq.s32.totalorder %s27, 2
    %p40 = scmp.ne.s32.totalorder %s35, %s37
    %p41 = scmp.eq.s32.totalorder %s27, 0
    %p42 = por %p40, %p41
    %p43 = scmp.ne.s32.totalorder %s35, %s37
    %p44 = scmp.eq.s32.totalorder %s32, 2
    %p45 = por %p43, %p44
    %p46 = scmp.ne.s32.totalorder %s37, %s38
    %p47 = scmp.eq.s32.totalorder %s32, 0
    %p48 = por %p46, %p47
    %p49 = scmp.ne.s32.totalorder %s37, %s38
    %p50 = scmp.eq.s32.totalorder %s33, 2
    %p51 = por %p49, %p50
    %p53 = scmp.ne.s32.totalorder %s38, %s52
    %p54 = scmp.eq.s32.totalorder %s33, 0
    %p55 = por %p53, %p54
    %s57 = sadd.s32 %s56, 1
    %p60 = scmp.eq.s32.totalorder %s27, 2
    %p61 = scmp.ne.s32.totalorder %s56, %s58
    %p62 = scmp.eq.s32.totalorder %s27, 0
    %p63 = por %p61, %p62
    %p64 = scmp.ne.s32.totalorder %s56, %s58
    %p65 = scmp.eq.s32.totalorder %s32, 2
    %p66 = por %p64, %p65
    %p67 = scmp.ne.s32.totalorder %s58, %s59
    %p68 = scmp.eq.s32.totalorder %s32, 0
    %p69 = por %p67, %p68
    %p70 = scmp.ne.s32.totalorder %s58, %s59
    %p71 = scmp.eq.s32.totalorder %s33, 2
    %p72 = por %p70, %p71
    %p74 = scmp.ne.s32.totalorder %s59, %s73
    %p75 = scmp.eq.s32.totalorder %s33, 0
    %p76 = por %p74, %p75
    %s78 = sadd.s32 %s77, 1
    %p81 = scmp.eq.s32.totalorder %s27, 2
    %p82 = scmp.ne.s32.totalorder %s77, %s79
    %p83 = scmp.eq.s32.totalorder %s27, 0
    %p84 = por %p82, %p83
    %p85 = scmp.ne.s32.totalorder %s77, %s79
    %p86 = scmp.eq.s32.totalorder %s32, 2
    %p87 = por %p85, %p86
    %p88 = scmp.ne.s32.totalorder %s79, %s80
    %p89 = scmp.eq.s32.totalorder %s32, 0
    %p90 = por %p88, %p89
    %p91 = scmp.ne.s32.totalorder %s79, %s80
    %p92 = scmp.eq.s32.totalorder %s33, 2
    %p93 = por %p91, %p92
    %p95 = scmp.ne.s32.totalorder %s80, %s94
    %p96 = scmp.eq.s32.totalorder %s33, 0
    %p97 = por %p95, %p96
    %s99 = sadd.s32 %s98, 1
    %p102 = scmp.eq.s32.totalorder %s27, 2
    %p103 = scmp.ne.s32.totalorder %s98, %s100
    %p104 = scmp.eq.s32.totalorder %s27, 0
    %p105 = por %p103, %p104
    %p106 = scmp.ne.s32.totalorder %s98, %s100
    %p107 = scmp.eq.s32.totalorder %s32, 2
    %p108 = por %p106, %p107
    %p109 = scmp.ne.s32.totalorder %s100, %s101
    %p110 = scmp.eq.s32.totalorder %s32, 0
    %p111 = por %p109, %p110
    %p112 = scmp.ne.s32.totalorder %s100, %s101
    %p113 = scmp.eq.s32.totalorder %s33, 2
    %p114 = por %p112, %p113
    %p116 = scmp.ne.s32.totalorder %s101, %s115
    %p117 = scmp.eq.s32.totalorder %s33, 0
    %p118 = por %p116, %p117
    %s120 = sadd.s32 %s119, 1
    %p123 = scmp.eq.s32.totalorder %s27, 2
    %p124 = scmp.ne.s32.totalorder %s119, %s121
    %p125 = scmp.eq.s32.totalorder %s27, 0
    %p126 = por %p124, %p125
    %p127 = scmp.ne.s32.totalorder %s119, %s121
    %p128 = scmp.eq.s32.totalorder %s32, 2
    %p129 = por %p127, %p128
    %p130 = scmp.ne.s32.totalorder %s121, %s122
    %p131 = scmp.eq.s32.totalorder %s32, 0
    %p132 = por %p130, %p131
    %p133 = scmp.ne.s32.totalorder %s121, %s122
    %p134 = scmp.eq.s32.totalorder %s33, 2
    %p135 = por %p133, %p134
    %p137 = scmp.ne.s32.totalorder %s122, %s136
    %p138 = scmp.eq.s32.totalorder %s33, 0
    %p139 = por %p137, %p138
    %s141 = sadd.s32 %s140, 1
    %p144 = scmp.eq.s32.totalorder %s27, 2
    %p145 = scmp.ne.s32.totalorder %s140, %s142
    %p146 = scmp.eq.s32.totalorder %s27, 0
    %p147 = por %p145, %p146
    %p148 = scmp.ne.s32.totalorder %s140, %s142
    %p149 = scmp.eq.s32.totalorder %s32, 2
    %p150 = por %p148, %p149
    %p151 = scmp.ne.s32.totalorder %s142, %s143
    %p152 = scmp.eq.s32.totalorder %s32, 0
    %p153 = por %p151, %p152
    %p154 = scmp.ne.s32.totalorder %s142, %s143
    %p155 = scmp.eq.s32.totalorder %s33, 2
    %p156 = por %p154, %p155
    %p158 = scmp.ne.s32.totalorder %s143, %s157
    %p159 = scmp.eq.s32.totalorder %s33, 0
    %p160 = por %p158, %p159
    %s162 = sadd.s32 %s161, 1
    %p165 = scmp.eq.s32.totalorder %s27, 2
    %p166 = scmp.ne.s32.totalorder %s161, %s163
    %p167 = scmp.eq.s32.totalorder %s27, 0
    %p168 = por %p166, %p167
    %p169 = scmp.ne.s32.totalorder %s161, %s163
    %p170 = scmp.eq.s32.totalorder %s32, 2
    %p171 = por %p169, %p170
    %p172 = scmp.ne.s32.totalorder %s163, %s164
    %p173 = scmp.eq.s32.totalorder %s32, 0
    %p174 = por %p172, %p173
    %p175 = scmp.ne.s32.totalorder %s163, %s164
    %p176 = scmp.eq.s32.totalorder %s33, 2
    %p177 = por %p175, %p176
    %p179 = scmp.ne.s32.totalorder %s164, %s178
    %p180 = scmp.eq.s32.totalorder %s33, 0
    %p181 = por %p179, %p180
    %s183 = sadd.s32 %s182, 1
    %p186 = scmp.eq.s32.totalorder %s27, 2
    %p187 = scmp.ne.s32.totalorder %s182, %s184
    %p188 = scmp.eq.s32.totalorder %s27, 0
    %p189 = por %p187, %p188
    %p190 = scmp.ne.s32.totalorder %s182, %s184
    %p191 = scmp.eq.s32.totalorder %s32, 2
    %p192 = por %p190, %p191
    %p193 = scmp.ne.s32.totalorder %s184, %s185
    %p194 = scmp.eq.s32.totalorder %s32, 0
    %p195 = por %p193, %p194
    %p196 = scmp.ne.s32.totalorder %s184, %s185
    %p197 = scmp.eq.s32.totalorder %s33, 2
    %p198 = por %p196, %p197
    %p200 = scmp.ne.s32.totalorder %s185, %s199
    %p201 = scmp.eq.s32.totalorder %s33, 0
    %p202 = por %p200, %p201
    %s204 = sadd.s32 %s203, 1
    %p207 = scmp.eq.s32.totalorder %s27, 2
    %p208 = scmp.ne.s32.totalorder %s203, %s205
    %p209 = scmp.eq.s32.totalorder %s27, 0
    %p210 = por %p208, %p209
    %p211 = scmp.ne.s32.totalorder %s203, %s205
    %p212 = scmp.eq.s32.totalorder %s32, 2
    %p213 = por %p211, %p212
    %p214 = scmp.ne.s32.totalorder %s205, %s206
    %p215 = scmp.eq.s32.totalorder %s32, 0
    %p216 = por %p214, %p215
    %p217 = scmp.ne.s32.totalorder %s205, %s206
    %p218 = scmp.eq.s32.totalorder %s33, 2
    %p219 = por %p217, %p218
    %p221 = scmp.ne.s32.totalorder %s206, %s220
    %p222 = scmp.eq.s32.totalorder %s33, 0
    %p223 = por %p221, %p222
    %s224 = ssub.s32 %s27, %s34
    %p225 = scmp.eq.s32.totalorder %s224, 0
    %s227 = sadd.s32 %s226, 1
    %s228 = scalar_select %p225, %s226, %s227
    %p231 = pneg %p225
    %p232 = scmp.eq.s32.totalorder %s27, 2
    %p233 = por %p231, %p232
    %p234 = scmp.ne.s32.totalorder %s226, %s229
    %p235 = scmp.eq.s32.totalorder %s27, 0
    %p236 = por %p234, %p235
    %p237 = scmp.ne.s32.totalorder %s226, %s229
    %p238 = scmp.eq.s32.totalorder %s32, 2
    %p239 = por %p237, %p238
    %p240 = scmp.ne.s32.totalorder %s229, %s230
    %p241 = scmp.eq.s32.totalorder %s32, 0
    %p242 = por %p240, %p241
    %p243 = scmp.ne.s32.totalorder %s229, %s230
    %p244 = scmp.eq.s32.totalorder %s33, 2
    %p245 = por %p243, %p244
    %p247 = scmp.ne.s32.totalorder %s230, %s246
    %p248 = scmp.eq.s32.totalorder %s33, 0
    %p249 = por %p247, %p248
    %s250 = ssub.s32 %s27, %s34
    %p251 = scmp.eq.s32.totalorder %s250, 0
    %s253 = sadd.s32 %s252, 1
    %s254 = scalar_select %p251, %s252, %s253
    %p257 = pneg %p251
    %p258 = scmp.eq.s32.totalorder %s27, 2
    %p259 = por %p257, %p258
    %p260 = scmp.ne.s32.totalorder %s252, %s255
    %p261 = scmp.eq.s32.totalorder %s27, 0
    %p262 = por %p260, %p261
    %p263 = scmp.ne.s32.totalorder %s252, %s255
    %p264 = scmp.eq.s32.totalorder %s32, 2
    %p265 = por %p263, %p264
    %p266 = scmp.ne.s32.totalorder %s255, %s256
    %p267 = scmp.eq.s32.totalorder %s32, 0
    %p268 = por %p266, %p267
    %p269 = scmp.ne.s32.totalorder %s255, %s256
    %p270 = scmp.eq.s32.totalorder %s33, 2
    %p271 = por %p269, %p270
    %p273 = scmp.ne.s32.totalorder %s256, %s272
    %p274 = scmp.eq.s32.totalorder %s33, 0
    %p275 = por %p273, %p274
    %s276 = ssub.s32 %s27, %s34
    %p277 = scmp.eq.s32.totalorder %s276, 0
    %s279 = sadd.s32 %s278, 1
    %s280 = scalar_select %p277, %s278, %s279
    %p283 = pneg %p277
    %p284 = scmp.eq.s32.totalorder %s27, 2
    %p285 = por %p283, %p284
    %p286 = scmp.ne.s32.totalorder %s278, %s281
    %p287 = scmp.eq.s32.totalorder %s27, 0
    %p288 = por %p286, %p287
    %p289 = scmp.ne.s32.totalorder %s278, %s281
    %p290 = scmp.eq.s32.totalorder %s32, 2
    %p291 = por %p289, %p290
    %p292 = scmp.ne.s32.totalorder %s281, %s282
    %p293 = scmp.eq.s32.totalorder %s32, 0
    %p294 = por %p292, %p293
    %p295 = scmp.ne.s32.totalorder %s281, %s282
    %p296 = scmp.eq.s32.totalorder %s33, 2
    %p297 = por %p295, %p296
    %p299 = scmp.ne.s32.totalorder %s282, %s298
    %p300 = scmp.eq.s32.totalorder %s33, 0
    %p301 = por %p299, %p300
    %s302 = ssub.s32 %s27, %s34
    %p303 = scmp.eq.s32.totalorder %s302, 0
    %s305 = sadd.s32 %s304, 1
    %s306 = scalar_select %p303, %s304, %s305
    %p309 = pneg %p303
    %p310 = scmp.eq.s32.totalorder %s27, 2
    %p311 = por %p309, %p310
    %p312 = scmp.ne.s32.totalorder %s304, %s307
    %p313 = scmp.eq.s32.totalorder %s27, 0
    %p314 = por %p312, %p313
    %p315 = scmp.ne.s32.totalorder %s304, %s307
    %p316 = scmp.eq.s32.totalorder %s32, 2
    %p317 = por %p315, %p316
    %p318 = scmp.ne.s32.totalorder %s307, %s308
    %p319 = scmp.eq.s32.totalorder %s32, 0
    %p320 = por %p318, %p319
    %p321 = scmp.ne.s32.totalorder %s307, %s308
    %p322 = scmp.eq.s32.totalorder %s33, 2
    %p323 = por %p321, %p322
    %p325 = scmp.ne.s32.totalorder %s308, %s324
    %p326 = scmp.eq.s32.totalorder %s33, 0
    %p327 = por %p325, %p326
    %s328 = ssub.s32 %s27, %s34
    %p329 = scmp.eq.s32.totalorder %s328, 0
    %s331 = sadd.s32 %s330, 1
    %s332 = scalar_select %p329, %s330, %s331
    %p335 = pneg %p329
    %p336 = scmp.eq.s32.totalorder %s27, 2
    %p337 = por %p335, %p336
    %p338 = scmp.ne.s32.totalorder %s330, %s333
    %p339 = scmp.eq.s32.totalorder %s27, 0
    %p340 = por %p338, %p339
    %p341 = scmp.ne.s32.totalorder %s330, %s333
    %p342 = scmp.eq.s32.totalorder %s32, 2
    %p343 = por %p341, %p342
    %p344 = scmp.ne.s32.totalorder %s333, %s334
    %p345 = scmp.eq.s32.totalorder %s32, 0
    %p346 = por %p344, %p345
    %p347 = scmp.ne.s32.totalorder %s333, %s334
    %p348 = scmp.eq.s32.totalorder %s33, 2
    %p349 = por %p347, %p348
    %p351 = scmp.ne.s32.totalorder %s334, %s350
    %p352 = scmp.eq.s32.totalorder %s33, 0
    %p353 = por %p351, %p352
    %s354 = ssub.s32 %s27, %s34
    %p355 = scmp.eq.s32.totalorder %s354, 0
    %s357 = sadd.s32 %s356, 1
    %s358 = scalar_select %p355, %s356, %s357
    %p361 = pneg %p355
    %p362 = scmp.eq.s32.totalorder %s27, 2
    %p363 = por %p361, %p362
    %p364 = scmp.ne.s32.totalorder %s356, %s359
    %p365 = scmp.eq.s32.totalorder %s27, 0
    %p366 = por %p364, %p365
    %p367 = scmp.ne.s32.totalorder %s356, %s359
    %p368 = scmp.eq.s32.totalorder %s32, 2
    %p369 = por %p367, %p368
    %p370 = scmp.ne.s32.totalorder %s359, %s360
    %p371 = scmp.eq.s32.totalorder %s32, 0
    %p372 = por %p370, %p371
    %p373 = scmp.ne.s32.totalorder %s359, %s360
    %p374 = scmp.eq.s32.totalorder %s33, 2
    %p375 = por %p373, %p374
    %p377 = scmp.ne.s32.totalorder %s360, %s376
    %p378 = scmp.eq.s32.totalorder %s33, 0
    %p379 = por %p377, %p378
    %s381 = sadd.s32 %s380, 1
    %p384 = scmp.eq.s32.totalorder %s27, 2
    %p385 = scmp.ne.s32.totalorder %s380, %s382
    %p386 = scmp.eq.s32.totalorder %s27, 0
    %p387 = por %p385, %p386
    %p388 = scmp.ne.s32.totalorder %s380, %s382
    %p389 = scmp.eq.s32.totalorder %s32, 2
    %p390 = por %p388, %p389
    %p391 = scmp.ne.s32.totalorder %s382, %s383
    %p392 = scmp.eq.s32.totalorder %s32, 0
    %p393 = por %p391, %p392
    %p394 = scmp.ne.s32.totalorder %s382, %s383
    %p395 = scmp.eq.s32.totalorder %s33, 2
    %p396 = por %p394, %p395
    %p398 = scmp.ne.s32.totalorder %s383, %s397
    %p399 = scmp.eq.s32.totalorder %s33, 0
    %p400 = por %p398, %p399
    %s402 = sadd.s32 %s401, 1
    %p405 = scmp.eq.s32.totalorder %s27, 2
    %p406 = scmp.ne.s32.totalorder %s401, %s403
    %p407 = scmp.eq.s32.totalorder %s27, 0
    %p408 = por %p406, %p407
    %p409 = scmp.ne.s32.totalorder %s401, %s403
    %p410 = scmp.eq.s32.totalorder %s32, 2
    %p411 = por %p409, %p410
    %p412 = scmp.ne.s32.totalorder %s403, %s404
    %p413 = scmp.eq.s32.totalorder %s32, 0
    %p414 = por %p412, %p413
    %p415 = scmp.ne.s32.totalorder %s403, %s404
    %p416 = scmp.eq.s32.totalorder %s33, 2
    %p417 = por %p415, %p416
    %p419 = scmp.ne.s32.totalorder %s404, %s418
    %p420 = scmp.eq.s32.totalorder %s33, 0
    %p421 = por %p419, %p420
    %s423 = sadd.s32 %s422, 1
    %p426 = scmp.eq.s32.totalorder %s27, 2
    %p427 = scmp.ne.s32.totalorder %s422, %s424
    %p428 = scmp.eq.s32.totalorder %s27, 0
    %p429 = por %p427, %p428
    %p430 = scmp.ne.s32.totalorder %s422, %s424
    %p431 = scmp.eq.s32.totalorder %s32, 2
    %p432 = por %p430, %p431
    %p433 = scmp.ne.s32.totalorder %s424, %s425
    %p434 = scmp.eq.s32.totalorder %s32, 0
    %p435 = por %p433, %p434
    %p436 = scmp.ne.s32.totalorder %s424, %s425
    %p437 = scmp.eq.s32.totalorder %s33, 2
    %p438 = por %p436, %p437
    %p440 = scmp.ne.s32.totalorder %s425, %s439
    %p441 = scmp.eq.s32.totalorder %s33, 0
    %p442 = por %p440, %p441
    %s444 = sadd.s32 %s443, 1
    %p447 = scmp.eq.s32.totalorder %s27, 2
    %p448 = scmp.ne.s32.totalorder %s443, %s445
    %p449 = scmp.eq.s32.totalorder %s27, 0
    %p450 = por %p448, %p449
    %p451 = scmp.ne.s32.totalorder %s443, %s445
    %p452 = scmp.eq.s32.totalorder %s32, 2
    %p453 = por %p451, %p452
    %p454 = scmp.ne.s32.totalorder %s445, %s446
    %p455 = scmp.eq.s32.totalorder %s32, 0
    %p456 = por %p454, %p455
    %p457 = scmp.ne.s32.totalorder %s445, %s446
    %p458 = scmp.eq.s32.totalorder %s33, 2
    %p459 = por %p457, %p458
    %p461 = scmp.ne.s32.totalorder %s446, %s460
    %p462 = scmp.eq.s32.totalorder %s33, 0
    %p463 = por %p461, %p462
    %s465 = sadd.s32 %s464, 1
    %p468 = scmp.eq.s32.totalorder %s27, 2
    %p469 = scmp.ne.s32.totalorder %s464, %s466
    %p470 = scmp.eq.s32.totalorder %s27, 0
    %p471 = por %p469, %p470
    %p472 = scmp.ne.s32.totalorder %s464, %s466
    %p473 = scmp.eq.s32.totalorder %s32, 2
    %p474 = por %p472, %p473
    %p475 = scmp.ne.s32.totalorder %s466, %s467
    %p476 = scmp.eq.s32.totalorder %s32, 0
    %p477 = por %p475, %p476
    %p478 = scmp.ne.s32.totalorder %s466, %s467
    %p479 = scmp.eq.s32.totalorder %s33, 2
    %p480 = por %p478, %p479
    %p482 = scmp.ne.s32.totalorder %s467, %s481
    %p483 = scmp.eq.s32.totalorder %s33, 0
    %p484 = por %p482, %p483
    %s486 = sadd.s32 %s485, 1
    %p489 = scmp.eq.s32.totalorder %s27, 2
    %p490 = scmp.ne.s32.totalorder %s485, %s487
    %p491 = scmp.eq.s32.totalorder %s27, 0
    %p492 = por %p490, %p491
    %p493 = scmp.ne.s32.totalorder %s485, %s487
    %p494 = scmp.eq.s32.totalorder %s32, 2
    %p495 = por %p493, %p494
    %p496 = scmp.ne.s32.totalorder %s487, %s488
    %p497 = scmp.eq.s32.totalorder %s32, 0
    %p498 = por %p496, %p497
    %p499 = scmp.ne.s32.totalorder %s487, %s488
    %p500 = scmp.eq.s32.totalorder %s33, 2
    %p501 = por %p499, %p500
    %p503 = scmp.ne.s32.totalorder %s488, %s502
    %p504 = scmp.eq.s32.totalorder %s33, 0
    %p505 = por %p503, %p504
    %s507 = sadd.s32 %s506, 1
    %p510 = scmp.eq.s32.totalorder %s27, 2
    %p511 = scmp.ne.s32.totalorder %s506, %s508
    %p512 = scmp.eq.s32.totalorder %s27, 0
    %p513 = por %p511, %p512
    %p514 = scmp.ne.s32.totalorder %s506, %s508
    %p515 = scmp.eq.s32.totalorder %s32, 2
    %p516 = por %p514, %p515
    %p517 = scmp.ne.s32.totalorder %s508, %s509
    %p518 = scmp.eq.s32.totalorder %s32, 0
    %p519 = por %p517, %p518
    %p520 = scmp.ne.s32.totalorder %s508, %s509
    %p521 = scmp.eq.s32.totalorder %s33, 2
    %p522 = por %p520, %p521
    %p524 = scmp.ne.s32.totalorder %s509, %s523
    %p525 = scmp.eq.s32.totalorder %s33, 0
    %p526 = por %p524, %p525
    %p527 = scmp.le.s32.totalorder 1, %s27
    %p528 = scmp.lt.s32.totalorder %s27, 4
    %p529 = pnand %p527, %p528
    %p530 = pneg %p529
    // Predicated region
    $region9: #{npde_gnn_forward.1} parent=5 // pred_check
      _
    $region10: #{npde_gnn_forward.1} parent=5 // pred_check_branch
      %532 = sbr.rel (%p529) target = $region12
    $region11: #{npde_gnn_forward.1} parent=5 // pred_region
      %s533 = ssub.s32 %s27, 1
      // Predicated region
      $region13: #{npde_gnn_forward.1} parent=11 // pred_check
        %p534 = pneg %p48
      $region14: #{npde_gnn_forward.1} parent=11 // pred_check_branch
        %536 = sbr.rel (%p534) target = $region16
      $region15: #{npde_gnn_forward.1} parent=11 // pred_region
        _
      $region16: #{npde_gnn_forward.1} parent=11 // pred_fallthru
        _
      // Predicated region
      $region17: #{npde_gnn_forward.1} parent=11 // pred_check
        %p537 = pneg %p69
      $region18: #{npde_gnn_forward.1} parent=11 // pred_check_branch
        %539 = sbr.rel (%p537) target = $region20
      $region19: #{npde_gnn_forward.1} parent=11 // pred_region
        _
      $region20: #{npde_gnn_forward.1} parent=11 // pred_fallthru
        _
      // Predicated region
      $region21: #{npde_gnn_forward.1} parent=11 // pred_check
        %p540 = pneg %p90
      $region22: #{npde_gnn_forward.1} parent=11 // pred_check_branch
        %542 = sbr.rel (%p540) target = $region24
      $region23: #{npde_gnn_forward.1} parent=11 // pred_region
        _
      $region24: #{npde_gnn_forward.1} parent=11 // pred_fallthru
        _
      // Predicated region
      $region25: #{npde_gnn_forward.1} parent=11 // pred_check
        %p543 = pneg %p111
      $region26: #{npde_gnn_forward.1} parent=11 // pred_check_branch
        %545 = sbr.rel (%p543) target = $region28
      $region27: #{npde_gnn_forward.1} parent=11 // pred_region
        _
      $region28: #{npde_gnn_forward.1} parent=11 // pred_fallthru
        _
      // Predicated region
      $region29: #{npde_gnn_forward.1} parent=11 // pred_check
        %p546 = pneg %p132
      $region30: #{npde_gnn_forward.1} parent=11 // pred_check_branch
        %548 = sbr.rel (%p546) target = $region32
      $region31: #{npde_gnn_forward.1} parent=11 // pred_region
        _
      $region32: #{npde_gnn_forward.1} parent=11 // pred_fallthru
        _
      // Predicated region
      $region33: #{npde_gnn_forward.1} parent=11 // pred_check
        %p549 = pneg %p153
      $region34: #{npde_gnn_forward.1} parent=11 // pred_check_branch
        %551 = sbr.rel (%p549) target = $region36
      $region35: #{npde_gnn_forward.1} parent=11 // pred_region
        _
      $region36: #{npde_gnn_forward.1} parent=11 // pred_fallthru
        _
      // Predicated region
      $region37: #{npde_gnn_forward.1} parent=11 // pred_check
        %p552 = pneg %p174
      $region38: #{npde_gnn_forward.1} parent=11 // pred_check_branch
        %554 = sbr.rel (%p552) target = $region40
      $region39: #{npde_gnn_forward.1} parent=11 // pred_region
        _
      $region40: #{npde_gnn_forward.1} parent=11 // pred_fallthru
        _
      // Predicated region
      $region41: #{npde_gnn_forward.1} parent=11 // pred_check
        %p555 = pneg %p195
      $region42: #{npde_gnn_forward.1} parent=11 // pred_check_branch
        %557 = sbr.rel (%p555) target = $region44
      $region43: #{npde_gnn_forward.1} parent=11 // pred_region
        _
      $region44: #{npde_gnn_forward.1} parent=11 // pred_fallthru
        _
      // Predicated region
      $region45: #{npde_gnn_forward.1} parent=11 // pred_check
        %p558 = pneg %p216
      $region46: #{npde_gnn_forward.1} parent=11 // pred_check_branch
        %560 = sbr.rel (%p558) target = $region48
      $region47: #{npde_gnn_forward.1} parent=11 // pred_region
        _
      $region48: #{npde_gnn_forward.1} parent=11 // pred_fallthru
        _
      // Predicated region
      $region49: #{npde_gnn_forward.1} parent=11 // pred_check
        %p561 = pneg %p393
      $region50: #{npde_gnn_forward.1} parent=11 // pred_check_branch
        %563 = sbr.rel (%p561) target = $region52
      $region51: #{npde_gnn_forward.1} parent=11 // pred_region
        _
      $region52: #{npde_gnn_forward.1} parent=11 // pred_fallthru
        _
      // Predicated region
      $region53: #{npde_gnn_forward.1} parent=11 // pred_check
        %p564 = pneg %p414
      $region54: #{npde_gnn_forward.1} parent=11 // pred_check_branch
        %566 = sbr.rel (%p564) target = $region56
      $region55: #{npde_gnn_forward.1} parent=11 // pred_region
        _
      $region56: #{npde_gnn_forward.1} parent=11 // pred_fallthru
        _
      // Predicated region
      $region57: #{npde_gnn_forward.1} parent=11 // pred_check
        %p567 = pneg %p435
      $region58: #{npde_gnn_forward.1} parent=11 // pred_check_branch
        %569 = sbr.rel (%p567) target = $region60
      $region59: #{npde_gnn_forward.1} parent=11 // pred_region
        _
      $region60: #{npde_gnn_forward.1} parent=11 // pred_fallthru
        _
      // Predicated region
      $region61: #{npde_gnn_forward.1} parent=11 // pred_check
        %p570 = pneg %p456
      $region62: #{npde_gnn_forward.1} parent=11 // pred_check_branch
        %572 = sbr.rel (%p570) target = $region64
      $region63: #{npde_gnn_forward.1} parent=11 // pred_region
        _
      $region64: #{npde_gnn_forward.1} parent=11 // pred_fallthru
        _
      // Predicated region
      $region65: #{npde_gnn_forward.1} parent=11 // pred_check
        %p573 = pneg %p477
      $region66: #{npde_gnn_forward.1} parent=11 // pred_check_branch
        %575 = sbr.rel (%p573) target = $region68
      $region67: #{npde_gnn_forward.1} parent=11 // pred_region
        _
      $region68: #{npde_gnn_forward.1} parent=11 // pred_fallthru
        _
      // Predicated region
      $region69: #{npde_gnn_forward.1} parent=11 // pred_check
        %p576 = pneg %p498
      $region70: #{npde_gnn_forward.1} parent=11 // pred_check_branch
        %578 = sbr.rel (%p576) target = $region72
      $region71: #{npde_gnn_forward.1} parent=11 // pred_region
        _
      $region72: #{npde_gnn_forward.1} parent=11 // pred_fallthru
        _
    $region12: #{npde_gnn_forward.1} parent=5 // pred_fallthru
      _
    %p579 = scmp.lt.s32.totalorder %s27, 3
    // Predicated region
    $region73: #{npde_gnn_forward.1} parent=5 // pred_check
      %p580 = pneg %p579
    $region74: #{npde_gnn_forward.1} parent=5 // pred_check_branch
      %582 = sbr.rel (%p580) target = $region76
    $region75: #{npde_gnn_forward.1} parent=5 // pred_region
      // Predicated region
      $region77: #{npde_gnn_forward.1} parent=75 // pred_check
        %p583 = pneg %p236
      $region78: #{npde_gnn_forward.1} parent=75 // pred_check_branch
        %585 = sbr.rel (%p583) target = $region80
      $region79: #{npde_gnn_forward.1} parent=75 // pred_region
        %p586 = scmp.lt.s32.totalorder %s27, 2
        %s587 = scalar_select %p586, %s27, 2
        %s588 = smul.addr %s587, 32
        %s589 = smul.addr %s588, 4
        %s590 = scalar_lea.vmem %s9, %s589
      $region80: #{npde_gnn_forward.1} parent=75 // pred_fallthru
        _
      // Predicated region
      $region81: #{npde_gnn_forward.1} parent=75 // pred_check
        %p591 = pneg %p262
      $region82: #{npde_gnn_forward.1} parent=75 // pred_check_branch
        %593 = sbr.rel (%p591) target = $region84
      $region83: #{npde_gnn_forward.1} parent=75 // pred_region
        %p594 = scmp.lt.s32.totalorder %s27, 2
        %s595 = scalar_select %p594, %s27, 2
        %s596 = smul.addr %s595, 4
        %s597 = scalar_lea.vmem %s10, %s596
      $region84: #{npde_gnn_forward.1} parent=75 // pred_fallthru
        _
      // Predicated region
      $region85: #{npde_gnn_forward.1} parent=75 // pred_check
        %p598 = pneg %p288
      $region86: #{npde_gnn_forward.1} parent=75 // pred_check_branch
        %600 = sbr.rel (%p598) target = $region88
      $region87: #{npde_gnn_forward.1} parent=75 // pred_region
        %p601 = scmp.lt.s32.totalorder %s27, 2
        %s602 = scalar_select %p601, %s27, 2
        %s603 = smul.addr %s602, 16
        %s604 = smul.addr %s603, 4
        %s605 = scalar_lea.vmem %s11, %s604
      $region88: #{npde_gnn_forward.1} parent=75 // pred_fallthru
        _
      // Predicated region
      $region89: #{npde_gnn_forward.1} parent=75 // pred_check
        %p606 = pneg %p314
      $region90: #{npde_gnn_forward.1} parent=75 // pred_check_branch
        %608 = sbr.rel (%p606) target = $region92
      $region91: #{npde_gnn_forward.1} parent=75 // pred_region
        %p609 = scmp.lt.s32.totalorder %s27, 2
        %s610 = scalar_select %p609, %s27, 2
        %s611 = smul.addr %s610, 32
        %s612 = smul.addr %s611, 4
        %s613 = scalar_lea.vmem %s12, %s612
      $region92: #{npde_gnn_forward.1} parent=75 // pred_fallthru
        _
      // Predicated region
      $region93: #{npde_gnn_forward.1} parent=75 // pred_check
        %p614 = pneg %p340
      $region94: #{npde_gnn_forward.1} parent=75 // pred_check_branch
        %616 = sbr.rel (%p614) target = $region96
      $region95: #{npde_gnn_forward.1} parent=75 // pred_region
        %p617 = scmp.lt.s32.totalorder %s27, 2
        %s618 = scalar_select %p617, %s27, 2
        %s619 = smul.addr %s618, 16
        %s620 = smul.addr %s619, 4
        %s621 = scalar_lea.vmem %s13, %s620
      $region96: #{npde_gnn_forward.1} parent=75 // pred_fallthru
        _
      // Predicated region
      $region97: #{npde_gnn_forward.1} parent=75 // pred_check
        %p622 = pneg %p366
      $region98: #{npde_gnn_forward.1} parent=75 // pred_check_branch
        %624 = sbr.rel (%p622) target = $region100
      $region99: #{npde_gnn_forward.1} parent=75 // pred_region
        %p625 = scmp.lt.s32.totalorder %s27, 2
        %s626 = scalar_select %p625, %s27, 2
        %s627 = smul.addr %s626, 8
        %s628 = scalar_lea.vmem %s14, %s627
      $region100: #{npde_gnn_forward.1} parent=75 // pred_fallthru
        _
    $region76: #{npde_gnn_forward.1} parent=5 // pred_fallthru
      _
    %p629 = scmp.le.s32.totalorder 1, %s27
    %p630 = scmp.lt.s32.totalorder %s27, 4
    %p631 = pnand %p629, %p630
    %p632 = pneg %p631
    // Predicated region
    $region101: #{npde_gnn_forward.1} parent=5 // pred_check
      _
    $region102: #{npde_gnn_forward.1} parent=5 // pred_check_branch
      %634 = sbr.rel (%p631) target = $region104
    $region103: #{npde_gnn_forward.1} parent=5 // pred_region
      %s635 = ssub.s32 %s27, 1
      %p636 = pneg %p48
      %p637 = pneg %p45
      %p638 = pneg %p69
      %p639 = pneg %p66
      %p640 = pneg %p90
      %p641 = pneg %p87
      %p642 = pneg %p111
      %p643 = pneg %p108
      %p644 = pneg %p132
      %p645 = pneg %p129
      %p646 = pneg %p153
      %p647 = pneg %p150
      %p648 = pneg %p174
      %p649 = pneg %p171
      %p650 = pneg %p195
      %p651 = pneg %p192
      %p652 = pneg %p216
      %p653 = pneg %p213
      %p654 = scmp.lt.s32.totalorder %s32, 2
      %s655 = scalar_select %p654, %s32, 2
      %s656 = smul.addr %s655, 32
      %s657 = smul.addr %s656, 4
      %s658 = scalar_lea.vmem %s9, %s657
      %p659 = pneg %p242
      %p660 = pneg %p239
      %p661 = scmp.lt.s32.totalorder %s32, 2
      %s662 = scalar_select %p661, %s32, 2
      %s663 = smul.addr %s662, 4
      %s664 = scalar_lea.vmem %s10, %s663
      %p665 = pneg %p268
      %p666 = pneg %p265
      %p667 = scmp.lt.s32.totalorder %s32, 2
      %s668 = scalar_select %p667, %s32, 2
      %s669 = smul.addr %s668, 16
      %s670 = smul.addr %s669, 4
      %s671 = scalar_lea.vmem %s11, %s670
      %p672 = pneg %p294
      %p673 = pneg %p291
      %p674 = scmp.lt.s32.totalorder %s32, 2
      %s675 = scalar_select %p674, %s32, 2
      %s676 = smul.addr %s675, 32
      %s677 = smul.addr %s676, 4
      %s678 = scalar_lea.vmem %s12, %s677
      %p679 = pneg %p320
      %p680 = pneg %p317
      %p681 = scmp.lt.s32.totalorder %s32, 2
      %s682 = scalar_select %p681, %s32, 2
      %s683 = smul.addr %s682, 16
      %s684 = smul.addr %s683, 4
      %s685 = scalar_lea.vmem %s13, %s684
      %p686 = pneg %p346
      %p687 = pneg %p343
      %p688 = scmp.lt.s32.totalorder %s32, 2
      %s689 = scalar_select %p688, %s32, 2
      %s690 = smul.addr %s689, 8
      %s691 = scalar_lea.vmem %s14, %s690
      %p692 = pneg %p372
      %p693 = pneg %p369
      %p694 = pneg %p393
      %p695 = pneg %p390
      %p696 = pneg %p414
      %p697 = pneg %p411
      %p698 = pneg %p435
      %p699 = pneg %p432
      %p700 = pneg %p456
      %p701 = pneg %p453
      %p702 = pneg %p477
      %p703 = pneg %p474
      %p704 = pneg %p498
      %p705 = pneg %p495
      %p706 = pneg %p519
      %p707 = pneg %p516
      %p708 = scmp.lt.s32.totalorder %s32, 2
      %s709 = scalar_select %p708, %s32, 2
      %s710 = smul.addr %s709, 32
      %s711 = smul.addr %s710, 4
      %s712 = scalar_lea.vmem %s9, %s711
      %p713 = scmp.lt.s32.totalorder %s32, 2
      %s714 = scalar_select %p713, %s32, 2
      %s715 = smul.addr %s714, 4
      %s716 = scalar_lea.vmem %s10, %s715
      %p717 = scmp.lt.s32.totalorder %s32, 2
      %s718 = scalar_select %p717, %s32, 2
      %s719 = smul.addr %s718, 16
      %s720 = smul.addr %s719, 4
      %s721 = scalar_lea.vmem %s11, %s720
      %p722 = scmp.lt.s32.totalorder %s32, 2
      %s723 = scalar_select %p722, %s32, 2
      %s724 = smul.addr %s723, 32
      %s725 = smul.addr %s724, 4
      %s726 = scalar_lea.vmem %s12, %s725
      %p727 = scmp.lt.s32.totalorder %s32, 2
      %s728 = scalar_select %p727, %s32, 2
      %s729 = smul.addr %s728, 16
      %s730 = smul.addr %s729, 4
      %s731 = scalar_lea.vmem %s13, %s730
      %p732 = scmp.lt.s32.totalorder %s32, 2
      %s733 = scalar_select %p732, %s32, 2
      %s734 = smul.addr %s733, 8
      %s735 = scalar_lea.vmem %s14, %s734
      %p737 = scmp.eq.s32.totalorder %s32, 0
      // Predicated region
      $region105: #{npde_gnn_forward.1} parent=103 // pred_check
        %p738 = pneg %p737
      $region106: #{npde_gnn_forward.1} parent=103 // pred_check_branch
        %740 = sbr.rel (%p738) target = $region108
      $region107: #{npde_gnn_forward.1} parent=103 // pred_region
        %v741 = vld [vmem:[%s0] sm:$0xff]
        %v742 = vld [vmem:[%s0 + $0x8] sm:$0xff]
        %v743 = vld [vmem:[%s0 + $0x10] sm:$0xff]
        %v744 = vld [vmem:[%s0 + $0x18] sm:$0xff]
        %v745 = vld [vmem:[%s0 + $0x20] sm:$0xff]
        %v746 = vld [vmem:[%s0 + $0x28] sm:$0xff]
        %v747 = vld [vmem:[%s0 + $0x30] sm:$0xff]
        %v748 = vld [vmem:[%s0 + $0x38] sm:$0xff]
        %v749 = vld [vmem:[%s1] sm:$0xf]
        %v750 = vpack.c.bf16 %v742, %v741
        %v751 = vpack.c.bf16 %v744, %v743
        %v752 = vpack.c.bf16 %v746, %v745
        %v753 = vpack.c.bf16 %v748, %v747
        %v754 = vld [vmem:[%s3] sm:$0x1]
        %v755 = vlaneseq
        %v756 = vshrl.u32 %v755, 7
        %v757 = vsub.s32 0, %v756
        %v758 = vrot.slane %v754, %v757
        %vm759 = vcmask 64512
        %v761 = vsel %vm759, %v750, 0
        %v764 = vsel %vm759, %v751, 0
        %v767 = vsel %vm759, %v752, 0
        %v770 = vsel %vm759, %v753, 0
        %vm772 = vcmask 1043456
        %v774 = vsel %vm772, %v749, 0
        %776 = vmatprep.subr.bf16.mxu0 0
        %777 = vmatpush1.bf16.msra.mxu0 %v774
        %778 = vmatprep.subr.bf16.mxu0 0
        %779 = vmatpush1.bf16.msra.mxu0 0
        %780 = vmatprep.subr.bf16.mxu0 0
        %781 = vmatpush1.bf16.msra.mxu0 0
        %782 = vmatprep.subr.bf16.mxu0 0
        %783 = vmatpush1.bf16.msra.mxu0 0
        %784 = vmatprep.subr.bf16.mxu0 0
        %785 = vmatpush1.bf16.msra.mxu0 0
        %786 = vmatprep.subr.bf16.mxu0 0
        %787 = vmatpush1.bf16.msra.mxu0 0
        %788 = vmatprep.subr.bf16.mxu0 0
        %789 = vmatpush1.bf16.msra.mxu0 0
        %790 = vmatprep.subr.bf16.mxu0 0
        %791 = vmatpush1.bf16.msra.mxu0 0
        %792 = vmatprep.subr.bf16.mxu0 0
        %793 = vmatpush1.bf16.msra.mxu0 0
        %794 = vmatprep.subr.bf16.mxu0 0
        %795 = vmatpush1.bf16.msra.mxu0 0
        %796 = vmatprep.subr.bf16.mxu0 0
        %797 = vmatpush1.bf16.msra.mxu0 0
        %798 = vmatprep.subr.bf16.mxu0 0
        %799 = vmatpush1.bf16.msra.mxu0 0
        %800 = vmatprep.subr.bf16.mxu0 0
        %801 = vmatpush1.bf16.msra.mxu0 0
        %802 = vmatprep.subr.bf16.mxu0 0
        %803 = vmatpush1.bf16.msra.mxu0 0
        %804 = vmatprep.subr.bf16.mxu0 0
        %805 = vmatpush1.bf16.msra.mxu0 0
        %806 = vmatprep.subr.bf16.mxu0 0
        %807 = vmatpush1.bf16.msra.mxu0 0
        %808 = vmatprep.mubr.bf16.mxu0 0
        %809 = vmatmul.mubr.bf16.gmra.mrb[0].mxu0 %v761
        %v810 = vpop.f32.mrb[0].mxu0
        %v811 = vadd.f32 %v758, %v810
        %v812 = vpop.f32.mrb[0].mxu0
        %v813 = vpop.f32.mrb[0].mxu0
        %v814 = vadd.f32 %v758, %v813
        %v815 = vpop.f32.mrb[0].mxu0
        %816 = vmatprep.mubr.bf16.mxu0 0
        %817 = vmatmul.mubr.bf16.gmra.mrb[0].mxu0 %v764
        %v818 = vpop.f32.mrb[0].mxu0
        %v819 = vadd.f32 %v758, %v818
        %v820 = vpop.f32.mrb[0].mxu0
        %v821 = vpop.f32.mrb[0].mxu0
        %v822 = vadd.f32 %v758, %v821
        %v823 = vpop.f32.mrb[0].mxu0
        %824 = vmatprep.mubr.bf16.mxu0 0
        %825 = vmatmul.mubr.bf16.gmra.mrb[0].mxu0 %v767
        %v826 = vpop.f32.mrb[0].mxu0
        %v827 = vadd.f32 %v758, %v826
        %v828 = vpop.f32.mrb[0].mxu0
        %v829 = vpop.f32.mrb[0].mxu0
        %v830 = vadd.f32 %v758, %v829
        %v831 = vpop.f32.mrb[0].mxu0
        %832 = vmatprep.mubr.bf16.mxu0 0
        %833 = vmatmul.mubr.bf16.gmra.mrb[0].mxu0 %v770
        %v834 = vpop.f32.mrb[0].mxu0
        %v835 = vadd.f32 %v758, %v834
        %v836 = vpop.f32.mrb[0].mxu0
        %v837 = vpop.f32.mrb[0].mxu0
        %v838 = vadd.f32 %v758, %v837
        %v839 = vpop.f32.mrb[0].mxu0
        %840 = vdwg.mxu0
        %v841 = vld [vmem:[%s3 + $0x1] sm:$0x1]
        %v842 = vld [vmem:[%s3 + $0x2] sm:$0x1]
        %v843 = vadd.f32 %v811, %v814
        %v844 = vadd.f32 %v843, %v819
        %v845 = vadd.f32 %v844, %v822
        %v846 = vadd.f32 %v845, %v827
        %v847 = vadd.f32 %v846, %v830
        %v848 = vadd.f32 %v847, %v835
        %v849 = vadd.f32 %v848, %v838
        %v850 = vrot.slane %v849, 4
        %v851 = vadd.f32 %v849, %v850
        %v852 = vrot.slane %v851, 2
        %v853 = vadd.f32 %v851, %v852
        %v854 = vrot.slane %v853, 1
        %v855 = vadd.f32 %v853, %v854
        %v856 = vrcp.pop 64.0
        %v857 = vmul.f32 %v855, %v856
        %v858 = vsub.f32 %v811, %v857
        %v859 = vsub.f32 %v814, %v857
        %v860 = vsub.f32 %v819, %v857
        %v861 = vsub.f32 %v822, %v857
        %v862 = vsub.f32 %v827, %v857
        %v863 = vsub.f32 %v830, %v857
        %v864 = vsub.f32 %v835, %v857
        %v865 = vsub.f32 %v838, %v857
        %v866 = vmul.f32 %v858, %v858
        %v867 = vmul.f32 %v859, %v859
        %v868 = vmul.f32 %v860, %v860
        %v869 = vmul.f32 %v861, %v861
        %v870 = vmul.f32 %v862, %v862
        %v871 = vmul.f32 %v863, %v863
        %v872 = vmul.f32 %v864, %v864
        %v873 = vmul.f32 %v865, %v865
        %v874 = vadd.f32 %v866, %v867
        %v875 = vadd.f32 %v874, %v868
        %v876 = vadd.f32 %v875, %v869
        %v877 = vadd.f32 %v876, %v870
        %v878 = vadd.f32 %v877, %v871
        %v879 = vadd.f32 %v878, %v872
        %v880 = vadd.f32 %v879, %v873
        %v881 = vrot.slane %v880, 4
        %v882 = vadd.f32 %v880, %v881
        %v883 = vrot.slane %v882, 2
        %v884 = vadd.f32 %v882, %v883
        %v885 = vrot.slane %v884, 1
        %v886 = vadd.f32 %v884, %v885
        %v887 = vmul.f32 %v886, %v856
        %v888 = vadd.f32 %v887, 1e-05
        %v889 = vrsqrt.pop %v888
        %v890 = vmul.f32 %v858, %v889
        %v891 = vmul.f32 %v859, %v889
        %v892 = vmul.f32 %v860, %v889
        %v893 = vmul.f32 %v861, %v889
        %v894 = vmul.f32 %v862, %v889
        %v895 = vmul.f32 %v863, %v889
        %v896 = vmul.f32 %v864, %v889
        %v897 = vmul.f32 %v865, %v889
        %v898 = vlaneseq
        %v899 = vshrl.u32 %v898, 7
        %v900 = vsub.s32 0, %v899
        %v901 = vrot.slane %v841, %v900
        %v902 = vmul.f32 %v890, %v901
        %v903 = vmul.f32 %v891, %v901
        %v904 = vmul.f32 %v892, %v901
        %v905 = vmul.f32 %v893, %v901
        %v906 = vmul.f32 %v894, %v901
        %v907 = vmul.f32 %v895, %v901
        %v908 = vmul.f32 %v896, %v901
        %v909 = vmul.f32 %v897, %v901
        %v910 = vlaneseq
        %v911 = vshrl.u32 %v910, 7
        %v912 = vsub.s32 0, %v911
        %v913 = vrot.slane %v842, %v912
        %v914 = vadd.f32 %v902, %v913
        %v915 = vadd.f32 %v903, %v913
        %v916 = vadd.f32 %v904, %v913
        %v917 = vadd.f32 %v905, %v913
        %v918 = vadd.f32 %v906, %v913
        %v919 = vadd.f32 %v907, %v913
        %v920 = vadd.f32 %v908, %v913
        %v921 = vadd.f32 %v909, %v913
        %v922 = vmax.f32 %v914, 0.0
        %v923 = vmax.f32 %v915, 0.0
        %v924 = vmax.f32 %v916, 0.0
        %v925 = vmax.f32 %v917, 0.0
        %v926 = vmax.f32 %v918, 0.0
        %v927 = vmax.f32 %v919, 0.0
        %v928 = vmax.f32 %v920, 0.0
        %v929 = vmax.f32 %v921, 0.0
        %v930 = vld [vmem:[%s2] sm:$0xf]
        %v931 = vld [vmem:[%s2 + $0x4] sm:$0xf]
        %v932 = vld [vmem:[%s2 + $0x8] sm:$0xf]
        %v933 = vld [vmem:[%s2 + $0xc] sm:$0xf]
        %v934 = vld [vmem:[%s2 + $0x10] sm:$0xf]
        %v935 = vld [vmem:[%s2 + $0x14] sm:$0xf]
        %v936 = vld [vmem:[%s2 + $0x18] sm:$0xf]
        %v937 = vld [vmem:[%s2 + $0x1c] sm:$0xf]
        %v938 = vld [vmem:[%s2 + $0x20] sm:$0xf]
        %v939 = vld [vmem:[%s2 + $0x24] sm:$0xf]
        %v940 = vld [vmem:[%s2 + $0x28] sm:$0xf]
        %v941 = vld [vmem:[%s2 + $0x2c] sm:$0xf]
        %v942 = vld [vmem:[%s2 + $0x30] sm:$0xf]
        %v943 = vld [vmem:[%s2 + $0x34] sm:$0xf]
        %v944 = vld [vmem:[%s2 + $0x38] sm:$0xf]
        %v945 = vld [vmem:[%s2 + $0x3c] sm:$0xf]
        %v946 = vpack.c.bf16 %v923, %v922
        %v947 = vpack.c.bf16 %v925, %v924
        %v948 = vpack.c.bf16 %v927, %v926
        %v949 = vpack.c.bf16 %v929, %v928
        %v950 = vld [vmem:[%s3 + $0x3] sm:$0x1]
        %v951 = vlaneseq
        %v952 = vshrl.u32 %v951, 7
        %v953 = vsub.s32 0, %v952
        %v954 = vrot.slane %v950, %v953
        %v971 = vunpack.c.l.b16 %v930
        %v972 = vunpack.c.l.b16 %v931
        %v973 = vunpack.c.l.b16 %v932
        %v974 = vunpack.c.l.b16 %v933
        %v975 = vunpack.c.l.b16 %v934
        %v976 = vunpack.c.l.b16 %v935
        %v977 = vunpack.c.l.b16 %v936
        %v978 = vunpack.c.l.b16 %v937
        %v979 = vunpack.c.l.b16 %v938
        %v980 = vunpack.c.l.b16 %v939
        %v981 = vunpack.c.l.b16 %v940
        %v982 = vunpack.c.l.b16 %v941
        %v983 = vunpack.c.l.b16 %v942
        %v984 = vunpack.c.l.b16 %v943
        %v985 = vunpack.c.l.b16 %v944
        %v986 = vunpack.c.l.b16 %v945
        %v987 = vpack.c.b16 %v972, %v971
        %v988 = vpack.c.b16 %v974, %v973
        %v989 = vpack.c.b16 %v976, %v975
        %v990 = vpack.c.b16 %v978, %v977
        %v991 = vpack.c.b16 %v980, %v979
        %v992 = vpack.c.b16 %v982, %v981
        %v993 = vpack.c.b16 %v984, %v983
        %v994 = vpack.c.b16 %v986, %v985
        %1003 = vmatprep.subr.bf16.mxu0 0
        %1004 = vmatpush1.bf16.msra.mxu0 %v987
        %1005 = vmatprep.subr.bf16.mxu0 0
        %1006 = vmatpush1.bf16.msra.mxu0 %v988
        %1007 = vmatprep.subr.bf16.mxu0 0
        %1008 = vmatpush1.bf16.msra.mxu0 %v989
        %1009 = vmatprep.subr.bf16.mxu0 0
        %1010 = vmatpush1.bf16.msra.mxu0 %v990
        %1011 = vmatprep.subr.bf16.mxu0 0
        %1012 = vmatpush1.bf16.msra.mxu0 %v991
        %1013 = vmatprep.subr.bf16.mxu0 0
        %1014 = vmatpush1.bf16.msra.mxu0 %v992
        %1015 = vmatprep.subr.bf16.mxu0 0
        %1016 = vmatpush1.bf16.msra.mxu0 %v993
        %1017 = vmatprep.subr.bf16.mxu0 0
        %1018 = vmatpush1.bf16.msra.mxu0 %v994
        %1019 = vmatprep.subr.bf16.mxu0 0
        %1020 = vmatpush1.bf16.msra.mxu0 0
        %1021 = vmatprep.subr.bf16.mxu0 0
        %1022 = vmatpush1.bf16.msra.mxu0 0
        %1023 = vmatprep.subr.bf16.mxu0 0
        %1024 = vmatpush1.bf16.msra.mxu0 0
        %1025 = vmatprep.subr.bf16.mxu0 0
        %1026 = vmatpush1.bf16.msra.mxu0 0
        %1027 = vmatprep.subr.bf16.mxu0 0
        %1028 = vmatpush1.bf16.msra.mxu0 0
        %1029 = vmatprep.subr.bf16.mxu0 0
        %1030 = vmatpush1.bf16.msra.mxu0 0
        %1031 = vmatprep.subr.bf16.mxu0 0
        %1032 = vmatpush1.bf16.msra.mxu0 0
        %1033 = vmatprep.subr.bf16.mxu0 0
        %1034 = vmatpush1.bf16.msra.mxu0 0
        %1035 = vmatprep.mubr.bf16.mxu0 0
        %1036 = vmatmul.mubr.bf16.gmra.mrb[0].mxu0 %v946
        %v1037 = vpop.f32.mrb[0].mxu0
        %v1038 = vadd.f32 %v954, %v1037
        %v1039 = vpop.f32.mrb[0].mxu0
        %v1040 = vpop.f32.mrb[0].mxu0
        %v1041 = vadd.f32 %v954, %v1040
        %v1042 = vpop.f32.mrb[0].mxu0
        %1043 = vmatprep.mubr.bf16.mxu0 0
        %1044 = vmatmul.mubr.bf16.gmra.mrb[0].mxu0 %v947
        %v1045 = vpop.f32.mrb[0].mxu0
        %v1046 = vadd.f32 %v954, %v1045
        %v1047 = vpop.f32.mrb[0].mxu0
        %v1048 = vpop.f32.mrb[0].mxu0
        %v1049 = vadd.f32 %v954, %v1048
        %v1050 = vpop.f32.mrb[0].mxu0
        %1051 = vmatprep.mubr.bf16.mxu0 0
        %1052 = vmatmul.mubr.bf16.gmra.mrb[0].mxu0 %v948
        %v1053 = vpop.f32.mrb[0].mxu0
        %v1054 = vadd.f32 %v954, %v1053
        %v1055 = vpop.f32.mrb[0].mxu0
        %v1056 = vpop.f32.mrb[0].mxu0
        %v1057 = vadd.f32 %v954, %v1056
        %v1058 = vpop.f32.mrb[0].mxu0
        %1059 = vmatprep.mubr.bf16.mxu0 0
        %1060 = vmatmul.mubr.bf16.gmra.mrb[0].mxu0 %v949
        %v1061 = vpop.f32.mrb[0].mxu0
        %v1062 = vadd.f32 %v954, %v1061
        %v1063 = vpop.f32.mrb[0].mxu0
        %v1064 = vpop.f32.mrb[0].mxu0
        %v1065 = vadd.f32 %v954, %v1064
        %v1066 = vpop.f32.mrb[0].mxu0
        %1067 = vdwg.mxu0
        %v1068 = vld [vmem:[%s3 + $0x4] sm:$0x1]
        %v1069 = vld [vmem:[%s3 + $0x5] sm:$0x1]
        %v1070 = vadd.f32 %v1038, %v1041
        %v1071 = vadd.f32 %v1070, %v1046
        %v1072 = vadd.f32 %v1071, %v1049
        %v1073 = vadd.f32 %v1072, %v1054
        %v1074 = vadd.f32 %v1073, %v1057
        %v1075 = vadd.f32 %v1074, %v1062
        %v1076 = vadd.f32 %v1075, %v1065
        %v1077 = vrot.slane %v1076, 4
        %v1078 = vadd.f32 %v1076, %v1077
        %v1079 = vrot.slane %v1078, 2
        %v1080 = vadd.f32 %v1078, %v1079
        %v1081 = vrot.slane %v1080, 1
        %v1082 = vadd.f32 %v1080, %v1081
        %v1083 = vmul.f32 %v1082, %v856
        %v1084 = vsub.f32 %v1038, %v1083
        %v1085 = vsub.f32 %v1041, %v1083
        %v1086 = vsub.f32 %v1046, %v1083
        %v1087 = vsub.f32 %v1049, %v1083
        %v1088 = vsub.f32 %v1054, %v1083
        %v1089 = vsub.f32 %v1057, %v1083
        %v1090 = vsub.f32 %v1062, %v1083
        %v1091 = vsub.f32 %v1065, %v1083
        %v1092 = vmul.f32 %v1084, %v1084
        %v1093 = vmul.f32 %v1085, %v1085
        %v1094 = vmul.f32 %v1086, %v1086
        %v1095 = vmul.f32 %v1087, %v1087
        %v1096 = vmul.f32 %v1088, %v1088
        %v1097 = vmul.f32 %v1089, %v1089
        %v1098 = vmul.f32 %v1090, %v1090
        %v1099 = vmul.f32 %v1091, %v1091
        %v1100 = vadd.f32 %v1092, %v1093
        %v1101 = vadd.f32 %v1100, %v1094
        %v1102 = vadd.f32 %v1101, %v1095
        %v1103 = vadd.f32 %v1102, %v1096
        %v1104 = vadd.f32 %v1103, %v1097
        %v1105 = vadd.f32 %v1104, %v1098
        %v1106 = vadd.f32 %v1105, %v1099
        %v1107 = vrot.slane %v1106, 4
        %v1108 = vadd.f32 %v1106, %v1107
        %v1109 = vrot.slane %v1108, 2
        %v1110 = vadd.f32 %v1108, %v1109
        %v1111 = vrot.slane %v1110, 1
        %v1112 = vadd.f32 %v1110, %v1111
        %v1113 = vmul.f32 %v1112, %v856
        %v1114 = vadd.f32 %v1113, 1e-05
        %v1115 = vrsqrt.pop %v1114
        %v1116 = vmul.f32 %v1084, %v1115
        %v1117 = vmul.f32 %v1085, %v1115
        %v1118 = vmul.f32 %v1086, %v1115
        %v1119 = vmul.f32 %v1087, %v1115
        %v1120 = vmul.f32 %v1088, %v1115
        %v1121 = vmul.f32 %v1089, %v1115
        %v1122 = vmul.f32 %v1090, %v1115
        %v1123 = vmul.f32 %v1091, %v1115
        %v1124 = vlaneseq
        %v1125 = vshrl.u32 %v1124, 7
        %v1126 = vsub.s32 0, %v1125
        %v1127 = vrot.slane %v1068, %v1126
        %v1128 = vmul.f32 %v1116, %v1127
        %v1129 = vmul.f32 %v1117, %v1127
        %v1130 = vmul.f32 %v1118, %v1127
        %v1131 = vmul.f32 %v1119, %v1127
        %v1132 = vmul.f32 %v1120, %v1127
        %v1133 = vmul.f32 %v1121, %v1127
        %v1134 = vmul.f32 %v1122, %v1127
        %v1135 = vmul.f32 %v1123, %v1127
        %v1136 = vlaneseq
        %v1137 = vshrl.u32 %v1136, 7
        %v1138 = vsub.s32 0, %v1137
        %v1139 = vrot.slane %v1069, %v1138
        %v1140 = vadd.f32 %v1128, %v1139
        %v1141 = vadd.f32 %v1129, %v1139
        %v1142 = vadd.f32 %v1130, %v1139
        %v1143 = vadd.f32 %v1131, %v1139
        %v1144 = vadd.f32 %v1132, %v1139
        %v1145 = vadd.f32 %v1133, %v1139
        %v1146 = vadd.f32 %v1134, %v1139
        %v1147 = vadd.f32 %v1135, %v1139
        %1148 = vst [vmem:[#allocation2] sm:$0xff] %v1140
        %1149 = vst [vmem:[#allocation2 + $0x8] sm:$0xff] %v1141
        %1150 = vst [vmem:[#allocation2 + $0x10] sm:$0xff] %v1142
        %1151 = vst [vmem:[#allocation2 + $0x18] sm:$0xff] %v1143
        %1152 = vst [vmem:[#allocation2 + $0x20] sm:$0xff] %v1144
        %1153 = vst [vmem:[#allocation2 + $0x28] sm:$0xff] %v1145
        %1154 = vst [vmem:[#allocation2 + $0x30] sm:$0xff] %v1146
        %1155 = vst [vmem:[#allocation2 + $0x38] sm:$0xff] %v1147
        %v1156 = vlaneseq
        %v1157 = vand.u32 %v1156, 127
        %v1158 = vld [vmem:[%s5] sm:$0xff]
        %v1159 = vld [vmem:[%s5 + $0x8] sm:$0xff]
        %v1160 = vld [vmem:[%s5 + $0x10] sm:$0xff]
        %v1161 = vld [vmem:[%s5 + $0x18] sm:$0xff]
        %v1162 = vld [vmem:[%s5 + $0x20] sm:$0xff]
        %v1163 = vld [vmem:[%s5 + $0x28] sm:$0xff]
        %v1164 = vld [vmem:[%s5 + $0x30] sm:$0xff]
        %v1165 = vld [vmem:[%s5 + $0x38] sm:$0xff]
        %v1166 = vld [vmem:[%s5 + $0x40] sm:$0xff]
        %v1167 = vld [vmem:[%s5 + $0x48] sm:$0xff]
        %v1168 = vld [vmem:[%s5 + $0x50] sm:$0xff]
        %v1169 = vld [vmem:[%s5 + $0x58] sm:$0xff]
        %v1170 = vld [vmem:[%s5 + $0x60] sm:$0xff]
        %v1171 = vld [vmem:[%s5 + $0x68] sm:$0xff]
        %v1172 = vld [vmem:[%s5 + $0x70] sm:$0xff]
        %v1173 = vld [vmem:[%s5 + $0x78] sm:$0xff]
        %v1174 = vld [vmem:[%s5 + $0x80] sm:$0xff]
        %v1175 = vld [vmem:[%s5 + $0x88] sm:$0xff]
        %v1176 = vld [vmem:[%s5 + $0x90] sm:$0xff]
        %v1177 = vld [vmem:[%s5 + $0x98] sm:$0xff]
        %v1178 = vld [vmem:[%s5 + $0xa0] sm:$0xff]
        %v1179 = vld [vmem:[%s5 + $0xa8] sm:$0xff]
        %v1180 = vld [vmem:[%s5 + $0xb0] sm:$0xff]
        %v1181 = vld [vmem:[%s5 + $0xb8] sm:$0xff]
        %v1182 = vld [vmem:[%s5 + $0xc0] sm:$0xff]
        %v1183 = vld [vmem:[%s5 + $0xc8] sm:$0xff]
        %v1184 = vld [vmem:[%s5 + $0xd0] sm:$0xff]
        %v1185 = vld [vmem:[%s5 + $0xd8] sm:$0xff]
        %v1186 = vld [vmem:[%s5 + $0xe0] sm:$0xff]
        %v1187 = vld [vmem:[%s5 + $0xe8] sm:$0xff]
        %v1188 = vld [vmem:[%s5 + $0xf0] sm:$0xff]
        %v1189 = vld [vmem:[%s5 + $0xf8] sm:$0xff]
        %1190 = vset.pattern.permute.xlu0 0
        %1191 = vperm.xlu0 %1190, %v1158
        %v1192 = vpop.permute.xlu0 %1191
        %1193 = vset.pattern.permute.xlu0 0
        %1194 = vperm.xlu0 %1193, %v1159
        %v1195 = vpop.permute.xlu0 %1194
        %1196 = vset.pattern.permute.xlu0 0
        %1197 = vperm.xlu0 %1196, %v1160
        %v1198 = vpop.permute.xlu0 %1197
        %1199 = vset.pattern.permute.xlu0 0
        %1200 = vperm.xlu0 %1199, %v1161
        %v1201 = vpop.permute.xlu0 %1200
        %1202 = vset.pattern.permute.xlu0 0
        %1203 = vperm.xlu0 %1202, %v1162
        %v1204 = vpop.permute.xlu0 %1203
        %1205 = vset.pattern.permute.xlu0 0
        %1206 = vperm.xlu0 %1205, %v1163
        %v1207 = vpop.permute.xlu0 %1206
        %1208 = vset.pattern.permute.xlu0 0
        %1209 = vperm.xlu0 %1208, %v1164
        %v1210 = vpop.permute.xlu0 %1209
        %1211 = vset.pattern.permute.xlu0 0
        %1212 = vperm.xlu0 %1211, %v1165
        %v1213 = vpop.permute.xlu0 %1212
        %1214 = vset.pattern.permute.xlu0 0
        %1215 = vperm.xlu0 %1214, %v1166
        %v1216 = vpop.permute.xlu0 %1215
        %1217 = vset.pattern.permute.xlu0 0
        %1218 = vperm.xlu0 %1217, %v1167
        %v1219 = vpop.permute.xlu0 %1218
        %1220 = vset.pattern.permute.xlu0 0
        %1221 = vperm.xlu0 %1220, %v1168
        %v1222 = vpop.permute.xlu0 %1221
        %1223 = vset.pattern.permute.xlu0 0
        %1224 = vperm.xlu0 %1223, %v1169
        %v1225 = vpop.permute.xlu0 %1224
        %1226 = vset.pattern.permute.xlu0 0
        %1227 = vperm.xlu0 %1226, %v1170
        %v1228 = vpop.permute.xlu0 %1227
        %1229 = vset.pattern.permute.xlu0 0
        %1230 = vperm.xlu0 %1229, %v1171
        %v1231 = vpop.permute.xlu0 %1230
        %1232 = vset.pattern.permute.xlu0 0
        %1233 = vperm.xlu0 %1232, %v1172
        %v1234 = vpop.permute.xlu0 %1233
        %1235 = vset.pattern.permute.xlu0 0
        %1236 = vperm.xlu0 %1235, %v1173
        %v1237 = vpop.permute.xlu0 %1236
        %1238 = vset.pattern.permute.xlu0 0
        %1239 = vperm.xlu0 %1238, %v1174
        %v1240 = vpop.permute.xlu0 %1239
        %1241 = vset.pattern.permute.xlu0 0
        %1242 = vperm.xlu0 %1241, %v1175
        %v1243 = vpop.permute.xlu0 %1242
        %1244 = vset.pattern.permute.xlu0 0
        %1245 = vperm.xlu0 %1244, %v1176
        %v1246 = vpop.permute.xlu0 %1245
        %1247 = vset.pattern.permute.xlu0 0
        %1248 = vperm.xlu0 %1247, %v1177
        %v1249 = vpop.permute.xlu0 %1248
        %1250 = vset.pattern.permute.xlu0 0
        %1251 = vperm.xlu0 %1250, %v1178
        %v1252 = vpop.permute.xlu0 %1251
        %1253 = vset.pattern.permute.xlu0 0
        %1254 = vperm.xlu0 %1253, %v1179
        %v1255 = vpop.permute.xlu0 %1254
        %1256 = vset.pattern.permute.xlu0 0
        %1257 = vperm.xlu0 %1256, %v1180
        %v1258 = vpop.permute.xlu0 %1257
        %1259 = vset.pattern.permute.xlu0 0
        %1260 = vperm.xlu0 %1259, %v1181
        %v1261 = vpop.permute.xlu0 %1260
        %1262 = vset.pattern.permute.xlu0 0
        %1263 = vperm.xlu0 %1262, %v1182
        %v1264 = vpop.permute.xlu0 %1263
        %1265 = vset.pattern.permute.xlu0 0
        %1266 = vperm.xlu0 %1265, %v1183
        %v1267 = vpop.permute.xlu0 %1266
        %1268 = vset.pattern.permute.xlu0 0
        %1269 = vperm.xlu0 %1268, %v1184
        %v1270 = vpop.permute.xlu0 %1269
        %1271 = vset.pattern.permute.xlu0 0
        %1272 = vperm.xlu0 %1271, %v1185
        %v1273 = vpop.permute.xlu0 %1272
        %1274 = vset.pattern.permute.xlu0 0
        %1275 = vperm.xlu0 %1274, %v1186
        %v1276 = vpop.permute.xlu0 %1275
        %1277 = vset.pattern.permute.xlu0 0
        %1278 = vperm.xlu0 %1277, %v1187
        %v1279 = vpop.permute.xlu0 %1278
        %1280 = vset.pattern.permute.xlu0 0
        %1281 = vperm.xlu0 %1280, %v1188
        %v1282 = vpop.permute.xlu0 %1281
        %1283 = vset.pattern.permute.xlu0 0
        %1284 = vperm.xlu0 %1283, %v1189
        %v1285 = vpop.permute.xlu0 %1284
        %vm1286 = vcmp.eq.s32.totalorder %v1192, %v1157
        %vm1287 = vcmp.eq.s32.totalorder %v1195, %v1157
        %vm1288 = vcmp.eq.s32.totalorder %v1198, %v1157
        %vm1289 = vcmp.eq.s32.totalorder %v1201, %v1157
        %vm1290 = vcmp.eq.s32.totalorder %v1204, %v1157
        %vm1291 = vcmp.eq.s32.totalorder %v1207, %v1157
        %vm1292 = vcmp.eq.s32.totalorder %v1210, %v1157
        %vm1293 = vcmp.eq.s32.totalorder %v1213, %v1157
        %vm1294 = vcmp.eq.s32.totalorder %v1216, %v1157
        %vm1295 = vcmp.eq.s32.totalorder %v1219, %v1157
        %vm1296 = vcmp.eq.s32.totalorder %v1222, %v1157
        %vm1297 = vcmp.eq.s32.totalorder %v1225, %v1157
        %vm1298 = vcmp.eq.s32.totalorder %v1228, %v1157
        %vm1299 = vcmp.eq.s32.totalorder %v1231, %v1157
        %vm1300 = vcmp.eq.s32.totalorder %v1234, %v1157
        %vm1301 = vcmp.eq.s32.totalorder %v1237, %v1157
        %vm1302 = vcmp.eq.s32.totalorder %v1240, %v1157
        %vm1303 = vcmp.eq.s32.totalorder %v1243, %v1157
        %vm1304 = vcmp.eq.s32.totalorder %v1246, %v1157
        %vm1305 = vcmp.eq.s32.totalorder %v1249, %v1157
        %vm1306 = vcmp.eq.s32.totalorder %v1252, %v1157
        %vm1307 = vcmp.eq.s32.totalorder %v1255, %v1157
        %vm1308 = vcmp.eq.s32.totalorder %v1258, %v1157
        %vm1309 = vcmp.eq.s32.totalorder %v1261, %v1157
        %vm1310 = vcmp.eq.s32.totalorder %v1264, %v1157
        %vm1311 = vcmp.eq.s32.totalorder %v1267, %v1157
        %vm1312 = vcmp.eq.s32.totalorder %v1270, %v1157
        %vm1313 = vcmp.eq.s32.totalorder %v1273, %v1157
        %vm1314 = vcmp.eq.s32.totalorder %v1276, %v1157
        %vm1315 = vcmp.eq.s32.totalorder %v1279, %v1157
        %vm1316 = vcmp.eq.s32.totalorder %v1282, %v1157
        %vm1317 = vcmp.eq.s32.totalorder %v1285, %v1157
        %v1318 = vld [vmem:[%s4] sm:$0xff]
        %v1319 = vld [vmem:[%s4 + $0x8] sm:$0xff]
        %v1320 = vld [vmem:[%s4 + $0x10] sm:$0xff]
        %v1321 = vld [vmem:[%s4 + $0x18] sm:$0xff]
        %v1322 = vld [vmem:[%s4 + $0x20] sm:$0xff]
        %v1323 = vld [vmem:[%s4 + $0x28] sm:$0xff]
        %v1324 = vld [vmem:[%s4 + $0x30] sm:$0xff]
        %v1325 = vld [vmem:[%s4 + $0x38] sm:$0xff]
        %v1326 = vld [vmem:[%s4 + $0x40] sm:$0xff]
        %v1327 = vld [vmem:[%s4 + $0x48] sm:$0xff]
        %v1328 = vld [vmem:[%s4 + $0x50] sm:$0xff]
        %v1329 = vld [vmem:[%s4 + $0x58] sm:$0xff]
        %v1330 = vld [vmem:[%s4 + $0x60] sm:$0xff]
        %v1331 = vld [vmem:[%s4 + $0x68] sm:$0xff]
        %v1332 = vld [vmem:[%s4 + $0x70] sm:$0xff]
        %v1333 = vld [vmem:[%s4 + $0x78] sm:$0xff]
        %v1334 = vld [vmem:[%s4 + $0x80] sm:$0xff]
        %v1335 = vld [vmem:[%s4 + $0x88] sm:$0xff]
        %v1336 = vld [vmem:[%s4 + $0x90] sm:$0xff]
        %v1337 = vld [vmem:[%s4 + $0x98] sm:$0xff]
        %v1338 = vld [vmem:[%s4 + $0xa0] sm:$0xff]
        %v1339 = vld [vmem:[%s4 + $0xa8] sm:$0xff]
        %v1340 = vld [vmem:[%s4 + $0xb0] sm:$0xff]
        %v1341 = vld [vmem:[%s4 + $0xb8] sm:$0xff]
        %v1342 = vld [vmem:[%s4 + $0xc0] sm:$0xff]
        %v1343 = vld [vmem:[%s4 + $0xc8] sm:$0xff]
        %v1344 = vld [vmem:[%s4 + $0xd0] sm:$0xff]
        %v1345 = vld [vmem:[%s4 + $0xd8] sm:$0xff]
        %v1346 = vld [vmem:[%s4 + $0xe0] sm:$0xff]
        %v1347 = vld [vmem:[%s4 + $0xe8] sm:$0xff]
        %v1348 = vld [vmem:[%s4 + $0xf0] sm:$0xff]
        %v1349 = vld [vmem:[%s4 + $0xf8] sm:$0xff]
        %v1350 = vadd.s32 %v1318, 64
        %v1351 = vadd.s32 %v1319, 64
        %v1352 = vadd.s32 %v1320, 64
        %v1353 = vadd.s32 %v1321, 64
        %v1354 = vadd.s32 %v1322, 64
        %v1355 = vadd.s32 %v1323, 64
        %v1356 = vadd.s32 %v1324, 64
        %v1357 = vadd.s32 %v1325, 64
        %v1358 = vadd.s32 %v1326, 64
        %v1359 = vadd.s32 %v1327, 64
        %v1360 = vadd.s32 %v1328, 64
        %v1361 = vadd.s32 %v1329, 64
        %v1362 = vadd.s32 %v1330, 64
        %v1363 = vadd.s32 %v1331, 64
        %v1364 = vadd.s32 %v1332, 64
        %v1365 = vadd.s32 %v1333, 64
        %v1366 = vadd.s32 %v1334, 64
        %v1367 = vadd.s32 %v1335, 64
        %v1368 = vadd.s32 %v1336, 64
        %v1369 = vadd.s32 %v1337, 64
        %v1370 = vadd.s32 %v1338, 64
        %v1371 = vadd.s32 %v1339, 64
        %v1372 = vadd.s32 %v1340, 64
        %v1373 = vadd.s32 %v1341, 64
        %v1374 = vadd.s32 %v1342, 64
        %v1375 = vadd.s32 %v1343, 64
        %v1376 = vadd.s32 %v1344, 64
        %v1377 = vadd.s32 %v1345, 64
        %v1378 = vadd.s32 %v1346, 64
        %v1379 = vadd.s32 %v1347, 64
        %v1380 = vadd.s32 %v1348, 64
        %v1381 = vadd.s32 %v1349, 64
        %1382 = vset.pattern.permute.xlu0 0
        %1383 = vperm.xlu0 %1382, %v1350
        %v1384 = vpop.permute.xlu0 %1383
        %1385 = vset.pattern.permute.xlu0 0
        %1386 = vperm.xlu0 %1385, %v1351
        %v1387 = vpop.permute.xlu0 %1386
        %1388 = vset.pattern.permute.xlu0 0
        %1389 = vperm.xlu0 %1388, %v1352
        %v1390 = vpop.permute.xlu0 %1389
        %1391 = vset.pattern.permute.xlu0 0
        %1392 = vperm.xlu0 %1391, %v1353
        %v1393 = vpop.permute.xlu0 %1392
        %1394 = vset.pattern.permute.xlu0 0
        %1395 = vperm.xlu0 %1394, %v1354
        %v1396 = vpop.permute.xlu0 %1395
        %1397 = vset.pattern.permute.xlu0 0
        %1398 = vperm.xlu0 %1397, %v1355
        %v1399 = vpop.permute.xlu0 %1398
        %1400 = vset.pattern.permute.xlu0 0
        %1401 = vperm.xlu0 %1400, %v1356
        %v1402 = vpop.permute.xlu0 %1401
        %1403 = vset.pattern.permute.xlu0 0
        %1404 = vperm.xlu0 %1403, %v1357
        %v1405 = vpop.permute.xlu0 %1404
        %1406 = vset.pattern.permute.xlu0 0
        %1407 = vperm.xlu0 %1406, %v1358
        %v1408 = vpop.permute.xlu0 %1407
        %1409 = vset.pattern.permute.xlu0 0
        %1410 = vperm.xlu0 %1409, %v1359
        %v1411 = vpop.permute.xlu0 %1410
        %1412 = vset.pattern.permute.xlu0 0
        %1413 = vperm.xlu0 %1412, %v1360
        %v1414 = vpop.permute.xlu0 %1413
        %1415 = vset.pattern.permute.xlu0 0
        %1416 = vperm.xlu0 %1415, %v1361
        %v1417 = vpop.permute.xlu0 %1416
        %1418 = vset.pattern.permute.xlu0 0
        %1419 = vperm.xlu0 %1418, %v1362
        %v1420 = vpop.permute.xlu0 %1419
        %1421 = vset.pattern.permute.xlu0 0
        %1422 = vperm.xlu0 %1421, %v1363
        %v1423 = vpop.permute.xlu0 %1422
        %1424 = vset.pattern.permute.xlu0 0
        %1425 = vperm.xlu0 %1424, %v1364
        %v1426 = vpop.permute.xlu0 %1425
        %1427 = vset.pattern.permute.xlu0 0
        %1428 = vperm.xlu0 %1427, %v1365
        %v1429 = vpop.permute.xlu0 %1428
        %1430 = vset.pattern.permute.xlu0 0
        %1431 = vperm.xlu0 %1430, %v1366
        %v1432 = vpop.permute.xlu0 %1431
        %1433 = vset.pattern.permute.xlu0 0
        %1434 = vperm.xlu0 %1433, %v1367
        %v1435 = vpop.permute.xlu0 %1434
        %1436 = vset.pattern.permute.xlu0 0
        %1437 = vperm.xlu0 %1436, %v1368
        %v1438 = vpop.permute.xlu0 %1437
        %1439 = vset.pattern.permute.xlu0 0
        %1440 = vperm.xlu0 %1439, %v1369
        %v1441 = vpop.permute.xlu0 %1440
        %1442 = vset.pattern.permute.xlu0 0
        %1443 = vperm.xlu0 %1442, %v1370
        %v1444 = vpop.permute.xlu0 %1443
        %1445 = vset.pattern.permute.xlu0 0
        %1446 = vperm.xlu0 %1445, %v1371
        %v1447 = vpop.permute.xlu0 %1446
        %1448 = vset.pattern.permute.xlu0 0
        %1449 = vperm.xlu0 %1448, %v1372
        %v1450 = vpop.permute.xlu0 %1449
        %1451 = vset.pattern.permute.xlu0 0
        %1452 = vperm.xlu0 %1451, %v1373
        %v1453 = vpop.permute.xlu0 %1452
        %1454 = vset.pattern.permute.xlu0 0
        %1455 = vperm.xlu0 %1454, %v1374
        %v1456 = vpop.permute.xlu0 %1455
        %1457 = vset.pattern.permute.xlu0 0
        %1458 = vperm.xlu0 %1457, %v1375
        %v1459 = vpop.permute.xlu0 %1458
        %1460 = vset.pattern.permute.xlu0 0
        %1461 = vperm.xlu0 %1460, %v1376
        %v1462 = vpop.permute.xlu0 %1461
        %1463 = vset.pattern.permute.xlu0 0
        %1464 = vperm.xlu0 %1463, %v1377
        %v1465 = vpop.permute.xlu0 %1464
        %1466 = vset.pattern.permute.xlu0 0
        %1467 = vperm.xlu0 %1466, %v1378
        %v1468 = vpop.permute.xlu0 %1467
        %1469 = vset.pattern.permute.xlu0 0
        %1470 = vperm.xlu0 %1469, %v1379
        %v1471 = vpop.permute.xlu0 %1470
        %1472 = vset.pattern.permute.xlu0 0
        %1473 = vperm.xlu0 %1472, %v1380
        %v1474 = vpop.permute.xlu0 %1473
        %1475 = vset.pattern.permute.xlu0 0
        %1476 = vperm.xlu0 %1475, %v1381
        %v1477 = vpop.permute.xlu0 %1476
        %vm1478 = vcmp.eq.s32.totalorder %v1384, %v1157
        %vm1479 = vcmp.eq.s32.totalorder %v1387, %v1157
        %vm1480 = vcmp.eq.s32.totalorder %v1390, %v1157
        %vm1481 = vcmp.eq.s32.totalorder %v1393, %v1157
        %vm1482 = vcmp.eq.s32.totalorder %v1396, %v1157
        %vm1483 = vcmp.eq.s32.totalorder %v1399, %v1157
        %vm1484 = vcmp.eq.s32.totalorder %v1402, %v1157
        %vm1485 = vcmp.eq.s32.totalorder %v1405, %v1157
        %vm1486 = vcmp.eq.s32.totalorder %v1408, %v1157
        %vm1487 = vcmp.eq.s32.totalorder %v1411, %v1157
        %vm1488 = vcmp.eq.s32.totalorder %v1414, %v1157
        %vm1489 = vcmp.eq.s32.totalorder %v1417, %v1157
        %vm1490 = vcmp.eq.s32.totalorder %v1420, %v1157
        %vm1491 = vcmp.eq.s32.totalorder %v1423, %v1157
        %vm1492 = vcmp.eq.s32.totalorder %v1426, %v1157
        %vm1493 = vcmp.eq.s32.totalorder %v1429, %v1157
        %vm1494 = vcmp.eq.s32.totalorder %v1432, %v1157
        %vm1495 = vcmp.eq.s32.totalorder %v1435, %v1157
        %vm1496 = vcmp.eq.s32.totalorder %v1438, %v1157
        %vm1497 = vcmp.eq.s32.totalorder %v1441, %v1157
        %vm1498 = vcmp.eq.s32.totalorder %v1444, %v1157
        %vm1499 = vcmp.eq.s32.totalorder %v1447, %v1157
        %vm1500 = vcmp.eq.s32.totalorder %v1450, %v1157
        %vm1501 = vcmp.eq.s32.totalorder %v1453, %v1157
        %vm1502 = vcmp.eq.s32.totalorder %v1456, %v1157
        %vm1503 = vcmp.eq.s32.totalorder %v1459, %v1157
        %vm1504 = vcmp.eq.s32.totalorder %v1462, %v1157
        %vm1505 = vcmp.eq.s32.totalorder %v1465, %v1157
        %vm1506 = vcmp.eq.s32.totalorder %v1468, %v1157
        %vm1507 = vcmp.eq.s32.totalorder %v1471, %v1157
        %vm1508 = vcmp.eq.s32.totalorder %v1474, %v1157
        %vm1509 = vcmp.eq.s32.totalorder %v1477, %v1157
        %vm1510 = vmor %vm1286, %vm1478
        %vm1511 = vmor %vm1287, %vm1479
        %vm1512 = vmor %vm1288, %vm1480
        %vm1513 = vmor %vm1289, %vm1481
        %vm1514 = vmor %vm1290, %vm1482
        %vm1515 = vmor %vm1291, %vm1483
        %vm1516 = vmor %vm1292, %vm1484
        %vm1517 = vmor %vm1293, %vm1485
        %vm1518 = vmor %vm1294, %vm1486
        %vm1519 = vmor %vm1295, %vm1487
        %vm1520 = vmor %vm1296, %vm1488
        %vm1521 = vmor %vm1297, %vm1489
        %vm1522 = vmor %vm1298, %vm1490
        %vm1523 = vmor %vm1299, %vm1491
        %vm1524 = vmor %vm1300, %vm1492
        %vm1525 = vmor %vm1301, %vm1493
        %vm1526 = vmor %vm1302, %vm1494
        %vm1527 = vmor %vm1303, %vm1495
        %vm1528 = vmor %vm1304, %vm1496
        %vm1529 = vmor %vm1305, %vm1497
        %vm1530 = vmor %vm1306, %vm1498
        %vm1531 = vmor %vm1307, %vm1499
        %vm1532 = vmor %vm1308, %vm1500
        %vm1533 = vmor %vm1309, %vm1501
        %vm1534 = vmor %vm1310, %vm1502
        %vm1535 = vmor %vm1311, %vm1503
        %vm1536 = vmor %vm1312, %vm1504
        %vm1537 = vmor %vm1313, %vm1505
        %vm1538 = vmor %vm1314, %vm1506
        %vm1539 = vmor %vm1315, %vm1507
        %vm1540 = vmor %vm1316, %vm1508
        %vm1541 = vmor %vm1317, %vm1509
        %v1542 = vsel %vm1510, 1.0, 0.0
        %v1543 = vsel %vm1511, 1.0, 0.0
        %v1544 = vsel %vm1512, 1.0, 0.0
        %v1545 = vsel %vm1513, 1.0, 0.0
        %v1546 = vsel %vm1514, 1.0, 0.0
        %v1547 = vsel %vm1515, 1.0, 0.0
        %v1548 = vsel %vm1516, 1.0, 0.0
        %v1549 = vsel %vm1517, 1.0, 0.0
        %v1550 = vsel %vm1518, 1.0, 0.0
        %v1551 = vsel %vm1519, 1.0, 0.0
        %v1552 = vsel %vm1520, 1.0, 0.0
        %v1553 = vsel %vm1521, 1.0, 0.0
        %v1554 = vsel %vm1522, 1.0, 0.0
        %v1555 = vsel %vm1523, 1.0, 0.0
        %v1556 = vsel %vm1524, 1.0, 0.0
        %v1557 = vsel %vm1525, 1.0, 0.0
        %v1558 = vsel %vm1526, 1.0, 0.0
        %v1559 = vsel %vm1527, 1.0, 0.0
        %v1560 = vsel %vm1528, 1.0, 0.0
        %v1561 = vsel %vm1529, 1.0, 0.0
        %v1562 = vsel %vm1530, 1.0, 0.0
        %v1563 = vsel %vm1531, 1.0, 0.0
        %v1564 = vsel %vm1532, 1.0, 0.0
        %v1565 = vsel %vm1533, 1.0, 0.0
        %v1566 = vsel %vm1534, 1.0, 0.0
        %v1567 = vsel %vm1535, 1.0, 0.0
        %v1568 = vsel %vm1536, 1.0, 0.0
        %v1569 = vsel %vm1537, 1.0, 0.0
        %v1570 = vsel %vm1538, 1.0, 0.0
        %v1571 = vsel %vm1539, 1.0, 0.0
        %v1572 = vsel %vm1540, 1.0, 0.0
        %v1573 = vsel %vm1541, 1.0, 0.0
        %v1574 = vpack.c.bf16 %v1543, %v1542
        %v1575 = vpack.c.bf16 %v1545, %v1544
        %v1576 = vpack.c.bf16 %v1547, %v1546
        %v1577 = vpack.c.bf16 %v1549, %v1548
        %v1578 = vpack.c.bf16 %v1551, %v1550
        %v1579 = vpack.c.bf16 %v1553, %v1552
        %v1580 = vpack.c.bf16 %v1555, %v1554
        %v1581 = vpack.c.bf16 %v1557, %v1556
        %v1582 = vpack.c.bf16 %v1559, %v1558
        %v1583 = vpack.c.bf16 %v1561, %v1560
        %v1584 = vpack.c.bf16 %v1563, %v1562
        %v1585 = vpack.c.bf16 %v1565, %v1564
        %v1586 = vpack.c.bf16 %v1567, %v1566
        %v1587 = vpack.c.bf16 %v1569, %v1568
        %v1588 = vpack.c.bf16 %v1571, %v1570
        %v1589 = vpack.c.bf16 %v1573, %v1572
        %1590 = vst [vmem:[#allocation3] sm:$0xff] %v1574
        %1591 = vst [vmem:[#allocation3 + $0x8] sm:$0xff] %v1575
        %1592 = vst [vmem:[#allocation3 + $0x10] sm:$0xff] %v1576
        %1593 = vst [vmem:[#allocation3 + $0x18] sm:$0xff] %v1577
        %1594 = vst [vmem:[#allocation3 + $0x20] sm:$0xff] %v1578
        %1595 = vst [vmem:[#allocation3 + $0x28] sm:$0xff] %v1579
        %1596 = vst [vmem:[#allocation3 + $0x30] sm:$0xff] %v1580
        %1597 = vst [vmem:[#allocation3 + $0x38] sm:$0xff] %v1581
        %1598 = vst [vmem:[#allocation3 + $0x40] sm:$0xff] %v1582
        %1599 = vst [vmem:[#allocation3 + $0x48] sm:$0xff] %v1583
        %1600 = vst [vmem:[#allocation3 + $0x50] sm:$0xff] %v1584
        %1601 = vst [vmem:[#allocation3 + $0x58] sm:$0xff] %v1585
        %1602 = vst [vmem:[#allocation3 + $0x60] sm:$0xff] %v1586
        %1603 = vst [vmem:[#allocation3 + $0x68] sm:$0xff] %v1587
        %1604 = vst [vmem:[#allocation3 + $0x70] sm:$0xff] %v1588
        %1605 = vst [vmem:[#allocation3 + $0x78] sm:$0xff] %v1589
        %v1606 = vlaneseq
        %v1607 = vshrl.u32 %v1606, 7
        %v1608 = vadd.s32 %v1607, 8
        %v1609 = vadd.s32 %v1607, 16
        %v1610 = vadd.s32 %v1607, 24
        %v1611 = vadd.s32 %v1607, 32
        %v1612 = vadd.s32 %v1607, 40
        %v1613 = vadd.s32 %v1607, 48
        %v1614 = vadd.s32 %v1607, 56
        %v1615 = vld [vmem:[%s6] sm:$0x3]
        %v1616 = vlaneseq
        %v1617 = vshrl.u32 %v1616, 7
        %v1618 = vsub.s32 0, %v1617
        %v1619 = vrot.slane %v1615, %v1618
        %v1620 = vlaneseq
        %v1621 = vshrl.u32 %v1620, 7
        %v1622 = vsub.s32 1, %v1621
        %v1623 = vrot.slane %v1615, %v1622
        %vm1624 = vcmp.eq.s32.totalorder %v1619, %v1607
        %vm1625 = vcmp.eq.s32.totalorder %v1623, %v1607
        %vm1626 = vcmp.eq.s32.totalorder %v1619, %v1608
        %vm1627 = vcmp.eq.s32.totalorder %v1623, %v1608
        %vm1628 = vcmp.eq.s32.totalorder %v1619, %v1609
        %vm1629 = vcmp.eq.s32.totalorder %v1623, %v1609
        %vm1630 = vcmp.eq.s32.totalorder %v1619, %v1610
        %vm1631 = vcmp.eq.s32.totalorder %v1623, %v1610
        %vm1632 = vcmp.eq.s32.totalorder %v1619, %v1611
        %vm1633 = vcmp.eq.s32.totalorder %v1623, %v1611
        %vm1634 = vcmp.eq.s32.totalorder %v1619, %v1612
        %vm1635 = vcmp.eq.s32.totalorder %v1623, %v1612
        %vm1636 = vcmp.eq.s32.totalorder %v1619, %v1613
        %vm1637 = vcmp.eq.s32.totalorder %v1623, %v1613
        %vm1638 = vcmp.eq.s32.totalorder %v1619, %v1614
        %vm1639 = vcmp.eq.s32.totalorder %v1623, %v1614
        %v1640 = vsel %vm1624, 1.0, 0.0
        %v1641 = vsel %vm1625, 1.0, 0.0
        %v1642 = vsel %vm1626, 1.0, 0.0
        %v1643 = vsel %vm1627, 1.0, 0.0
        %v1644 = vsel %vm1628, 1.0, 0.0
        %v1645 = vsel %vm1629, 1.0, 0.0
        %v1646 = vsel %vm1630, 1.0, 0.0
        %v1647 = vsel %vm1631, 1.0, 0.0
        %v1648 = vsel %vm1632, 1.0, 0.0
        %v1649 = vsel %vm1633, 1.0, 0.0
        %v1650 = vsel %vm1634, 1.0, 0.0
        %v1651 = vsel %vm1635, 1.0, 0.0
        %v1652 = vsel %vm1636, 1.0, 0.0
        %v1653 = vsel %vm1637, 1.0, 0.0
        %v1654 = vsel %vm1638, 1.0, 0.0
        %v1655 = vsel %vm1639, 1.0, 0.0
        %v1656 = vadd.f32 %v1640, %v1641
        %1657 = vadd.xlane.f32.xlu0 %v1656
        %v1658 = vpop.xlane.xlu0 %1657
        %v1659 = vadd.f32 %v1642, %v1643
        %1660 = vadd.xlane.f32.xlu0 %v1659
        %v1661 = vpop.xlane.xlu0 %1660
        %v1662 = vadd.f32 %v1644, %v1645
        %1663 = vadd.xlane.f32.xlu0 %v1662
        %v1664 = vpop.xlane.xlu0 %1663
        %v1665 = vadd.f32 %v1646, %v1647
        %1666 = vadd.xlane.f32.xlu0 %v1665
        %v1667 = vpop.xlane.xlu0 %1666
        %v1668 = vadd.f32 %v1648, %v1649
        %1669 = vadd.xlane.f32.xlu0 %v1668
        %v1670 = vpop.xlane.xlu0 %1669
        %v1671 = vadd.f32 %v1650, %v1651
        %1672 = vadd.xlane.f32.xlu0 %v1671
        %v1673 = vpop.xlane.xlu0 %1672
        %v1674 = vadd.f32 %v1652, %v1653
        %1675 = vadd.xlane.f32.xlu0 %v1674
        %v1676 = vpop.xlane.xlu0 %1675
        %v1677 = vadd.f32 %v1654, %v1655
        %1678 = vadd.xlane.f32.xlu0 %v1677
        %v1679 = vpop.xlane.xlu0 %1678
        %v1680 = vmax.f32 %v1658, 1.0
        %v1681 = vmax.f32 %v1661, 1.0
        %v1682 = vmax.f32 %v1664, 1.0
        %v1683 = vmax.f32 %v1667, 1.0
        %v1684 = vmax.f32 %v1670, 1.0
        %v1685 = vmax.f32 %v1673, 1.0
        %v1686 = vmax.f32 %v1676, 1.0
        %v1687 = vmax.f32 %v1679, 1.0
        %v1688 = vrcp.pop %v1680
        %v1689 = vmul.f32 1.0, %v1688
        %v1690 = vrcp.pop %v1681
        %v1691 = vmul.f32 1.0, %v1690
        %v1692 = vrcp.pop %v1682
        %v1693 = vmul.f32 1.0, %v1692
        %v1694 = vrcp.pop %v1683
        %v1695 = vmul.f32 1.0, %v1694
        %v1696 = vrcp.pop %v1684
        %v1697 = vmul.f32 1.0, %v1696
        %v1698 = vrcp.pop %v1685
        %v1699 = vmul.f32 1.0, %v1698
        %v1700 = vrcp.pop %v1686
        %v1701 = vmul.f32 1.0, %v1700
        %v1702 = vrcp.pop %v1687
        %v1703 = vmul.f32 1.0, %v1702
        %v1704 = vmul.f32 %v1640, %v1689
        %v1705 = vmul.f32 %v1641, %v1689
        %v1706 = vmul.f32 %v1642, %v1691
        %v1707 = vmul.f32 %v1643, %v1691
        %v1708 = vmul.f32 %v1644, %v1693
        %v1709 = vmul.f32 %v1645, %v1693
        %v1710 = vmul.f32 %v1646, %v1695
        %v1711 = vmul.f32 %v1647, %v1695
        %v1712 = vmul.f32 %v1648, %v1697
        %v1713 = vmul.f32 %v1649, %v1697
        %v1714 = vmul.f32 %v1650, %v1699
        %v1715 = vmul.f32 %v1651, %v1699
        %v1716 = vmul.f32 %v1652, %v1701
        %v1717 = vmul.f32 %v1653, %v1701
        %v1718 = vmul.f32 %v1654, %v1703
        %v1719 = vmul.f32 %v1655, %v1703
        %v1720 = vpack.c.bf16 %v1706, %v1704
        %v1721 = vpack.c.bf16 %v1707, %v1705
        %v1722 = vpack.c.bf16 %v1710, %v1708
        %v1723 = vpack.c.bf16 %v1711, %v1709
        %v1724 = vpack.c.bf16 %v1714, %v1712
        %v1725 = vpack.c.bf16 %v1715, %v1713
        %v1726 = vpack.c.bf16 %v1718, %v1716
        %v1727 = vpack.c.bf16 %v1719, %v1717
        %1728 = vst [vmem:[#allocation4] sm:$0xff] %v1720
        %1729 = vst [vmem:[#allocation4 + $0x8] sm:$0xff] %v1721
        %1730 = vst [vmem:[#allocation4 + $0x10] sm:$0xff] %v1722
        %1731 = vst [vmem:[#allocation4 + $0x18] sm:$0xff] %v1723
        %1732 = vst [vmem:[#allocation4 + $0x20] sm:$0xff] %v1724
        %1733 = vst [vmem:[#allocation4 + $0x28] sm:$0xff] %v1725
        %1734 = vst [vmem:[#allocation4 + $0x30] sm:$0xff] %v1726
        %1735 = vst [vmem:[#allocation4 + $0x38] sm:$0xff] %v1727
      $region108: #{npde_gnn_forward.1} parent=103 // pred_fallthru
        _
      %v1736 = vld [vmem:[#allocation2] sm:$0xff]
      %v1737 = vld [vmem:[#allocation2 + $0x8] sm:$0xff]
      %v1738 = vld [vmem:[#allocation2 + $0x10] sm:$0xff]
      %v1739 = vld [vmem:[#allocation2 + $0x18] sm:$0xff]
      %v1740 = vld [vmem:[#allocation2 + $0x20] sm:$0xff]
      %v1741 = vld [vmem:[#allocation2 + $0x28] sm:$0xff]
      %v1742 = vld [vmem:[#allocation2 + $0x30] sm:$0xff]
      %v1743 = vld [vmem:[#allocation2 + $0x38] sm:$0xff]
      %v1744 = vld [vmem:[%s712] sm:$0xff]
      %v1745 = vld [vmem:[%s712 + $0x8] sm:$0xff]
      %v1746 = vld [vmem:[%s712 + $0x10] sm:$0xff]
      %v1747 = vld [vmem:[%s712 + $0x18] sm:$0xff]
      %v1748 = vld [vmem:[%s712 + $0x20] sm:$0xff]
      %v1749 = vld [vmem:[%s712 + $0x28] sm:$0xff]
      %v1750 = vld [vmem:[%s712 + $0x30] sm:$0xff]
      %v1751 = vld [vmem:[%s712 + $0x38] sm:$0xff]
      %v1752 = vld [vmem:[%s712 + $0x40] sm:$0xff]
      %v1753 = vld [vmem:[%s712 + $0x48] sm:$0xff]
      %v1754 = vld [vmem:[%s712 + $0x50] sm:$0xff]
      %v1755 = vld [vmem:[%s712 + $0x58] sm:$0xff]
      %v1756 = vld [vmem:[%s712 + $0x60] sm:$0xff]
      %v1757 = vld [vmem:[%s712 + $0x68] sm:$0xff]
      %v1758 = vld [vmem:[%s712 + $0x70] sm:$0xff]
      %v1759 = vld [vmem:[%s712 + $0x78] sm:$0xff]
      %v1760 = vpack.c.bf16 %v1737, %v1736
      %v1761 = vpack.c.bf16 %v1739, %v1738
      %v1762 = vpack.c.bf16 %v1741, %v1740
      %v1763 = vpack.c.bf16 %v1743, %v1742
      %v1780 = vunpack.c.l.b16 %v1744
      %v1781 = vunpack.c.h.b16 %v1744
      %v1782 = vunpack.c.l.b16 %v1745
      %v1783 = vunpack.c.h.b16 %v1745
      %v1784 = vunpack.c.l.b16 %v1746
      %v1785 = vunpack.c.h.b16 %v1746
      %v1786 = vunpack.c.l.b16 %v1747
      %v1787 = vunpack.c.h.b16 %v1747
      %v1788 = vunpack.c.l.b16 %v1748
      %v1789 = vunpack.c.h.b16 %v1748
      %v1790 = vunpack.c.l.b16 %v1749
      %v1791 = vunpack.c.h.b16 %v1749
      %v1792 = vunpack.c.l.b16 %v1750
      %v1793 = vunpack.c.h.b16 %v1750
      %v1794 = vunpack.c.l.b16 %v1751
      %v1795 = vunpack.c.h.b16 %v1751
      %v1796 = vunpack.c.l.b16 %v1752
      %v1797 = vunpack.c.h.b16 %v1752
      %v1798 = vunpack.c.l.b16 %v1753
      %v1799 = vunpack.c.h.b16 %v1753
      %v1800 = vunpack.c.l.b16 %v1754
      %v1801 = vunpack.c.h.b16 %v1754
      %v1802 = vunpack.c.l.b16 %v1755
      %v1803 = vunpack.c.h.b16 %v1755
      %v1804 = vunpack.c.l.b16 %v1756
      %v1805 = vunpack.c.h.b16 %v1756
      %v1806 = vunpack.c.l.b16 %v1757
      %v1807 = vunpack.c.h.b16 %v1757
      %v1808 = vunpack.c.l.b16 %v1758
      %v1809 = vunpack.c.h.b16 %v1758
      %v1810 = vunpack.c.l.b16 %v1759
      %v1811 = vunpack.c.h.b16 %v1759
      %v1812 = vpack.c.b16 %v1782, %v1780
      %v1813 = vpack.c.b16 %v1783, %v1781
      %v1814 = vpack.c.b16 %v1786, %v1784
      %v1815 = vpack.c.b16 %v1787, %v1785
      %v1816 = vpack.c.b16 %v1790, %v1788
      %v1817 = vpack.c.b16 %v1791, %v1789
      %v1818 = vpack.c.b16 %v1794, %v1792
      %v1819 = vpack.c.b16 %v1795, %v1793
      %v1820 = vpack.c.b16 %v1798, %v1796
      %v1821 = vpack.c.b16 %v1799, %v1797
      %v1822 = vpack.c.b16 %v1802, %v1800
      %v1823 = vpack.c.b16 %v1803, %v1801
      %v1824 = vpack.c.b16 %v1806, %v1804
      %v1825 = vpack.c.b16 %v1807, %v1805
      %v1826 = vpack.c.b16 %v1810, %v1808
      %v1827 = vpack.c.b16 %v1811, %v1809
      %1844 = vmatprep.subr.bf16.mxu0 %v1813
      %1845 = vmatpush1.bf16.msra.mxu0 %v1812
      %1846 = vmatprep.subr.bf16.mxu0 %v1815
      %1847 = vmatpush1.bf16.msra.mxu0 %v1814
      %1848 = vmatprep.subr.bf16.mxu0 %v1817
      %1849 = vmatpush1.bf16.msra.mxu0 %v1816
      %1850 = vmatprep.subr.bf16.mxu0 %v1819
      %1851 = vmatpush1.bf16.msra.mxu0 %v1818
      %1852 = vmatprep.subr.bf16.mxu0 %v1821
      %1853 = vmatpush1.bf16.msra.mxu0 %v1820
      %1854 = vmatprep.subr.bf16.mxu0 %v1823
      %1855 = vmatpush1.bf16.msra.mxu0 %v1822
      %1856 = vmatprep.subr.bf16.mxu0 %v1825
      %1857 = vmatpush1.bf16.msra.mxu0 %v1824
      %1858 = vmatprep.subr.bf16.mxu0 %v1827
      %1859 = vmatpush1.bf16.msra.mxu0 %v1826
      %1860 = vmatprep.subr.bf16.mxu0 0
      %1861 = vmatpush1.bf16.msra.mxu0 0
      %1862 = vmatprep.subr.bf16.mxu0 0
      %1863 = vmatpush1.bf16.msra.mxu0 0
      %1864 = vmatprep.subr.bf16.mxu0 0
      %1865 = vmatpush1.bf16.msra.mxu0 0
      %1866 = vmatprep.subr.bf16.mxu0 0
      %1867 = vmatpush1.bf16.msra.mxu0 0
      %1868 = vmatprep.subr.bf16.mxu0 0
      %1869 = vmatpush1.bf16.msra.mxu0 0
      %1870 = vmatprep.subr.bf16.mxu0 0
      %1871 = vmatpush1.bf16.msra.mxu0 0
      %1872 = vmatprep.subr.bf16.mxu0 0
      %1873 = vmatpush1.bf16.msra.mxu0 0
      %1874 = vmatprep.subr.bf16.mxu0 0
      %1875 = vmatpush1.bf16.msra.mxu0 0
      %1876 = vmatprep.mubr.bf16.mxu0 0
      %1877 = vmatmul.mubr.bf16.gmra.mrb[0].mxu0 %v1760
      %v1878 = vpop.f32.mrb[0].mxu0
      %v1879 = vadd.f32 0.0, %v1878
      %v1880 = vpop.f32.mrb[0].mxu0
      %v1881 = vadd.f32 0.0, %v1880
      %v1882 = vpop.f32.mrb[0].mxu0
      %v1883 = vadd.f32 0.0, %v1882
      %v1884 = vpop.f32.mrb[0].mxu0
      %v1885 = vadd.f32 0.0, %v1884
      %1886 = vmatprep.mubr.bf16.mxu0 0
      %1887 = vmatmul.mubr.bf16.gmra.mrb[0].mxu0 %v1761
      %v1888 = vpop.f32.mrb[0].mxu0
      %v1889 = vadd.f32 0.0, %v1888
      %v1890 = vpop.f32.mrb[0].mxu0
      %v1891 = vadd.f32 0.0, %v1890
      %v1892 = vpop.f32.mrb[0].mxu0
      %v1893 = vadd.f32 0.0, %v1892
      %v1894 = vpop.f32.mrb[0].mxu0
      %v1895 = vadd.f32 0.0, %v1894
      %1896 = vmatprep.mubr.bf16.mxu0 0
      %1897 = vmatmul.mubr.bf16.gmra.mrb[0].mxu0 %v1762
      %v1898 = vpop.f32.mrb[0].mxu0
      %v1899 = vadd.f32 0.0, %v1898
      %v1900 = vpop.f32.mrb[0].mxu0
      %v1901 = vadd.f32 0.0, %v1900
      %v1902 = vpop.f32.mrb[0].mxu0
      %v1903 = vadd.f32 0.0, %v1902
      %v1904 = vpop.f32.mrb[0].mxu0
      %v1905 = vadd.f32 0.0, %v1904
      %1906 = vmatprep.mubr.bf16.mxu0 0
      %1907 = vmatmul.mubr.bf16.gmra.mrb[0].mxu0 %v1763
      %v1908 = vpop.f32.mrb[0].mxu0
      %v1909 = vadd.f32 0.0, %v1908
      %v1910 = vpop.f32.mrb[0].mxu0
      %v1911 = vadd.f32 0.0, %v1910
      %v1912 = vpop.f32.mrb[0].mxu0
      %v1913 = vadd.f32 0.0, %v1912
      %v1914 = vpop.f32.mrb[0].mxu0
      %v1915 = vadd.f32 0.0, %v1914
      %1916 = vdwg.mxu0
      %v1917 = vpack.c.bf16 %v1883, %v1879
      %v1918 = vpack.c.bf16 %v1893, %v1889
      %v1919 = vpack.c.bf16 %v1903, %v1899
      %v1920 = vpack.c.bf16 %v1913, %v1909
      %1921 = vst [vmem:[#allocation5] sm:$0xff] %v1917
      %1922 = vst [vmem:[#allocation5 + $0x8] sm:$0xff] %v1918
      %1923 = vst [vmem:[#allocation5 + $0x10] sm:$0xff] %v1919
      %1924 = vst [vmem:[#allocation5 + $0x18] sm:$0xff] %v1920
      %v1925 = vpack.c.bf16 %v1885, %v1881
      %v1926 = vpack.c.bf16 %v1895, %v1891
      %v1927 = vpack.c.bf16 %v1905, %v1901
      %v1928 = vpack.c.bf16 %v1915, %v1911
      %1929 = vst [vmem:[#allocation5 + $0x20] sm:$0xff] %v1925
      %1930 = vst [vmem:[#allocation5 + $0x28] sm:$0xff] %v1926
      %1931 = vst [vmem:[#allocation5 + $0x30] sm:$0xff] %v1927
      %1932 = vst [vmem:[#allocation5 + $0x38] sm:$0xff] %v1928
      %v1933 = vld [vmem:[#allocation3] sm:$0xff]
      %v1934 = vld [vmem:[#allocation3 + $0x8] sm:$0xff]
      %v1935 = vld [vmem:[#allocation3 + $0x10] sm:$0xff]
      %v1936 = vld [vmem:[#allocation3 + $0x18] sm:$0xff]
      %v1937 = vld [vmem:[#allocation3 + $0x20] sm:$0xff]
      %v1938 = vld [vmem:[#allocation3 + $0x28] sm:$0xff]
      %v1939 = vld [vmem:[#allocation3 + $0x30] sm:$0xff]
      %v1940 = vld [vmem:[#allocation3 + $0x38] sm:$0xff]
      %v1941 = vld [vmem:[#allocation3 + $0x40] sm:$0xff]
      %v1942 = vld [vmem:[#allocation3 + $0x48] sm:$0xff]
      %v1943 = vld [vmem:[#allocation3 + $0x50] sm:$0xff]
      %v1944 = vld [vmem:[#allocation3 + $0x58] sm:$0xff]
      %v1945 = vld [vmem:[#allocation3 + $0x60] sm:$0xff]
      %v1946 = vld [vmem:[#allocation3 + $0x68] sm:$0xff]
      %v1947 = vld [vmem:[#allocation3 + $0x70] sm:$0xff]
      %v1948 = vld [vmem:[#allocation3 + $0x78] sm:$0xff]
      %v1949 = vld [vmem:[#allocation5] sm:$0xff]
      %v1950 = vld [vmem:[#allocation5 + $0x8] sm:$0xff]
      %v1951 = vld [vmem:[#allocation5 + $0x10] sm:$0xff]
      %v1952 = vld [vmem:[#allocation5 + $0x18] sm:$0xff]
      %v1953 = vld [vmem:[#allocation5 + $0x20] sm:$0xff]
      %v1954 = vld [vmem:[#allocation5 + $0x28] sm:$0xff]
      %v1955 = vld [vmem:[#allocation5 + $0x30] sm:$0xff]
      %v1956 = vld [vmem:[#allocation5 + $0x38] sm:$0xff]
      %v1957 = vld [vmem:[%s7] sm:$0xf]
      %v1958 = vld [vmem:[%s7 + $0x4] sm:$0xf]
      %v1959 = vld [vmem:[%s7 + $0x8] sm:$0xf]
      %v1960 = vld [vmem:[%s7 + $0xc] sm:$0xf]
      %v1961 = vld [vmem:[%s7 + $0x10] sm:$0xf]
      %v1962 = vld [vmem:[%s7 + $0x14] sm:$0xf]
      %v1963 = vld [vmem:[%s7 + $0x18] sm:$0xf]
      %v1964 = vld [vmem:[%s7 + $0x1c] sm:$0xf]
      %v1965 = vld [vmem:[%s7 + $0x20] sm:$0xf]
      %v1966 = vld [vmem:[%s7 + $0x24] sm:$0xf]
      %v1967 = vld [vmem:[%s7 + $0x28] sm:$0xf]
      %v1968 = vld [vmem:[%s7 + $0x2c] sm:$0xf]
      %v1969 = vld [vmem:[%s7 + $0x30] sm:$0xf]
      %v1970 = vld [vmem:[%s7 + $0x34] sm:$0xf]
      %v1971 = vld [vmem:[%s7 + $0x38] sm:$0xf]
      %v1972 = vld [vmem:[%s7 + $0x3c] sm:$0xf]
      %v1973 = vld [vmem:[%s7 + $0x40] sm:$0xf]
      %v1974 = vld [vmem:[%s7 + $0x44] sm:$0xf]
      %v1975 = vld [vmem:[%s7 + $0x48] sm:$0xf]
      %v1976 = vld [vmem:[%s7 + $0x4c] sm:$0xf]
      %v1977 = vld [vmem:[%s7 + $0x50] sm:$0xf]
      %v1978 = vld [vmem:[%s7 + $0x54] sm:$0xf]
      %v1979 = vld [vmem:[%s7 + $0x58] sm:$0xf]
      %v1980 = vld [vmem:[%s7 + $0x5c] sm:$0xf]
      %v1981 = vld [vmem:[%s7 + $0x60] sm:$0xf]
      %v1982 = vld [vmem:[%s7 + $0x64] sm:$0xf]
      %v1983 = vld [vmem:[%s7 + $0x68] sm:$0xf]
      %v1984 = vld [vmem:[%s7 + $0x6c] sm:$0xf]
      %v1985 = vld [vmem:[%s7 + $0x70] sm:$0xf]
      %v1986 = vld [vmem:[%s7 + $0x74] sm:$0xf]
      %v1987 = vld [vmem:[%s7 + $0x78] sm:$0xf]
      %v1988 = vld [vmem:[%s7 + $0x7c] sm:$0xf]
      %v1989 = vld [vmem:[%s716] sm:$0xf]
      %v2022 = vunpack.c.l.b16 %v1957
      %v2023 = vunpack.c.l.b16 %v1958
      %v2024 = vunpack.c.l.b16 %v1959
      %v2025 = vunpack.c.l.b16 %v1960
      %v2026 = vunpack.c.l.b16 %v1961
      %v2027 = vunpack.c.l.b16 %v1962
      %v2028 = vunpack.c.l.b16 %v1963
      %v2029 = vunpack.c.l.b16 %v1964
      %v2030 = vunpack.c.l.b16 %v1965
      %v2031 = vunpack.c.l.b16 %v1966
      %v2032 = vunpack.c.l.b16 %v1967
      %v2033 = vunpack.c.l.b16 %v1968
      %v2034 = vunpack.c.l.b16 %v1969
      %v2035 = vunpack.c.l.b16 %v1970
      %v2036 = vunpack.c.l.b16 %v1971
      %v2037 = vunpack.c.l.b16 %v1972
      %v2038 = vunpack.c.l.b16 %v1973
      %v2039 = vunpack.c.l.b16 %v1974
      %v2040 = vunpack.c.l.b16 %v1975
      %v2041 = vunpack.c.l.b16 %v1976
      %v2042 = vunpack.c.l.b16 %v1977
      %v2043 = vunpack.c.l.b16 %v1978
      %v2044 = vunpack.c.l.b16 %v1979
      %v2045 = vunpack.c.l.b16 %v1980
      %v2046 = vunpack.c.l.b16 %v1981
      %v2047 = vunpack.c.l.b16 %v1982
      %v2048 = vunpack.c.l.b16 %v1983
      %v2049 = vunpack.c.l.b16 %v1984
      %v2050 = vunpack.c.l.b16 %v1985
      %v2051 = vunpack.c.l.b16 %v1986
      %v2052 = vunpack.c.l.b16 %v1987
      %v2053 = vunpack.c.l.b16 %v1988
      %v2054 = vpack.c.b16 %v2023, %v2022
      %v2055 = vpack.c.b16 %v2025, %v2024
      %v2056 = vpack.c.b16 %v2027, %v2026
      %v2057 = vpack.c.b16 %v2029, %v2028
      %v2058 = vpack.c.b16 %v2031, %v2030
      %v2059 = vpack.c.b16 %v2033, %v2032
      %v2060 = vpack.c.b16 %v2035, %v2034
      %v2061 = vpack.c.b16 %v2037, %v2036
      %v2062 = vpack.c.b16 %v2039, %v2038
      %v2063 = vpack.c.b16 %v2041, %v2040
      %v2064 = vpack.c.b16 %v2043, %v2042
      %v2065 = vpack.c.b16 %v2045, %v2044
      %v2066 = vpack.c.b16 %v2047, %v2046
      %v2067 = vpack.c.b16 %v2049, %v2048
      %v2068 = vpack.c.b16 %v2051, %v2050
      %v2069 = vpack.c.b16 %v2053, %v2052
      %vm2070 = vcmask 64512
      %v2072 = vsel %vm2070, %v2054, 0
      %v2075 = vsel %vm2070, %v2055, 0
      %v2078 = vsel %vm2070, %v2056, 0
      %v2081 = vsel %vm2070, %v2057, 0
      %v2084 = vsel %vm2070, %v2058, 0
      %v2087 = vsel %vm2070, %v2059, 0
      %v2090 = vsel %vm2070, %v2060, 0
      %v2093 = vsel %vm2070, %v2061, 0
      %v2096 = vsel %vm2070, %v2062, 0
      %v2099 = vsel %vm2070, %v2063, 0
      %v2102 = vsel %vm2070, %v2064, 0
      %v2105 = vsel %vm2070, %v2065, 0
      %v2108 = vsel %vm2070, %v2066, 0
      %v2111 = vsel %vm2070, %v2067, 0
      %v2114 = vsel %vm2070, %v2068, 0
      %v2117 = vsel %vm2070, %v2069, 0
      %vm2119 = vcmask 1043456
      %v2121 = vsel %vm2119, %v1989, 0
      %2123 = vmatprep.subr.bf16.mxu0 0
      %2124 = vmatpush1.bf16.msra.mxu0 %v2121
      %2125 = vmatprep.subr.bf16.mxu0 0
      %2126 = vmatpush1.bf16.msra.mxu0 0
      %2127 = vmatprep.subr.bf16.mxu0 0
      %2128 = vmatpush1.bf16.msra.mxu0 0
      %2129 = vmatprep.subr.bf16.mxu0 0
      %2130 = vmatpush1.bf16.msra.mxu0 0
      %2131 = vmatprep.subr.bf16.mxu0 0
      %2132 = vmatpush1.bf16.msra.mxu0 0
      %2133 = vmatprep.subr.bf16.mxu0 0
      %2134 = vmatpush1.bf16.msra.mxu0 0
      %2135 = vmatprep.subr.bf16.mxu0 0
      %2136 = vmatpush1.bf16.msra.mxu0 0
      %2137 = vmatprep.subr.bf16.mxu0 0
      %2138 = vmatpush1.bf16.msra.mxu0 0
      %2139 = vmatprep.subr.bf16.mxu0 0
      %2140 = vmatpush1.bf16.msra.mxu0 0
      %2141 = vmatprep.subr.bf16.mxu0 0
      %2142 = vmatpush1.bf16.msra.mxu0 0
      %2143 = vmatprep.subr.bf16.mxu0 0
      %2144 = vmatpush1.bf16.msra.mxu0 0
      %2145 = vmatprep.subr.bf16.mxu0 0
      %2146 = vmatpush1.bf16.msra.mxu0 0
      %2147 = vmatprep.subr.bf16.mxu0 0
      %2148 = vmatpush1.bf16.msra.mxu0 0
      %2149 = vmatprep.subr.bf16.mxu0 0
      %2150 = vmatpush1.bf16.msra.mxu0 0
      %2151 = vmatprep.subr.bf16.mxu0 0
      %2152 = vmatpush1.bf16.msra.mxu0 0
      %2153 = vmatprep.subr.bf16.mxu0 0
      %2154 = vmatpush1.bf16.msra.mxu0 0
      %2155 = vmatprep.mubr.bf16.mxu0 0
      %2156 = vmatmul.mubr.bf16.gmra.mrb[0].mxu0 %v2072
      %v2157 = vpop.f32.mrb[0].mxu0
      %v2158 = vadd.f32 0.0, %v2157
      %v2159 = vpop.f32.mrb[0].mxu0
      %v2160 = vpop.f32.mrb[0].mxu0
      %v2161 = vadd.f32 0.0, %v2160
      %v2162 = vpop.f32.mrb[0].mxu0
      %2163 = vmatprep.mubr.bf16.mxu0 0
      %2164 = vmatmul.mubr.bf16.gmra.mrb[0].mxu0 %v2075
      %v2165 = vpop.f32.mrb[0].mxu0
      %v2166 = vadd.f32 0.0, %v2165
      %v2167 = vpop.f32.mrb[0].mxu0
      %v2168 = vpop.f32.mrb[0].mxu0
      %v2169 = vadd.f32 0.0, %v2168
      %v2170 = vpop.f32.mrb[0].mxu0
      %2171 = vmatprep.mubr.bf16.mxu0 0
      %2172 = vmatmul.mubr.bf16.gmra.mrb[0].mxu0 %v2078
      %v2173 = vpop.f32.mrb[0].mxu0
      %v2174 = vadd.f32 0.0, %v2173
      %v2175 = vpop.f32.mrb[0].mxu0
      %v2176 = vpop.f32.mrb[0].mxu0
      %v2177 = vadd.f32 0.0, %v2176
      %v2178 = vpop.f32.mrb[0].mxu0
      %2179 = vmatprep.mubr.bf16.mxu0 0
      %2180 = vmatmul.mubr.bf16.gmra.mrb[0].mxu0 %v2081
      %v2181 = vpop.f32.mrb[0].mxu0
      %v2182 = vadd.f32 0.0, %v2181
      %v2183 = vpop.f32.mrb[0].mxu0
      %v2184 = vpop.f32.mrb[0].mxu0
      %v2185 = vadd.f32 0.0, %v2184
      %v2186 = vpop.f32.mrb[0].mxu0
      %2187 = vmatprep.mubr.bf16.mxu0 0
      %2188 = vmatmul.mubr.bf16.gmra.mrb[0].mxu0 %v2084
      %v2189 = vpop.f32.mrb[0].mxu0
      %v2190 = vadd.f32 0.0, %v2189
      %v2191 = vpop.f32.mrb[0].mxu0
      %v2192 = vpop.f32.mrb[0].mxu0
      %v2193 = vadd.f32 0.0, %v2192
      %v2194 = vpop.f32.mrb[0].mxu0
      %2195 = vmatprep.mubr.bf16.mxu0 0
      %2196 = vmatmul.mubr.bf16.gmra.mrb[0].mxu0 %v2087
      %v2197 = vpop.f32.mrb[0].mxu0
      %v2198 = vadd.f32 0.0, %v2197
      %v2199 = vpop.f32.mrb[0].mxu0
      %v2200 = vpop.f32.mrb[0].mxu0
      %v2201 = vadd.f32 0.0, %v2200
      %v2202 = vpop.f32.mrb[0].mxu0
      %2203 = vmatprep.mubr.bf16.mxu0 0
      %2204 = vmatmul.mubr.bf16.gmra.mrb[0].mxu0 %v2090
      %v2205 = vpop.f32.mrb[0].mxu0
      %v2206 = vadd.f32 0.0, %v2205
      %v2207 = vpop.f32.mrb[0].mxu0
      %v2208 = vpop.f32.mrb[0].mxu0
      %v2209 = vadd.f32 0.0, %v2208
      %v2210 = vpop.f32.mrb[0].mxu0
      %2211 = vmatprep.mubr.bf16.mxu0 0
      %2212 = vmatmul.mubr.bf16.gmra.mrb[0].mxu0 %v2093
      %v2213 = vpop.f32.mrb[0].mxu0
      %v2214 = vadd.f32 0.0, %v2213
      %v2215 = vpop.f32.mrb[0].mxu0
      %v2216 = vpop.f32.mrb[0].mxu0
      %v2217 = vadd.f32 0.0, %v2216
      %v2218 = vpop.f32.mrb[0].mxu0
      %2219 = vmatprep.mubr.bf16.mxu0 0
      %2220 = vmatmul.mubr.bf16.gmra.mrb[0].mxu0 %v2096
      %v2221 = vpop.f32.mrb[0].mxu0
      %v2222 = vadd.f32 0.0, %v2221
      %v2223 = vpop.f32.mrb[0].mxu0
      %v2224 = vpop.f32.mrb[0].mxu0
      %v2225 = vadd.f32 0.0, %v2224
      %v2226 = vpop.f32.mrb[0].mxu0
      %2227 = vmatprep.mubr.bf16.mxu0 0
      %2228 = vmatmul.mubr.bf16.gmra.mrb[0].mxu0 %v2099
      %v2229 = vpop.f32.mrb[0].mxu0
      %v2230 = vadd.f32 0.0, %v2229
      %v2231 = vpop.f32.mrb[0].mxu0
      %v2232 = vpop.f32.mrb[0].mxu0
      %v2233 = vadd.f32 0.0, %v2232
      %v2234 = vpop.f32.mrb[0].mxu0
      %2235 = vmatprep.mubr.bf16.mxu0 0
      %2236 = vmatmul.mubr.bf16.gmra.mrb[0].mxu0 %v2102
      %v2237 = vpop.f32.mrb[0].mxu0
      %v2238 = vadd.f32 0.0, %v2237
      %v2239 = vpop.f32.mrb[0].mxu0
      %v2240 = vpop.f32.mrb[0].mxu0
      %v2241 = vadd.f32 0.0, %v2240
      %v2242 = vpop.f32.mrb[0].mxu0
      %2243 = vmatprep.mubr.bf16.mxu0 0
      %2244 = vmatmul.mubr.bf16.gmra.mrb[0].mxu0 %v2105
      %v2245 = vpop.f32.mrb[0].mxu0
      %v2246 = vadd.f32 0.0, %v2245
      %v2247 = vpop.f32.mrb[0].mxu0
      %v2248 = vpop.f32.mrb[0].mxu0
      %v2249 = vadd.f32 0.0, %v2248
      %v2250 = vpop.f32.mrb[0].mxu0
      %2251 = vmatprep.mubr.bf16.mxu0 0
      %2252 = vmatmul.mubr.bf16.gmra.mrb[0].mxu0 %v2108
      %v2253 = vpop.f32.mrb[0].mxu0
      %v2254 = vadd.f32 0.0, %v2253
      %v2255 = vpop.f32.mrb[0].mxu0
      %v2256 = vpop.f32.mrb[0].mxu0
      %v2257 = vadd.f32 0.0, %v2256
      %v2258 = vpop.f32.mrb[0].mxu0
      %2259 = vmatprep.mubr.bf16.mxu0 0
      %2260 = vmatmul.mubr.bf16.gmra.mrb[0].mxu0 %v2111
      %v2261 = vpop.f32.mrb[0].mxu0
      %v2262 = vadd.f32 0.0, %v2261
      %v2263 = vpop.f32.mrb[0].mxu0
      %v2264 = vpop.f32.mrb[0].mxu0
      %v2265 = vadd.f32 0.0, %v2264
      %v2266 = vpop.f32.mrb[0].mxu0
      %2267 = vmatprep.mubr.bf16.mxu0 0
      %2268 = vmatmul.mubr.bf16.gmra.mrb[0].mxu0 %v2114
      %v2269 = vpop.f32.mrb[0].mxu0
      %v2270 = vadd.f32 0.0, %v2269
      %v2271 = vpop.f32.mrb[0].mxu0
      %v2272 = vpop.f32.mrb[0].mxu0
      %v2273 = vadd.f32 0.0, %v2272
      %v2274 = vpop.f32.mrb[0].mxu0
      %2275 = vmatprep.mubr.bf16.mxu0 0
      %2276 = vmatmul.mubr.bf16.gmra.mrb[0].mxu0 %v2117
      %v2277 = vpop.f32.mrb[0].mxu0
      %v2278 = vadd.f32 0.0, %v2277
      %v2279 = vpop.f32.mrb[0].mxu0
      %v2280 = vpop.f32.mrb[0].mxu0
      %v2281 = vadd.f32 0.0, %v2280
      %v2282 = vpop.f32.mrb[0].mxu0
      %2283 = vdwg.mxu0
      %2284 = vmatprep.subr.bf16.mxu0 0
      %2285 = vmatpush1.bf16.msra.mxu0 %v1949
      %2286 = vmatprep.subr.bf16.mxu0 0
      %2287 = vmatpush1.bf16.msra.mxu0 %v1950
      %2288 = vmatprep.subr.bf16.mxu0 0
      %2289 = vmatpush1.bf16.msra.mxu0 %v1951
      %2290 = vmatprep.subr.bf16.mxu0 0
      %2291 = vmatpush1.bf16.msra.mxu0 %v1952
      %2292 = vmatprep.subr.bf16.mxu0 0
      %2293 = vmatpush1.bf16.msra.mxu0 %v1953
      %2294 = vmatprep.subr.bf16.mxu0 0
      %2295 = vmatpush1.bf16.msra.mxu0 %v1954
      %2296 = vmatprep.subr.bf16.mxu0 0
      %2297 = vmatpush1.bf16.msra.mxu0 %v1955
      %2298 = vmatprep.subr.bf16.mxu0 0
      %2299 = vmatpush1.bf16.msra.mxu0 %v1956
      %2300 = vmatprep.subr.bf16.mxu0 0
      %2301 = vmatpush1.bf16.msra.mxu0 0
      %2302 = vmatprep.subr.bf16.mxu0 0
      %2303 = vmatpush1.bf16.msra.mxu0 0
      %2304 = vmatprep.subr.bf16.mxu0 0
      %2305 = vmatpush1.bf16.msra.mxu0 0
      %2306 = vmatprep.subr.bf16.mxu0 0
      %2307 = vmatpush1.bf16.msra.mxu0 0
      %2308 = vmatprep.subr.bf16.mxu0 0
      %2309 = vmatpush1.bf16.msra.mxu0 0
      %2310 = vmatprep.subr.bf16.mxu0 0
      %2311 = vmatpush1.bf16.msra.mxu0 0
      %2312 = vmatprep.subr.bf16.mxu0 0
      %2313 = vmatpush1.bf16.msra.mxu0 0
      %2314 = vmatprep.subr.bf16.mxu0 0
      %2315 = vmatpush1.bf16.msra.mxu0 0
      %2316 = vmatprep.mubr.bf16.mxu0 0
      %2317 = vmatmul.mubr.bf16.gmra.mrb[0].mxu0 %v1933
      %v2318 = vpop.f32.mrb[0].mxu0
      %v2319 = vadd.f32 %v2158, %v2318
      %v2320 = vpop.f32.mrb[0].mxu0
      %v2321 = vpop.f32.mrb[0].mxu0
      %v2322 = vadd.f32 %v2161, %v2321
      %v2323 = vpop.f32.mrb[0].mxu0
      %2324 = vmatprep.mubr.bf16.mxu0 0
      %2325 = vmatmul.mubr.bf16.gmra.mrb[0].mxu0 %v1934
      %v2326 = vpop.f32.mrb[0].mxu0
      %v2327 = vadd.f32 %v2166, %v2326
      %v2328 = vpop.f32.mrb[0].mxu0
      %v2329 = vpop.f32.mrb[0].mxu0
      %v2330 = vadd.f32 %v2169, %v2329
      %v2331 = vpop.f32.mrb[0].mxu0
      %2332 = vmatprep.mubr.bf16.mxu0 0
      %2333 = vmatmul.mubr.bf16.gmra.mrb[0].mxu0 %v1935
      %v2334 = vpop.f32.mrb[0].mxu0
      %v2335 = vadd.f32 %v2174, %v2334
      %v2336 = vpop.f32.mrb[0].mxu0
      %v2337 = vpop.f32.mrb[0].mxu0
      %v2338 = vadd.f32 %v2177, %v2337
      %v2339 = vpop.f32.mrb[0].mxu0
      %2340 = vmatprep.mubr.bf16.mxu0 0
      %2341 = vmatmul.mubr.bf16.gmra.mrb[0].mxu0 %v1936
      %v2342 = vpop.f32.mrb[0].mxu0
      %v2343 = vadd.f32 %v2182, %v2342
      %v2344 = vpop.f32.mrb[0].mxu0
      %v2345 = vpop.f32.mrb[0].mxu0
      %v2346 = vadd.f32 %v2185, %v2345
      %v2347 = vpop.f32.mrb[0].mxu0
      %2348 = vmatprep.mubr.bf16.mxu0 0
      %2349 = vmatmul.mubr.bf16.gmra.mrb[0].mxu0 %v1937
      %v2350 = vpop.f32.mrb[0].mxu0
      %v2351 = vadd.f32 %v2190, %v2350
      %v2352 = vpop.f32.mrb[0].mxu0
      %v2353 = vpop.f32.mrb[0].mxu0
      %v2354 = vadd.f32 %v2193, %v2353
      %v2355 = vpop.f32.mrb[0].mxu0
      %2356 = vmatprep.mubr.bf16.mxu0 0
      %2357 = vmatmul.mubr.bf16.gmra.mrb[0].mxu0 %v1938
      %v2358 = vpop.f32.mrb[0].mxu0
      %v2359 = vadd.f32 %v2198, %v2358
      %v2360 = vpop.f32.mrb[0].mxu0
      %v2361 = vpop.f32.mrb[0].mxu0
      %v2362 = vadd.f32 %v2201, %v2361
      %v2363 = vpop.f32.mrb[0].mxu0
      %2364 = vmatprep.mubr.bf16.mxu0 0
      %2365 = vmatmul.mubr.bf16.gmra.mrb[0].mxu0 %v1939
      %v2366 = vpop.f32.mrb[0].mxu0
      %v2367 = vadd.f32 %v2206, %v2366
      %v2368 = vpop.f32.mrb[0].mxu0
      %v2369 = vpop.f32.mrb[0].mxu0
      %v2370 = vadd.f32 %v2209, %v2369
      %v2371 = vpop.f32.mrb[0].mxu0
      %2372 = vmatprep.mubr.bf16.mxu0 0
      %2373 = vmatmul.mubr.bf16.gmra.mrb[0].mxu0 %v1940
      %v2374 = vpop.f32.mrb[0].mxu0
      %v2375 = vadd.f32 %v2214, %v2374
      %v2376 = vpop.f32.mrb[0].mxu0
      %v2377 = vpop.f32.mrb[0].mxu0
      %v2378 = vadd.f32 %v2217, %v2377
      %v2379 = vpop.f32.mrb[0].mxu0
      %2380 = vmatprep.mubr.bf16.mxu0 0
      %2381 = vmatmul.mubr.bf16.gmra.mrb[0].mxu0 %v1941
      %v2382 = vpop.f32.mrb[0].mxu0
      %v2383 = vadd.f32 %v2222, %v2382
      %v2384 = vpop.f32.mrb[0].mxu0
      %v2385 = vpop.f32.mrb[0].mxu0
      %v2386 = vadd.f32 %v2225, %v2385
      %v2387 = vpop.f32.mrb[0].mxu0
      %2388 = vmatprep.mubr.bf16.mxu0 0
      %2389 = vmatmul.mubr.bf16.gmra.mrb[0].mxu0 %v1942
      %v2390 = vpop.f32.mrb[0].mxu0
      %v2391 = vadd.f32 %v2230, %v2390
      %v2392 = vpop.f32.mrb[0].mxu0
      %v2393 = vpop.f32.mrb[0].mxu0
      %v2394 = vadd.f32 %v2233, %v2393
      %v2395 = vpop.f32.mrb[0].mxu0
      %2396 = vmatprep.mubr.bf16.mxu0 0
      %2397 = vmatmul.mubr.bf16.gmra.mrb[0].mxu0 %v1943
      %v2398 = vpop.f32.mrb[0].mxu0
      %v2399 = vadd.f32 %v2238, %v2398
      %v2400 = vpop.f32.mrb[0].mxu0
      %v2401 = vpop.f32.mrb[0].mxu0
      %v2402 = vadd.f32 %v2241, %v2401
      %v2403 = vpop.f32.mrb[0].mxu0
      %2404 = vmatprep.mubr.bf16.mxu0 0
      %2405 = vmatmul.mubr.bf16.gmra.mrb[0].mxu0 %v1944
      %v2406 = vpop.f32.mrb[0].mxu0
      %v2407 = vadd.f32 %v2246, %v2406
      %v2408 = vpop.f32.mrb[0].mxu0
      %v2409 = vpop.f32.mrb[0].mxu0
      %v2410 = vadd.f32 %v2249, %v2409
      %v2411 = vpop.f32.mrb[0].mxu0
      %2412 = vmatprep.mubr.bf16.mxu0 0
      %2413 = vmatmul.mubr.bf16.gmra.mrb[0].mxu0 %v1945
      %v2414 = vpop.f32.mrb[0].mxu0
      %v2415 = vadd.f32 %v2254, %v2414
      %v2416 = vpop.f32.mrb[0].mxu0
      %v2417 = vpop.f32.mrb[0].mxu0
      %v2418 = vadd.f32 %v2257, %v2417
      %v2419 = vpop.f32.mrb[0].mxu0
      %2420 = vmatprep.mubr.bf16.mxu0 0
      %2421 = vmatmul.mubr.bf16.gmra.mrb[0].mxu0 %v1946
      %v2422 = vpop.f32.mrb[0].mxu0
      %v2423 = vadd.f32 %v2262, %v2422
      %v2424 = vpop.f32.mrb[0].mxu0
      %v2425 = vpop.f32.mrb[0].mxu0
      %v2426 = vadd.f32 %v2265, %v2425
      %v2427 = vpop.f32.mrb[0].mxu0
      %2428 = vmatprep.mubr.bf16.mxu0 0
      %2429 = vmatmul.mubr.bf16.gmra.mrb[0].mxu0 %v1947
      %v2430 = vpop.f32.mrb[0].mxu0
      %v2431 = vadd.f32 %v2270, %v2430
      %v2432 = vpop.f32.mrb[0].mxu0
      %v2433 = vpop.f32.mrb[0].mxu0
      %v2434 = vadd.f32 %v2273, %v2433
      %v2435 = vpop.f32.mrb[0].mxu0
      %2436 = vmatprep.mubr.bf16.mxu0 0
      %2437 = vmatmul.mubr.bf16.gmra.mrb[0].mxu0 %v1948
      %v2438 = vpop.f32.mrb[0].mxu0
      %v2439 = vadd.f32 %v2278, %v2438
      %v2440 = vpop.f32.mrb[0].mxu0
      %v2441 = vpop.f32.mrb[0].mxu0
      %v2442 = vadd.f32 %v2281, %v2441
      %v2443 = vpop.f32.mrb[0].mxu0
      %2444 = vdwg.mxu0
      %v2445 = vld [vmem:[%s735] sm:$0x1]
      %v2446 = vlaneseq
      %v2447 = vshrl.u32 %v2446, 7
      %v2448 = vsub.s32 0, %v2447
      %v2449 = vrot.slane %v2445, %v2448
      %v2450 = vadd.f32 %v2319, %v2449
      %v2451 = vadd.f32 %v2322, %v2449
      %v2452 = vadd.f32 %v2327, %v2449
      %v2453 = vadd.f32 %v2330, %v2449
      %v2454 = vadd.f32 %v2335, %v2449
      %v2455 = vadd.f32 %v2338, %v2449
      %v2456 = vadd.f32 %v2343, %v2449
      %v2457 = vadd.f32 %v2346, %v2449
      %v2458 = vadd.f32 %v2351, %v2449
      %v2459 = vadd.f32 %v2354, %v2449
      %v2460 = vadd.f32 %v2359, %v2449
      %v2461 = vadd.f32 %v2362, %v2449
      %v2462 = vadd.f32 %v2367, %v2449
      %v2463 = vadd.f32 %v2370, %v2449
      %v2464 = vadd.f32 %v2375, %v2449
      %v2465 = vadd.f32 %v2378, %v2449
      %v2466 = vadd.f32 %v2383, %v2449
      %v2467 = vadd.f32 %v2386, %v2449
      %v2468 = vadd.f32 %v2391, %v2449
      %v2469 = vadd.f32 %v2394, %v2449
      %v2470 = vadd.f32 %v2399, %v2449
      %v2471 = vadd.f32 %v2402, %v2449
      %v2472 = vadd.f32 %v2407, %v2449
      %v2473 = vadd.f32 %v2410, %v2449
      %v2474 = vadd.f32 %v2415, %v2449
      %v2475 = vadd.f32 %v2418, %v2449
      %v2476 = vadd.f32 %v2423, %v2449
      %v2477 = vadd.f32 %v2426, %v2449
      %v2478 = vadd.f32 %v2431, %v2449
      %v2479 = vadd.f32 %v2434, %v2449
      %v2480 = vadd.f32 %v2439, %v2449
      %v2481 = vadd.f32 %v2442, %v2449
      %v2482 = vmax.f32 %v2450, 0.0
      %v2483 = vmax.f32 %v2451, 0.0
      %v2484 = vmax.f32 %v2452, 0.0
      %v2485 = vmax.f32 %v2453, 0.0
      %v2486 = vmax.f32 %v2454, 0.0
      %v2487 = vmax.f32 %v2455, 0.0
      %v2488 = vmax.f32 %v2456, 0.0
      %v2489 = vmax.f32 %v2457, 0.0
      %v2490 = vmax.f32 %v2458, 0.0
      %v2491 = vmax.f32 %v2459, 0.0
      %v2492 = vmax.f32 %v2460, 0.0
      %v2493 = vmax.f32 %v2461, 0.0
      %v2494 = vmax.f32 %v2462, 0.0
      %v2495 = vmax.f32 %v2463, 0.0
      %v2496 = vmax.f32 %v2464, 0.0
      %v2497 = vmax.f32 %v2465, 0.0
      %v2498 = vmax.f32 %v2466, 0.0
      %v2499 = vmax.f32 %v2467, 0.0
      %v2500 = vmax.f32 %v2468, 0.0
      %v2501 = vmax.f32 %v2469, 0.0
      %v2502 = vmax.f32 %v2470, 0.0
      %v2503 = vmax.f32 %v2471, 0.0
      %v2504 = vmax.f32 %v2472, 0.0
      %v2505 = vmax.f32 %v2473, 0.0
      %v2506 = vmax.f32 %v2474, 0.0
      %v2507 = vmax.f32 %v2475, 0.0
      %v2508 = vmax.f32 %v2476, 0.0
      %v2509 = vmax.f32 %v2477, 0.0
      %v2510 = vmax.f32 %v2478, 0.0
      %v2511 = vmax.f32 %v2479, 0.0
      %v2512 = vmax.f32 %v2480, 0.0
      %v2513 = vmax.f32 %v2481, 0.0
      %v2514 = vld [vmem:[%s721] sm:$0xf]
      %v2515 = vld [vmem:[%s721 + $0x4] sm:$0xf]
      %v2516 = vld [vmem:[%s721 + $0x8] sm:$0xf]
      %v2517 = vld [vmem:[%s721 + $0xc] sm:$0xf]
      %v2518 = vld [vmem:[%s721 + $0x10] sm:$0xf]
      %v2519 = vld [vmem:[%s721 + $0x14] sm:$0xf]
      %v2520 = vld [vmem:[%s721 + $0x18] sm:$0xf]
      %v2521 = vld [vmem:[%s721 + $0x1c] sm:$0xf]
      %v2522 = vld [vmem:[%s721 + $0x20] sm:$0xf]
      %v2523 = vld [vmem:[%s721 + $0x24] sm:$0xf]
      %v2524 = vld [vmem:[%s721 + $0x28] sm:$0xf]
      %v2525 = vld [vmem:[%s721 + $0x2c] sm:$0xf]
      %v2526 = vld [vmem:[%s721 + $0x30] sm:$0xf]
      %v2527 = vld [vmem:[%s721 + $0x34] sm:$0xf]
      %v2528 = vld [vmem:[%s721 + $0x38] sm:$0xf]
      %v2529 = vld [vmem:[%s721 + $0x3c] sm:$0xf]
      %v2530 = vpack.c.bf16 %v2483, %v2482
      %v2531 = vpack.c.bf16 %v2485, %v2484
      %v2532 = vpack.c.bf16 %v2487, %v2486
      %v2533 = vpack.c.bf16 %v2489, %v2488
      %v2534 = vpack.c.bf16 %v2491, %v2490
      %v2535 = vpack.c.bf16 %v2493, %v2492
      %v2536 = vpack.c.bf16 %v2495, %v2494
      %v2537 = vpack.c.bf16 %v2497, %v2496
      %v2538 = vpack.c.bf16 %v2499, %v2498
      %v2539 = vpack.c.bf16 %v2501, %v2500
      %v2540 = vpack.c.bf16 %v2503, %v2502
      %v2541 = vpack.c.bf16 %v2505, %v2504
      %v2542 = vpack.c.bf16 %v2507, %v2506
      %v2543 = vpack.c.bf16 %v2509, %v2508
      %v2544 = vpack.c.bf16 %v2511, %v2510
      %v2545 = vpack.c.bf16 %v2513, %v2512
      %v2546 = vld [vmem:[%s735 + $0x1] sm:$0x1]
      %v2547 = vlaneseq
      %v2548 = vshrl.u32 %v2547, 7
      %v2549 = vsub.s32 0, %v2548
      %v2550 = vrot.slane %v2546, %v2549
      %v2567 = vunpack.c.l.b16 %v2514
      %v2568 = vunpack.c.l.b16 %v2515
      %v2569 = vunpack.c.l.b16 %v2516
      %v2570 = vunpack.c.l.b16 %v2517
      %v2571 = vunpack.c.l.b16 %v2518
      %v2572 = vunpack.c.l.b16 %v2519
      %v2573 = vunpack.c.l.b16 %v2520
      %v2574 = vunpack.c.l.b16 %v2521
      %v2575 = vunpack.c.l.b16 %v2522
      %v2576 = vunpack.c.l.b16 %v2523
      %v2577 = vunpack.c.l.b16 %v2524
      %v2578 = vunpack.c.l.b16 %v2525
      %v2579 = vunpack.c.l.b16 %v2526
      %v2580 = vunpack.c.l.b16 %v2527
      %v2581 = vunpack.c.l.b16 %v2528
      %v2582 = vunpack.c.l.b16 %v2529
      %v2583 = vpack.c.b16 %v2568, %v2567
      %v2584 = vpack.c.b16 %v2570, %v2569
      %v2585 = vpack.c.b16 %v2572, %v2571
      %v2586 = vpack.c.b16 %v2574, %v2573
      %v2587 = vpack.c.b16 %v2576, %v2575
      %v2588 = vpack.c.b16 %v2578, %v2577
      %v2589 = vpack.c.b16 %v2580, %v2579
      %v2590 = vpack.c.b16 %v2582, %v2581
      %2599 = vmatprep.subr.bf16.mxu0 0
      %2600 = vmatpush1.bf16.msra.mxu0 %v2583
      %2601 = vmatprep.subr.bf16.mxu0 0
      %2602 = vmatpush1.bf16.msra.mxu0 %v2584
      %2603 = vmatprep.subr.bf16.mxu0 0
      %2604 = vmatpush1.bf16.msra.mxu0 %v2585
      %2605 = vmatprep.subr.bf16.mxu0 0
      %2606 = vmatpush1.bf16.msra.mxu0 %v2586
      %2607 = vmatprep.subr.bf16.mxu0 0
      %2608 = vmatpush1.bf16.msra.mxu0 %v2587
      %2609 = vmatprep.subr.bf16.mxu0 0
      %2610 = vmatpush1.bf16.msra.mxu0 %v2588
      %2611 = vmatprep.subr.bf16.mxu0 0
      %2612 = vmatpush1.bf16.msra.mxu0 %v2589
      %2613 = vmatprep.subr.bf16.mxu0 0
      %2614 = vmatpush1.bf16.msra.mxu0 %v2590
      %2615 = vmatprep.subr.bf16.mxu0 0
      %2616 = vmatpush1.bf16.msra.mxu0 0
      %2617 = vmatprep.subr.bf16.mxu0 0
      %2618 = vmatpush1.bf16.msra.mxu0 0
      %2619 = vmatprep.subr.bf16.mxu0 0
      %2620 = vmatpush1.bf16.msra.mxu0 0
      %2621 = vmatprep.subr.bf16.mxu0 0
      %2622 = vmatpush1.bf16.msra.mxu0 0
      %2623 = vmatprep.subr.bf16.mxu0 0
      %2624 = vmatpush1.bf16.msra.mxu0 0
      %2625 = vmatprep.subr.bf16.mxu0 0
      %2626 = vmatpush1.bf16.msra.mxu0 0
      %2627 = vmatprep.subr.bf16.mxu0 0
      %2628 = vmatpush1.bf16.msra.mxu0 0
      %2629 = vmatprep.subr.bf16.mxu0 0
      %2630 = vmatpush1.bf16.msra.mxu0 0
      %2631 = vmatprep.mubr.bf16.mxu0 0
      %2632 = vmatmul.mubr.bf16.gmra.mrb[0].mxu0 %v2530
      %v2633 = vpop.f32.mrb[0].mxu0
      %v2634 = vadd.f32 %v2550, %v2633
      %v2635 = vpop.f32.mrb[0].mxu0
      %v2636 = vpop.f32.mrb[0].mxu0
      %v2637 = vadd.f32 %v2550, %v2636
      %v2638 = vpop.f32.mrb[0].mxu0
      %2639 = vmatprep.mubr.bf16.mxu0 0
      %2640 = vmatmul.mubr.bf16.gmra.mrb[0].mxu0 %v2531
      %v2641 = vpop.f32.mrb[0].mxu0
      %v2642 = vadd.f32 %v2550, %v2641
      %v2643 = vpop.f32.mrb[0].mxu0
      %v2644 = vpop.f32.mrb[0].mxu0
      %v2645 = vadd.f32 %v2550, %v2644
      %v2646 = vpop.f32.mrb[0].mxu0
      %2647 = vmatprep.mubr.bf16.mxu0 0
      %2648 = vmatmul.mubr.bf16.gmra.mrb[0].mxu0 %v2532
      %v2649 = vpop.f32.mrb[0].mxu0
      %v2650 = vadd.f32 %v2550, %v2649
      %v2651 = vpop.f32.mrb[0].mxu0
      %v2652 = vpop.f32.mrb[0].mxu0
      %v2653 = vadd.f32 %v2550, %v2652
      %v2654 = vpop.f32.mrb[0].mxu0
      %2655 = vmatprep.mubr.bf16.mxu0 0
      %2656 = vmatmul.mubr.bf16.gmra.mrb[0].mxu0 %v2533
      %v2657 = vpop.f32.mrb[0].mxu0
      %v2658 = vadd.f32 %v2550, %v2657
      %v2659 = vpop.f32.mrb[0].mxu0
      %v2660 = vpop.f32.mrb[0].mxu0
      %v2661 = vadd.f32 %v2550, %v2660
      %v2662 = vpop.f32.mrb[0].mxu0
      %2663 = vmatprep.mubr.bf16.mxu0 0
      %2664 = vmatmul.mubr.bf16.gmra.mrb[0].mxu0 %v2534
      %v2665 = vpop.f32.mrb[0].mxu0
      %v2666 = vadd.f32 %v2550, %v2665
      %v2667 = vpop.f32.mrb[0].mxu0
      %v2668 = vpop.f32.mrb[0].mxu0
      %v2669 = vadd.f32 %v2550, %v2668
      %v2670 = vpop.f32.mrb[0].mxu0
      %2671 = vmatprep.mubr.bf16.mxu0 0
      %2672 = vmatmul.mubr.bf16.gmra.mrb[0].mxu0 %v2535
      %v2673 = vpop.f32.mrb[0].mxu0
      %v2674 = vadd.f32 %v2550, %v2673
      %v2675 = vpop.f32.mrb[0].mxu0
      %v2676 = vpop.f32.mrb[0].mxu0
      %v2677 = vadd.f32 %v2550, %v2676
      %v2678 = vpop.f32.mrb[0].mxu0
      %2679 = vmatprep.mubr.bf16.mxu0 0
      %2680 = vmatmul.mubr.bf16.gmra.mrb[0].mxu0 %v2536
      %v2681 = vpop.f32.mrb[0].mxu0
      %v2682 = vadd.f32 %v2550, %v2681
      %v2683 = vpop.f32.mrb[0].mxu0
      %v2684 = vpop.f32.mrb[0].mxu0
      %v2685 = vadd.f32 %v2550, %v2684
      %v2686 = vpop.f32.mrb[0].mxu0
      %2687 = vmatprep.mubr.bf16.mxu0 0
      %2688 = vmatmul.mubr.bf16.gmra.mrb[0].mxu0 %v2537
      %v2689 = vpop.f32.mrb[0].mxu0
      %v2690 = vadd.f32 %v2550, %v2689
      %v2691 = vpop.f32.mrb[0].mxu0
      %v2692 = vpop.f32.mrb[0].mxu0
      %v2693 = vadd.f32 %v2550, %v2692
      %v2694 = vpop.f32.mrb[0].mxu0
      %2695 = vmatprep.mubr.bf16.mxu0 0
      %2696 = vmatmul.mubr.bf16.gmra.mrb[0].mxu0 %v2538
      %v2697 = vpop.f32.mrb[0].mxu0
      %v2698 = vadd.f32 %v2550, %v2697
      %v2699 = vpop.f32.mrb[0].mxu0
      %v2700 = vpop.f32.mrb[0].mxu0
      %v2701 = vadd.f32 %v2550, %v2700
      %v2702 = vpop.f32.mrb[0].mxu0
      %2703 = vmatprep.mubr.bf16.mxu0 0
      %2704 = vmatmul.mubr.bf16.gmra.mrb[0].mxu0 %v2539
      %v2705 = vpop.f32.mrb[0].mxu0
      %v2706 = vadd.f32 %v2550, %v2705
      %v2707 = vpop.f32.mrb[0].mxu0
      %v2708 = vpop.f32.mrb[0].mxu0
      %v2709 = vadd.f32 %v2550, %v2708
      %v2710 = vpop.f32.mrb[0].mxu0
      %2711 = vmatprep.mubr.bf16.mxu0 0
      %2712 = vmatmul.mubr.bf16.gmra.mrb[0].mxu0 %v2540
      %v2713 = vpop.f32.mrb[0].mxu0
      %v2714 = vadd.f32 %v2550, %v2713
      %v2715 = vpop.f32.mrb[0].mxu0
      %v2716 = vpop.f32.mrb[0].mxu0
      %v2717 = vadd.f32 %v2550, %v2716
      %v2718 = vpop.f32.mrb[0].mxu0
      %2719 = vmatprep.mubr.bf16.mxu0 0
      %2720 = vmatmul.mubr.bf16.gmra.mrb[0].mxu0 %v2541
      %v2721 = vpop.f32.mrb[0].mxu0
      %v2722 = vadd.f32 %v2550, %v2721
      %v2723 = vpop.f32.mrb[0].mxu0
      %v2724 = vpop.f32.mrb[0].mxu0
      %v2725 = vadd.f32 %v2550, %v2724
      %v2726 = vpop.f32.mrb[0].mxu0
      %2727 = vmatprep.mubr.bf16.mxu0 0
      %2728 = vmatmul.mubr.bf16.gmra.mrb[0].mxu0 %v2542
      %v2729 = vpop.f32.mrb[0].mxu0
      %v2730 = vadd.f32 %v2550, %v2729
      %v2731 = vpop.f32.mrb[0].mxu0
      %v2732 = vpop.f32.mrb[0].mxu0
      %v2733 = vadd.f32 %v2550, %v2732
      %v2734 = vpop.f32.mrb[0].mxu0
      %2735 = vmatprep.mubr.bf16.mxu0 0
      %2736 = vmatmul.mubr.bf16.gmra.mrb[0].mxu0 %v2543
      %v2737 = vpop.f32.mrb[0].mxu0
      %v2738 = vadd.f32 %v2550, %v2737
      %v2739 = vpop.f32.mrb[0].mxu0
      %v2740 = vpop.f32.mrb[0].mxu0
      %v2741 = vadd.f32 %v2550, %v2740
      %v2742 = vpop.f32.mrb[0].mxu0
      %2743 = vmatprep.mubr.bf16.mxu0 0
      %2744 = vmatmul.mubr.bf16.gmra.mrb[0].mxu0 %v2544
      %v2745 = vpop.f32.mrb[0].mxu0
      %v2746 = vadd.f32 %v2550, %v2745
      %v2747 = vpop.f32.mrb[0].mxu0
      %v2748 = vpop.f32.mrb[0].mxu0
      %v2749 = vadd.f32 %v2550, %v2748
      %v2750 = vpop.f32.mrb[0].mxu0
      %2751 = vmatprep.mubr.bf16.mxu0 0
      %2752 = vmatmul.mubr.bf16.gmra.mrb[0].mxu0 %v2545
      %v2753 = vpop.f32.mrb[0].mxu0
      %v2754 = vadd.f32 %v2550, %v2753
      %v2755 = vpop.f32.mrb[0].mxu0
      %v2756 = vpop.f32.mrb[0].mxu0
      %v2757 = vadd.f32 %v2550, %v2756
      %v2758 = vpop.f32.mrb[0].mxu0
      %2759 = vdwg.mxu0
      %v2760 = vmax.f32 %v2634, 0.0
      %v2761 = vmax.f32 %v2637, 0.0
      %v2762 = vmax.f32 %v2642, 0.0
      %v2763 = vmax.f32 %v2645, 0.0
      %v2764 = vmax.f32 %v2650, 0.0
      %v2765 = vmax.f32 %v2653, 0.0
      %v2766 = vmax.f32 %v2658, 0.0
      %v2767 = vmax.f32 %v2661, 0.0
      %v2768 = vmax.f32 %v2666, 0.0
      %v2769 = vmax.f32 %v2669, 0.0
      %v2770 = vmax.f32 %v2674, 0.0
      %v2771 = vmax.f32 %v2677, 0.0
      %v2772 = vmax.f32 %v2682, 0.0
      %v2773 = vmax.f32 %v2685, 0.0
      %v2774 = vmax.f32 %v2690, 0.0
      %v2775 = vmax.f32 %v2693, 0.0
      %v2776 = vmax.f32 %v2698, 0.0
      %v2777 = vmax.f32 %v2701, 0.0
      %v2778 = vmax.f32 %v2706, 0.0
      %v2779 = vmax.f32 %v2709, 0.0
      %v2780 = vmax.f32 %v2714, 0.0
      %v2781 = vmax.f32 %v2717, 0.0
      %v2782 = vmax.f32 %v2722, 0.0
      %v2783 = vmax.f32 %v2725, 0.0
      %v2784 = vmax.f32 %v2730, 0.0
      %v2785 = vmax.f32 %v2733, 0.0
      %v2786 = vmax.f32 %v2738, 0.0
      %v2787 = vmax.f32 %v2741, 0.0
      %v2788 = vmax.f32 %v2746, 0.0
      %v2789 = vmax.f32 %v2749, 0.0
      %v2790 = vmax.f32 %v2754, 0.0
      %v2791 = vmax.f32 %v2757, 0.0
      %v2792 = vld [vmem:[#allocation4] sm:$0xff]
      %v2793 = vld [vmem:[#allocation4 + $0x8] sm:$0xff]
      %v2794 = vld [vmem:[#allocation4 + $0x10] sm:$0xff]
      %v2795 = vld [vmem:[#allocation4 + $0x18] sm:$0xff]
      %v2796 = vld [vmem:[#allocation4 + $0x20] sm:$0xff]
      %v2797 = vld [vmem:[#allocation4 + $0x28] sm:$0xff]
      %v2798 = vld [vmem:[#allocation4 + $0x30] sm:$0xff]
      %v2799 = vld [vmem:[#allocation4 + $0x38] sm:$0xff]
      %v2800 = vpack.c.bf16 %v2761, %v2760
      %v2801 = vpack.c.bf16 %v2763, %v2762
      %v2802 = vpack.c.bf16 %v2765, %v2764
      %v2803 = vpack.c.bf16 %v2767, %v2766
      %v2804 = vpack.c.bf16 %v2769, %v2768
      %v2805 = vpack.c.bf16 %v2771, %v2770
      %v2806 = vpack.c.bf16 %v2773, %v2772
      %v2807 = vpack.c.bf16 %v2775, %v2774
      %v2808 = vpack.c.bf16 %v2777, %v2776
      %v2809 = vpack.c.bf16 %v2779, %v2778
      %v2810 = vpack.c.bf16 %v2781, %v2780
      %v2811 = vpack.c.bf16 %v2783, %v2782
      %v2812 = vpack.c.bf16 %v2785, %v2784
      %v2813 = vpack.c.bf16 %v2787, %v2786
      %v2814 = vpack.c.bf16 %v2789, %v2788
      %v2815 = vpack.c.bf16 %v2791, %v2790
      %2816 = vmatprep.subr.bf16.mxu0 0
      %2817 = vmatpush1.bf16.msra.mxu0 %v2800
      %2818 = vmatprep.subr.bf16.mxu0 0
      %2819 = vmatpush1.bf16.msra.mxu0 %v2801
      %2820 = vmatprep.subr.bf16.mxu0 0
      %2821 = vmatpush1.bf16.msra.mxu0 %v2802
      %2822 = vmatprep.subr.bf16.mxu0 0
      %2823 = vmatpush1.bf16.msra.mxu0 %v2803
      %2824 = vmatprep.subr.bf16.mxu0 0
      %2825 = vmatpush1.bf16.msra.mxu0 %v2804
      %2826 = vmatprep.subr.bf16.mxu0 0
      %2827 = vmatpush1.bf16.msra.mxu0 %v2805
      %2828 = vmatprep.subr.bf16.mxu0 0
      %2829 = vmatpush1.bf16.msra.mxu0 %v2806
      %2830 = vmatprep.subr.bf16.mxu0 0
      %2831 = vmatpush1.bf16.msra.mxu0 %v2807
      %2832 = vmatprep.subr.bf16.mxu0 0
      %2833 = vmatpush1.bf16.msra.mxu0 %v2808
      %2834 = vmatprep.subr.bf16.mxu0 0
      %2835 = vmatpush1.bf16.msra.mxu0 %v2809
      %2836 = vmatprep.subr.bf16.mxu0 0
      %2837 = vmatpush1.bf16.msra.mxu0 %v2810
      %2838 = vmatprep.subr.bf16.mxu0 0
      %2839 = vmatpush1.bf16.msra.mxu0 %v2811
      %2840 = vmatprep.subr.bf16.mxu0 0
      %2841 = vmatpush1.bf16.msra.mxu0 %v2812
      %2842 = vmatprep.subr.bf16.mxu0 0
      %2843 = vmatpush1.bf16.msra.mxu0 %v2813
      %2844 = vmatprep.subr.bf16.mxu0 0
      %2845 = vmatpush1.bf16.msra.mxu0 %v2814
      %2846 = vmatprep.subr.bf16.mxu0 0
      %2847 = vmatpush1.bf16.msra.mxu0 %v2815
      %2848 = vmatprep.mubr.bf16.mxu0 %v2793
      %2849 = vmatmul.mubr.bf16.gmra.mrb[0].mxu0 %v2792
      %v2850 = vpop.f32.mrb[0].mxu0
      %v2851 = vadd.f32 0.0, %v2850
      %v2852 = vpop.f32.mrb[0].mxu0
      %v2853 = vpop.f32.mrb[0].mxu0
      %v2854 = vadd.f32 0.0, %v2853
      %v2855 = vpop.f32.mrb[0].mxu0
      %2856 = vmatprep.mubr.bf16.mxu0 %v2795
      %2857 = vmatmul.mubr.bf16.gmra.mrb[0].mxu0 %v2794
      %v2858 = vpop.f32.mrb[0].mxu0
      %v2859 = vadd.f32 0.0, %v2858
      %v2860 = vpop.f32.mrb[0].mxu0
      %v2861 = vpop.f32.mrb[0].mxu0
      %v2862 = vadd.f32 0.0, %v2861
      %v2863 = vpop.f32.mrb[0].mxu0
      %2864 = vmatprep.mubr.bf16.mxu0 %v2797
      %2865 = vmatmul.mubr.bf16.gmra.mrb[0].mxu0 %v2796
      %v2866 = vpop.f32.mrb[0].mxu0
      %v2867 = vadd.f32 0.0, %v2866
      %v2868 = vpop.f32.mrb[0].mxu0
      %v2869 = vpop.f32.mrb[0].mxu0
      %v2870 = vadd.f32 0.0, %v2869
      %v2871 = vpop.f32.mrb[0].mxu0
      %2872 = vmatprep.mubr.bf16.mxu0 %v2799
      %2873 = vmatmul.mubr.bf16.gmra.mrb[0].mxu0 %v2798
      %v2874 = vpop.f32.mrb[0].mxu0
      %v2875 = vadd.f32 0.0, %v2874
      %v2876 = vpop.f32.mrb[0].mxu0
      %v2877 = vpop.f32.mrb[0].mxu0
      %v2878 = vadd.f32 0.0, %v2877
      %v2879 = vpop.f32.mrb[0].mxu0
      %2880 = vdwg.mxu0
      %v2881 = vld [vmem:[%s726] sm:$0xf]
      %v2882 = vld [vmem:[%s726 + $0x4] sm:$0xf]
      %v2883 = vld [vmem:[%s726 + $0x8] sm:$0xf]
      %v2884 = vld [vmem:[%s726 + $0xc] sm:$0xf]
      %v2885 = vld [vmem:[%s726 + $0x10] sm:$0xf]
      %v2886 = vld [vmem:[%s726 + $0x14] sm:$0xf]
      %v2887 = vld [vmem:[%s726 + $0x18] sm:$0xf]
      %v2888 = vld [vmem:[%s726 + $0x1c] sm:$0xf]
      %v2889 = vld [vmem:[%s726 + $0x20] sm:$0xf]
      %v2890 = vld [vmem:[%s726 + $0x24] sm:$0xf]
      %v2891 = vld [vmem:[%s726 + $0x28] sm:$0xf]
      %v2892 = vld [vmem:[%s726 + $0x2c] sm:$0xf]
      %v2893 = vld [vmem:[%s726 + $0x30] sm:$0xf]
      %v2894 = vld [vmem:[%s726 + $0x34] sm:$0xf]
      %v2895 = vld [vmem:[%s726 + $0x38] sm:$0xf]
      %v2896 = vld [vmem:[%s726 + $0x3c] sm:$0xf]
      %v2897 = vld [vmem:[%s726 + $0x40] sm:$0xf]
      %v2898 = vld [vmem:[%s726 + $0x44] sm:$0xf]
      %v2899 = vld [vmem:[%s726 + $0x48] sm:$0xf]
      %v2900 = vld [vmem:[%s726 + $0x4c] sm:$0xf]
      %v2901 = vld [vmem:[%s726 + $0x50] sm:$0xf]
      %v2902 = vld [vmem:[%s726 + $0x54] sm:$0xf]
      %v2903 = vld [vmem:[%s726 + $0x58] sm:$0xf]
      %v2904 = vld [vmem:[%s726 + $0x5c] sm:$0xf]
      %v2905 = vld [vmem:[%s726 + $0x60] sm:$0xf]
      %v2906 = vld [vmem:[%s726 + $0x64] sm:$0xf]
      %v2907 = vld [vmem:[%s726 + $0x68] sm:$0xf]
      %v2908 = vld [vmem:[%s726 + $0x6c] sm:$0xf]
      %v2909 = vld [vmem:[%s726 + $0x70] sm:$0xf]
      %v2910 = vld [vmem:[%s726 + $0x74] sm:$0xf]
      %v2911 = vld [vmem:[%s726 + $0x78] sm:$0xf]
      %v2912 = vld [vmem:[%s726 + $0x7c] sm:$0xf]
      %v2913 = vpack.c.bf16 %v2854, %v2851
      %v2914 = vpack.c.bf16 %v2862, %v2859
      %v2915 = vpack.c.bf16 %v2870, %v2867
      %v2916 = vpack.c.bf16 %v2878, %v2875
      %v2917 = vld [vmem:[%s8] sm:$0xff]
      %v2918 = vld [vmem:[%s8 + $0x8] sm:$0xff]
      %v2919 = vld [vmem:[%s8 + $0x10] sm:$0xff]
      %v2920 = vld [vmem:[%s8 + $0x18] sm:$0xff]
      %v2921 = vld [vmem:[%s8 + $0x20] sm:$0xff]
      %v2922 = vld [vmem:[%s8 + $0x28] sm:$0xff]
      %v2923 = vld [vmem:[%s8 + $0x30] sm:$0xff]
      %v2924 = vld [vmem:[%s8 + $0x38] sm:$0xff]
      %v2925 = vld [vmem:[%s735 + $0x2] sm:$0x1]
      %2927 = vset.pattern.permute.xlu0 0
      %2928 = vperm.xlu0 %2927, %v2917
      %v2929 = vpop.permute.xlu0 %2928
      %2932 = vset.pattern.permute.xlu0 0
      %2933 = vperm.xlu0 %2932, %v2918
      %v2934 = vpop.permute.xlu0 %2933
      %2937 = vset.pattern.permute.xlu0 0
      %2938 = vperm.xlu0 %2937, %v2919
      %v2939 = vpop.permute.xlu0 %2938
      %2942 = vset.pattern.permute.xlu0 0
      %2943 = vperm.xlu0 %2942, %v2920
      %v2944 = vpop.permute.xlu0 %2943
      %2947 = vset.pattern.permute.xlu0 0
      %2948 = vperm.xlu0 %2947, %v2921
      %v2949 = vpop.permute.xlu0 %2948
      %2952 = vset.pattern.permute.xlu0 0
      %2953 = vperm.xlu0 %2952, %v2922
      %v2954 = vpop.permute.xlu0 %2953
      %2957 = vset.pattern.permute.xlu0 0
      %2958 = vperm.xlu0 %2957, %v2923
      %v2959 = vpop.permute.xlu0 %2958
      %2962 = vset.pattern.permute.xlu0 0
      %2963 = vperm.xlu0 %2962, %v2924
      %v2964 = vpop.permute.xlu0 %2963
      %v2966 = vlaneseq
      %v2967 = vshrl.u32 %v2966, 7
      %v2968 = vsub.s32 0, %v2967
      %v2969 = vrot.slane %v2925, %v2968
      %v2970 = vmul.f32 %v2929, %v2969
      %v2971 = vmul.f32 %v2934, %v2969
      %v2972 = vmul.f32 %v2939, %v2969
      %v2973 = vmul.f32 %v2944, %v2969
      %v2974 = vmul.f32 %v2949, %v2969
      %v2975 = vmul.f32 %v2954, %v2969
      %v2976 = vmul.f32 %v2959, %v2969
      %v2977 = vmul.f32 %v2964, %v2969
      %v3010 = vunpack.c.l.b16 %v2881
      %v3011 = vunpack.c.l.b16 %v2882
      %v3012 = vunpack.c.l.b16 %v2883
      %v3013 = vunpack.c.l.b16 %v2884
      %v3014 = vunpack.c.l.b16 %v2885
      %v3015 = vunpack.c.l.b16 %v2886
      %v3016 = vunpack.c.l.b16 %v2887
      %v3017 = vunpack.c.l.b16 %v2888
      %v3018 = vunpack.c.l.b16 %v2889
      %v3019 = vunpack.c.l.b16 %v2890
      %v3020 = vunpack.c.l.b16 %v2891
      %v3021 = vunpack.c.l.b16 %v2892
      %v3022 = vunpack.c.l.b16 %v2893
      %v3023 = vunpack.c.l.b16 %v2894
      %v3024 = vunpack.c.l.b16 %v2895
      %v3025 = vunpack.c.l.b16 %v2896
      %v3026 = vunpack.c.l.b16 %v2897
      %v3027 = vunpack.c.l.b16 %v2898
      %v3028 = vunpack.c.l.b16 %v2899
      %v3029 = vunpack.c.l.b16 %v2900
      %v3030 = vunpack.c.l.b16 %v2901
      %v3031 = vunpack.c.l.b16 %v2902
      %v3032 = vunpack.c.l.b16 %v2903
      %v3033 = vunpack.c.l.b16 %v2904
      %v3034 = vunpack.c.l.b16 %v2905
      %v3035 = vunpack.c.l.b16 %v2906
      %v3036 = vunpack.c.l.b16 %v2907
      %v3037 = vunpack.c.l.b16 %v2908
      %v3038 = vunpack.c.l.b16 %v2909
      %v3039 = vunpack.c.l.b16 %v2910
      %v3040 = vunpack.c.l.b16 %v2911
      %v3041 = vunpack.c.l.b16 %v2912
      %v3042 = vpack.c.b16 %v3011, %v3010
      %v3043 = vpack.c.b16 %v3013, %v3012
      %v3044 = vpack.c.b16 %v3015, %v3014
      %v3045 = vpack.c.b16 %v3017, %v3016
      %v3046 = vpack.c.b16 %v3019, %v3018
      %v3047 = vpack.c.b16 %v3021, %v3020
      %v3048 = vpack.c.b16 %v3023, %v3022
      %v3049 = vpack.c.b16 %v3025, %v3024
      %v3050 = vpack.c.b16 %v3027, %v3026
      %v3051 = vpack.c.b16 %v3029, %v3028
      %v3052 = vpack.c.b16 %v3031, %v3030
      %v3053 = vpack.c.b16 %v3033, %v3032
      %v3054 = vpack.c.b16 %v3035, %v3034
      %v3055 = vpack.c.b16 %v3037, %v3036
      %v3056 = vpack.c.b16 %v3039, %v3038
      %v3057 = vpack.c.b16 %v3041, %v3040
      %3074 = vmatprep.subr.bf16.mxu0 0
      %3075 = vmatpush1.bf16.msra.mxu0 %v3042
      %3076 = vmatprep.subr.bf16.mxu0 0
      %3077 = vmatpush1.bf16.msra.mxu0 %v3043
      %3078 = vmatprep.subr.bf16.mxu0 0
      %3079 = vmatpush1.bf16.msra.mxu0 %v3044
      %3080 = vmatprep.subr.bf16.mxu0 0
      %3081 = vmatpush1.bf16.msra.mxu0 %v3045
      %3082 = vmatprep.subr.bf16.mxu0 0
      %3083 = vmatpush1.bf16.msra.mxu0 %v3046
      %3084 = vmatprep.subr.bf16.mxu0 0
      %3085 = vmatpush1.bf16.msra.mxu0 %v3047
      %3086 = vmatprep.subr.bf16.mxu0 0
      %3087 = vmatpush1.bf16.msra.mxu0 %v3048
      %3088 = vmatprep.subr.bf16.mxu0 0
      %3089 = vmatpush1.bf16.msra.mxu0 %v3049
      %3090 = vmatprep.subr.bf16.mxu0 0
      %3091 = vmatpush1.bf16.msra.mxu0 %v3050
      %3092 = vmatprep.subr.bf16.mxu0 0
      %3093 = vmatpush1.bf16.msra.mxu0 %v3051
      %3094 = vmatprep.subr.bf16.mxu0 0
      %3095 = vmatpush1.bf16.msra.mxu0 %v3052
      %3096 = vmatprep.subr.bf16.mxu0 0
      %3097 = vmatpush1.bf16.msra.mxu0 %v3053
      %3098 = vmatprep.subr.bf16.mxu0 0
      %3099 = vmatpush1.bf16.msra.mxu0 %v3054
      %3100 = vmatprep.subr.bf16.mxu0 0
      %3101 = vmatpush1.bf16.msra.mxu0 %v3055
      %3102 = vmatprep.subr.bf16.mxu0 0
      %3103 = vmatpush1.bf16.msra.mxu0 %v3056
      %3104 = vmatprep.subr.bf16.mxu0 0
      %3105 = vmatpush1.bf16.msra.mxu0 %v3057
      %3106 = vmatprep.mubr.bf16.mxu0 %v2913
      %3107 = vmatmul.mubr.bf16.gmra.mrb[0].mxu0 %v1760
      %v3108 = vpop.f32.mrb[0].mxu0
      %v3109 = vadd.f32 %v2970, %v3108
      %v3110 = vpop.f32.mrb[0].mxu0
      %v3111 = vpop.f32.mrb[0].mxu0
      %v3112 = vadd.f32 %v2971, %v3111
      %v3113 = vpop.f32.mrb[0].mxu0
      %3114 = vmatprep.mubr.bf16.mxu0 %v2914
      %3115 = vmatmul.mubr.bf16.gmra.mrb[0].mxu0 %v1761
      %v3116 = vpop.f32.mrb[0].mxu0
      %v3117 = vadd.f32 %v2972, %v3116
      %v3118 = vpop.f32.mrb[0].mxu0
      %v3119 = vpop.f32.mrb[0].mxu0
      %v3120 = vadd.f32 %v2973, %v3119
      %v3121 = vpop.f32.mrb[0].mxu0
      %3122 = vmatprep.mubr.bf16.mxu0 %v2915
      %3123 = vmatmul.mubr.bf16.gmra.mrb[0].mxu0 %v1762
      %v3124 = vpop.f32.mrb[0].mxu0
      %v3125 = vadd.f32 %v2974, %v3124
      %v3126 = vpop.f32.mrb[0].mxu0
      %v3127 = vpop.f32.mrb[0].mxu0
      %v3128 = vadd.f32 %v2975, %v3127
      %v3129 = vpop.f32.mrb[0].mxu0
      %3130 = vmatprep.mubr.bf16.mxu0 %v2916
      %3131 = vmatmul.mubr.bf16.gmra.mrb[0].mxu0 %v1763
      %v3132 = vpop.f32.mrb[0].mxu0
      %v3133 = vadd.f32 %v2976, %v3132
      %v3134 = vpop.f32.mrb[0].mxu0
      %v3135 = vpop.f32.mrb[0].mxu0
      %v3136 = vadd.f32 %v2977, %v3135
      %v3137 = vpop.f32.mrb[0].mxu0
      %3138 = vdwg.mxu0
      %v3139 = vld [vmem:[%s735 + $0x3] sm:$0x1]
      %v3140 = vlaneseq
      %v3141 = vshrl.u32 %v3140, 7
      %v3142 = vsub.s32 0, %v3141
      %v3143 = vrot.slane %v3139, %v3142
      %v3144 = vadd.f32 %v3109, %v3143
      %v3145 = vadd.f32 %v3112, %v3143
      %v3146 = vadd.f32 %v3117, %v3143
      %v3147 = vadd.f32 %v3120, %v3143
      %v3148 = vadd.f32 %v3125, %v3143
      %v3149 = vadd.f32 %v3128, %v3143
      %v3150 = vadd.f32 %v3133, %v3143
      %v3151 = vadd.f32 %v3136, %v3143
      %v3152 = vmax.f32 %v3144, 0.0
      %v3153 = vmax.f32 %v3145, 0.0
      %v3154 = vmax.f32 %v3146, 0.0
      %v3155 = vmax.f32 %v3147, 0.0
      %v3156 = vmax.f32 %v3148, 0.0
      %v3157 = vmax.f32 %v3149, 0.0
      %v3158 = vmax.f32 %v3150, 0.0
      %v3159 = vmax.f32 %v3151, 0.0
      %v3160 = vld [vmem:[%s731] sm:$0xf]
      %v3161 = vld [vmem:[%s731 + $0x4] sm:$0xf]
      %v3162 = vld [vmem:[%s731 + $0x8] sm:$0xf]
      %v3163 = vld [vmem:[%s731 + $0xc] sm:$0xf]
      %v3164 = vld [vmem:[%s731 + $0x10] sm:$0xf]
      %v3165 = vld [vmem:[%s731 + $0x14] sm:$0xf]
      %v3166 = vld [vmem:[%s731 + $0x18] sm:$0xf]
      %v3167 = vld [vmem:[%s731 + $0x1c] sm:$0xf]
      %v3168 = vld [vmem:[%s731 + $0x20] sm:$0xf]
      %v3169 = vld [vmem:[%s731 + $0x24] sm:$0xf]
      %v3170 = vld [vmem:[%s731 + $0x28] sm:$0xf]
      %v3171 = vld [vmem:[%s731 + $0x2c] sm:$0xf]
      %v3172 = vld [vmem:[%s731 + $0x30] sm:$0xf]
      %v3173 = vld [vmem:[%s731 + $0x34] sm:$0xf]
      %v3174 = vld [vmem:[%s731 + $0x38] sm:$0xf]
      %v3175 = vld [vmem:[%s731 + $0x3c] sm:$0xf]
      %v3176 = vpack.c.bf16 %v3153, %v3152
      %v3177 = vpack.c.bf16 %v3155, %v3154
      %v3178 = vpack.c.bf16 %v3157, %v3156
      %v3179 = vpack.c.bf16 %v3159, %v3158
      %v3180 = vld [vmem:[%s735 + $0x4] sm:$0x1]
      %v3181 = vlaneseq
      %v3182 = vshrl.u32 %v3181, 7
      %v3183 = vsub.s32 0, %v3182
      %v3184 = vrot.slane %v3180, %v3183
      %v3201 = vunpack.c.l.b16 %v3160
      %v3202 = vunpack.c.l.b16 %v3161
      %v3203 = vunpack.c.l.b16 %v3162
      %v3204 = vunpack.c.l.b16 %v3163
      %v3205 = vunpack.c.l.b16 %v3164
      %v3206 = vunpack.c.l.b16 %v3165
      %v3207 = vunpack.c.l.b16 %v3166
      %v3208 = vunpack.c.l.b16 %v3167
      %v3209 = vunpack.c.l.b16 %v3168
      %v3210 = vunpack.c.l.b16 %v3169
      %v3211 = vunpack.c.l.b16 %v3170
      %v3212 = vunpack.c.l.b16 %v3171
      %v3213 = vunpack.c.l.b16 %v3172
      %v3214 = vunpack.c.l.b16 %v3173
      %v3215 = vunpack.c.l.b16 %v3174
      %v3216 = vunpack.c.l.b16 %v3175
      %v3217 = vpack.c.b16 %v3202, %v3201
      %v3218 = vpack.c.b16 %v3204, %v3203
      %v3219 = vpack.c.b16 %v3206, %v3205
      %v3220 = vpack.c.b16 %v3208, %v3207
      %v3221 = vpack.c.b16 %v3210, %v3209
      %v3222 = vpack.c.b16 %v3212, %v3211
      %v3223 = vpack.c.b16 %v3214, %v3213
      %v3224 = vpack.c.b16 %v3216, %v3215
      %3233 = vmatprep.subr.bf16.mxu0 0
      %3234 = vmatpush1.bf16.msra.mxu0 %v3217
      %3235 = vmatprep.subr.bf16.mxu0 0
      %3236 = vmatpush1.bf16.msra.mxu0 %v3218
      %3237 = vmatprep.subr.bf16.mxu0 0
      %3238 = vmatpush1.bf16.msra.mxu0 %v3219
      %3239 = vmatprep.subr.bf16.mxu0 0
      %3240 = vmatpush1.bf16.msra.mxu0 %v3220
      %3241 = vmatprep.subr.bf16.mxu0 0
      %3242 = vmatpush1.bf16.msra.mxu0 %v3221
      %3243 = vmatprep.subr.bf16.mxu0 0
      %3244 = vmatpush1.bf16.msra.mxu0 %v3222
      %3245 = vmatprep.subr.bf16.mxu0 0
      %3246 = vmatpush1.bf16.msra.mxu0 %v3223
      %3247 = vmatprep.subr.bf16.mxu0 0
      %3248 = vmatpush1.bf16.msra.mxu0 %v3224
      %3249 = vmatprep.subr.bf16.mxu0 0
      %3250 = vmatpush1.bf16.msra.mxu0 0
      %3251 = vmatprep.subr.bf16.mxu0 0
      %3252 = vmatpush1.bf16.msra.mxu0 0
      %3253 = vmatprep.subr.bf16.mxu0 0
      %3254 = vmatpush1.bf16.msra.mxu0 0
      %3255 = vmatprep.subr.bf16.mxu0 0
      %3256 = vmatpush1.bf16.msra.mxu0 0
      %3257 = vmatprep.subr.bf16.mxu0 0
      %3258 = vmatpush1.bf16.msra.mxu0 0
      %3259 = vmatprep.subr.bf16.mxu0 0
      %3260 = vmatpush1.bf16.msra.mxu0 0
      %3261 = vmatprep.subr.bf16.mxu0 0
      %3262 = vmatpush1.bf16.msra.mxu0 0
      %3263 = vmatprep.subr.bf16.mxu0 0
      %3264 = vmatpush1.bf16.msra.mxu0 0
      %3265 = vmatprep.mubr.bf16.mxu0 0
      %3266 = vmatmul.mubr.bf16.gmra.mrb[0].mxu0 %v3176
      %v3267 = vpop.f32.mrb[0].mxu0
      %v3268 = vadd.f32 %v3184, %v3267
      %v3269 = vpop.f32.mrb[0].mxu0
      %v3270 = vpop.f32.mrb[0].mxu0
      %v3271 = vadd.f32 %v3184, %v3270
      %v3272 = vpop.f32.mrb[0].mxu0
      %3273 = vmatprep.mubr.bf16.mxu0 0
      %3274 = vmatmul.mubr.bf16.gmra.mrb[0].mxu0 %v3177
      %v3275 = vpop.f32.mrb[0].mxu0
      %v3276 = vadd.f32 %v3184, %v3275
      %v3277 = vpop.f32.mrb[0].mxu0
      %v3278 = vpop.f32.mrb[0].mxu0
      %v3279 = vadd.f32 %v3184, %v3278
      %v3280 = vpop.f32.mrb[0].mxu0
      %3281 = vmatprep.mubr.bf16.mxu0 0
      %3282 = vmatmul.mubr.bf16.gmra.mrb[0].mxu0 %v3178
      %v3283 = vpop.f32.mrb[0].mxu0
      %v3284 = vadd.f32 %v3184, %v3283
      %v3285 = vpop.f32.mrb[0].mxu0
      %v3286 = vpop.f32.mrb[0].mxu0
      %v3287 = vadd.f32 %v3184, %v3286
      %v3288 = vpop.f32.mrb[0].mxu0
      %3289 = vmatprep.mubr.bf16.mxu0 0
      %3290 = vmatmul.mubr.bf16.gmra.mrb[0].mxu0 %v3179
      %v3291 = vpop.f32.mrb[0].mxu0
      %v3292 = vadd.f32 %v3184, %v3291
      %v3293 = vpop.f32.mrb[0].mxu0
      %v3294 = vpop.f32.mrb[0].mxu0
      %v3295 = vadd.f32 %v3184, %v3294
      %v3296 = vpop.f32.mrb[0].mxu0
      %3297 = vdwg.mxu0
      %v3298 = vmax.f32 %v3268, 0.0
      %v3299 = vmax.f32 %v3271, 0.0
      %v3300 = vmax.f32 %v3276, 0.0
      %v3301 = vmax.f32 %v3279, 0.0
      %v3302 = vmax.f32 %v3284, 0.0
      %v3303 = vmax.f32 %v3287, 0.0
      %v3304 = vmax.f32 %v3292, 0.0
      %v3305 = vmax.f32 %v3295, 0.0
      %v3306 = vadd.f32 %v1736, %v3298
      %v3307 = vadd.f32 %v1737, %v3299
      %v3308 = vadd.f32 %v1738, %v3300
      %v3309 = vadd.f32 %v1739, %v3301
      %v3310 = vadd.f32 %v1740, %v3302
      %v3311 = vadd.f32 %v1741, %v3303
      %v3312 = vadd.f32 %v1742, %v3304
      %v3313 = vadd.f32 %v1743, %v3305
      %v3314 = vld [vmem:[%s735 + $0x5] sm:$0x1]
      %v3315 = vld [vmem:[%s735 + $0x6] sm:$0x1]
      %v3316 = vadd.f32 %v3306, %v3307
      %v3317 = vadd.f32 %v3316, %v3308
      %v3318 = vadd.f32 %v3317, %v3309
      %v3319 = vadd.f32 %v3318, %v3310
      %v3320 = vadd.f32 %v3319, %v3311
      %v3321 = vadd.f32 %v3320, %v3312
      %v3322 = vadd.f32 %v3321, %v3313
      %v3323 = vrot.slane %v3322, 4
      %v3324 = vadd.f32 %v3322, %v3323
      %v3325 = vrot.slane %v3324, 2
      %v3326 = vadd.f32 %v3324, %v3325
      %v3327 = vrot.slane %v3326, 1
      %v3328 = vadd.f32 %v3326, %v3327
      %v3329 = vrcp.pop 64.0
      %v3330 = vmul.f32 %v3328, %v3329
      %v3331 = vsub.f32 %v3306, %v3330
      %v3332 = vsub.f32 %v3307, %v3330
      %v3333 = vsub.f32 %v3308, %v3330
      %v3334 = vsub.f32 %v3309, %v3330
      %v3335 = vsub.f32 %v3310, %v3330
      %v3336 = vsub.f32 %v3311, %v3330
      %v3337 = vsub.f32 %v3312, %v3330
      %v3338 = vsub.f32 %v3313, %v3330
      %v3339 = vmul.f32 %v3331, %v3331
      %v3340 = vmul.f32 %v3332, %v3332
      %v3341 = vmul.f32 %v3333, %v3333
      %v3342 = vmul.f32 %v3334, %v3334
      %v3343 = vmul.f32 %v3335, %v3335
      %v3344 = vmul.f32 %v3336, %v3336
      %v3345 = vmul.f32 %v3337, %v3337
      %v3346 = vmul.f32 %v3338, %v3338
      %v3347 = vadd.f32 %v3339, %v3340
      %v3348 = vadd.f32 %v3347, %v3341
      %v3349 = vadd.f32 %v3348, %v3342
      %v3350 = vadd.f32 %v3349, %v3343
      %v3351 = vadd.f32 %v3350, %v3344
      %v3352 = vadd.f32 %v3351, %v3345
      %v3353 = vadd.f32 %v3352, %v3346
      %v3354 = vrot.slane %v3353, 4
      %v3355 = vadd.f32 %v3353, %v3354
      %v3356 = vrot.slane %v3355, 2
      %v3357 = vadd.f32 %v3355, %v3356
      %v3358 = vrot.slane %v3357, 1
      %v3359 = vadd.f32 %v3357, %v3358
      %v3360 = vmul.f32 %v3359, %v3329
      %v3361 = vadd.f32 %v3360, 1e-05
      %v3362 = vrsqrt.pop %v3361
      %v3363 = vmul.f32 %v3331, %v3362
      %v3364 = vmul.f32 %v3332, %v3362
      %v3365 = vmul.f32 %v3333, %v3362
      %v3366 = vmul.f32 %v3334, %v3362
      %v3367 = vmul.f32 %v3335, %v3362
      %v3368 = vmul.f32 %v3336, %v3362
      %v3369 = vmul.f32 %v3337, %v3362
      %v3370 = vmul.f32 %v3338, %v3362
      %v3371 = vlaneseq
      %v3372 = vshrl.u32 %v3371, 7
      %v3373 = vsub.s32 0, %v3372
      %v3374 = vrot.slane %v3314, %v3373
      %v3375 = vmul.f32 %v3363, %v3374
      %v3376 = vmul.f32 %v3364, %v3374
      %v3377 = vmul.f32 %v3365, %v3374
      %v3378 = vmul.f32 %v3366, %v3374
      %v3379 = vmul.f32 %v3367, %v3374
      %v3380 = vmul.f32 %v3368, %v3374
      %v3381 = vmul.f32 %v3369, %v3374
      %v3382 = vmul.f32 %v3370, %v3374
      %v3383 = vlaneseq
      %v3384 = vshrl.u32 %v3383, 7
      %v3385 = vsub.s32 0, %v3384
      %v3386 = vrot.slane %v3315, %v3385
      %v3387 = vadd.f32 %v3375, %v3386
      %v3388 = vadd.f32 %v3376, %v3386
      %v3389 = vadd.f32 %v3377, %v3386
      %v3390 = vadd.f32 %v3378, %v3386
      %v3391 = vadd.f32 %v3379, %v3386
      %v3392 = vadd.f32 %v3380, %v3386
      %v3393 = vadd.f32 %v3381, %v3386
      %v3394 = vadd.f32 %v3382, %v3386
      %3395 = vst [vmem:[#allocation2] sm:$0xff] %v3387
      %3396 = vst [vmem:[#allocation2 + $0x8] sm:$0xff] %v3388
      %3397 = vst [vmem:[#allocation2 + $0x10] sm:$0xff] %v3389
      %3398 = vst [vmem:[#allocation2 + $0x18] sm:$0xff] %v3390
      %3399 = vst [vmem:[#allocation2 + $0x20] sm:$0xff] %v3391
      %3400 = vst [vmem:[#allocation2 + $0x28] sm:$0xff] %v3392
      %3401 = vst [vmem:[#allocation2 + $0x30] sm:$0xff] %v3393
      %3402 = vst [vmem:[#allocation2 + $0x38] sm:$0xff] %v3394
      %p3403 = scmp.eq.s32.totalorder %s32, 2
      // Predicated region
      $region109: #{npde_gnn_forward.1} parent=103 // pred_check
        %p3404 = pneg %p3403
      $region110: #{npde_gnn_forward.1} parent=103 // pred_check_branch
        %3406 = sbr.rel (%p3404) target = $region112
      $region111: #{npde_gnn_forward.1} parent=103 // pred_region
        %v3407 = vld [vmem:[%s15] sm:$0xff]
        %v3408 = vld [vmem:[%s15 + $0x8] sm:$0xff]
        %v3409 = vld [vmem:[%s15 + $0x10] sm:$0xff]
        %v3410 = vld [vmem:[%s15 + $0x18] sm:$0xff]
        %v3411 = vld [vmem:[%s15 + $0x20] sm:$0xff]
        %v3412 = vld [vmem:[%s15 + $0x28] sm:$0xff]
        %v3413 = vld [vmem:[%s15 + $0x30] sm:$0xff]
        %v3414 = vld [vmem:[%s15 + $0x38] sm:$0xff]
        %v3415 = vld [vmem:[%s15 + $0x40] sm:$0xff]
        %v3416 = vld [vmem:[%s15 + $0x48] sm:$0xff]
        %v3417 = vld [vmem:[%s15 + $0x50] sm:$0xff]
        %v3418 = vld [vmem:[%s15 + $0x58] sm:$0xff]
        %v3419 = vld [vmem:[%s15 + $0x60] sm:$0xff]
        %v3420 = vld [vmem:[%s15 + $0x68] sm:$0xff]
        %v3421 = vld [vmem:[%s15 + $0x70] sm:$0xff]
        %v3422 = vld [vmem:[%s15 + $0x78] sm:$0xff]
        %v3423 = vpack.c.bf16 %v3388, %v3387
        %v3424 = vpack.c.bf16 %v3390, %v3389
        %v3425 = vpack.c.bf16 %v3392, %v3391
        %v3426 = vpack.c.bf16 %v3394, %v3393
        %v3427 = vld [vmem:[%s16] sm:$0x3]
        %v3429 = vlaneseq
        %v3430 = vshrl.u32 %v3429, 7
        %v3431 = vsub.s32 0, %v3430
        %v3432 = vrot.slane %v3427, %v3431
        %v3433 = vlaneseq
        %v3434 = vshrl.u32 %v3433, 7
        %v3435 = vsub.s32 1, %v3434
        %v3436 = vrot.slane %v3427, %v3435
        %v3455 = vunpack.c.l.b16 %v3407
        %v3456 = vunpack.c.h.b16 %v3407
        %v3457 = vunpack.c.l.b16 %v3408
        %v3458 = vunpack.c.h.b16 %v3408
        %v3459 = vunpack.c.l.b16 %v3409
        %v3460 = vunpack.c.h.b16 %v3409
        %v3461 = vunpack.c.l.b16 %v3410
        %v3462 = vunpack.c.h.b16 %v3410
        %v3463 = vunpack.c.l.b16 %v3411
        %v3464 = vunpack.c.h.b16 %v3411
        %v3465 = vunpack.c.l.b16 %v3412
        %v3466 = vunpack.c.h.b16 %v3412
        %v3467 = vunpack.c.l.b16 %v3413
        %v3468 = vunpack.c.h.b16 %v3413
        %v3469 = vunpack.c.l.b16 %v3414
        %v3470 = vunpack.c.h.b16 %v3414
        %v3471 = vunpack.c.l.b16 %v3415
        %v3472 = vunpack.c.h.b16 %v3415
        %v3473 = vunpack.c.l.b16 %v3416
        %v3474 = vunpack.c.h.b16 %v3416
        %v3475 = vunpack.c.l.b16 %v3417
        %v3476 = vunpack.c.h.b16 %v3417
        %v3477 = vunpack.c.l.b16 %v3418
        %v3478 = vunpack.c.h.b16 %v3418
        %v3479 = vunpack.c.l.b16 %v3419
        %v3480 = vunpack.c.h.b16 %v3419
        %v3481 = vunpack.c.l.b16 %v3420
        %v3482 = vunpack.c.h.b16 %v3420
        %v3483 = vunpack.c.l.b16 %v3421
        %v3484 = vunpack.c.h.b16 %v3421
        %v3485 = vunpack.c.l.b16 %v3422
        %v3486 = vunpack.c.h.b16 %v3422
        %v3487 = vpack.c.b16 %v3457, %v3455
        %v3488 = vpack.c.b16 %v3458, %v3456
        %v3489 = vpack.c.b16 %v3461, %v3459
        %v3490 = vpack.c.b16 %v3462, %v3460
        %v3491 = vpack.c.b16 %v3465, %v3463
        %v3492 = vpack.c.b16 %v3466, %v3464
        %v3493 = vpack.c.b16 %v3469, %v3467
        %v3494 = vpack.c.b16 %v3470, %v3468
        %v3495 = vpack.c.b16 %v3473, %v3471
        %v3496 = vpack.c.b16 %v3474, %v3472
        %v3497 = vpack.c.b16 %v3477, %v3475
        %v3498 = vpack.c.b16 %v3478, %v3476
        %v3499 = vpack.c.b16 %v3481, %v3479
        %v3500 = vpack.c.b16 %v3482, %v3480
        %v3501 = vpack.c.b16 %v3485, %v3483
        %v3502 = vpack.c.b16 %v3486, %v3484
        %3519 = vmatprep.subr.bf16.mxu0 %v3488
        %3520 = vmatpush1.bf16.msra.mxu0 %v3487
        %3521 = vmatprep.subr.bf16.mxu0 %v3490
        %3522 = vmatpush1.bf16.msra.mxu0 %v3489
        %3523 = vmatprep.subr.bf16.mxu0 %v3492
        %3524 = vmatpush1.bf16.msra.mxu0 %v3491
        %3525 = vmatprep.subr.bf16.mxu0 %v3494
        %3526 = vmatpush1.bf16.msra.mxu0 %v3493
        %3527 = vmatprep.subr.bf16.mxu0 %v3496
        %3528 = vmatpush1.bf16.msra.mxu0 %v3495
        %3529 = vmatprep.subr.bf16.mxu0 %v3498
        %3530 = vmatpush1.bf16.msra.mxu0 %v3497
        %3531 = vmatprep.subr.bf16.mxu0 %v3500
        %3532 = vmatpush1.bf16.msra.mxu0 %v3499
        %3533 = vmatprep.subr.bf16.mxu0 %v3502
        %3534 = vmatpush1.bf16.msra.mxu0 %v3501
        %3535 = vmatprep.subr.bf16.mxu0 0
        %3536 = vmatpush1.bf16.msra.mxu0 0
        %3537 = vmatprep.subr.bf16.mxu0 0
        %3538 = vmatpush1.bf16.msra.mxu0 0
        %3539 = vmatprep.subr.bf16.mxu0 0
        %3540 = vmatpush1.bf16.msra.mxu0 0
        %3541 = vmatprep.subr.bf16.mxu0 0
        %3542 = vmatpush1.bf16.msra.mxu0 0
        %3543 = vmatprep.subr.bf16.mxu0 0
        %3544 = vmatpush1.bf16.msra.mxu0 0
        %3545 = vmatprep.subr.bf16.mxu0 0
        %3546 = vmatpush1.bf16.msra.mxu0 0
        %3547 = vmatprep.subr.bf16.mxu0 0
        %3548 = vmatpush1.bf16.msra.mxu0 0
        %3549 = vmatprep.subr.bf16.mxu0 0
        %3550 = vmatpush1.bf16.msra.mxu0 0
        %3551 = vmatprep.mubr.bf16.mxu0 0
        %3552 = vmatmul.mubr.bf16.gmra.mrb[0].mxu0 %v3423
        %v3553 = vpop.f32.mrb[0].mxu0
        %v3554 = vadd.f32 %v3432, %v3553
        %v3555 = vpop.f32.mrb[0].mxu0
        %v3556 = vadd.f32 %v3436, %v3555
        %v3557 = vpop.f32.mrb[0].mxu0
        %v3558 = vadd.f32 %v3432, %v3557
        %v3559 = vpop.f32.mrb[0].mxu0
        %v3560 = vadd.f32 %v3436, %v3559
        %3561 = vmatprep.mubr.bf16.mxu0 0
        %3562 = vmatmul.mubr.bf16.gmra.mrb[0].mxu0 %v3424
        %v3563 = vpop.f32.mrb[0].mxu0
        %v3564 = vadd.f32 %v3432, %v3563
        %v3565 = vpop.f32.mrb[0].mxu0
        %v3566 = vadd.f32 %v3436, %v3565
        %v3567 = vpop.f32.mrb[0].mxu0
        %v3568 = vadd.f32 %v3432, %v3567
        %v3569 = vpop.f32.mrb[0].mxu0
        %v3570 = vadd.f32 %v3436, %v3569
        %3571 = vmatprep.mubr.bf16.mxu0 0
        %3572 = vmatmul.mubr.bf16.gmra.mrb[0].mxu0 %v3425
        %v3573 = vpop.f32.mrb[0].mxu0
        %v3574 = vadd.f32 %v3432, %v3573
        %v3575 = vpop.f32.mrb[0].mxu0
        %v3576 = vadd.f32 %v3436, %v3575
        %v3577 = vpop.f32.mrb[0].mxu0
        %v3578 = vadd.f32 %v3432, %v3577
        %v3579 = vpop.f32.mrb[0].mxu0
        %v3580 = vadd.f32 %v3436, %v3579
        %3581 = vmatprep.mubr.bf16.mxu0 0
        %3582 = vmatmul.mubr.bf16.gmra.mrb[0].mxu0 %v3426
        %v3583 = vpop.f32.mrb[0].mxu0
        %v3584 = vadd.f32 %v3432, %v3583
        %v3585 = vpop.f32.mrb[0].mxu0
        %v3586 = vadd.f32 %v3436, %v3585
        %v3587 = vpop.f32.mrb[0].mxu0
        %v3588 = vadd.f32 %v3432, %v3587
        %v3589 = vpop.f32.mrb[0].mxu0
        %v3590 = vadd.f32 %v3436, %v3589
        %3591 = vdwg.mxu0
        %v3592 = vmax.f32 %v3554, 0.0
        %v3593 = vmax.f32 %v3556, 0.0
        %v3594 = vmax.f32 %v3558, 0.0
        %v3595 = vmax.f32 %v3560, 0.0
        %v3596 = vmax.f32 %v3564, 0.0
        %v3597 = vmax.f32 %v3566, 0.0
        %v3598 = vmax.f32 %v3568, 0.0
        %v3599 = vmax.f32 %v3570, 0.0
        %v3600 = vmax.f32 %v3574, 0.0
        %v3601 = vmax.f32 %v3576, 0.0
        %v3602 = vmax.f32 %v3578, 0.0
        %v3603 = vmax.f32 %v3580, 0.0
        %v3604 = vmax.f32 %v3584, 0.0
        %v3605 = vmax.f32 %v3586, 0.0
        %v3606 = vmax.f32 %v3588, 0.0
        %v3607 = vmax.f32 %v3590, 0.0
        %v3608 = vld [vmem:[%s17] sm:$0xf]
        %v3609 = vld [vmem:[%s17 + $0x4] sm:$0xf]
        %v3610 = vld [vmem:[%s17 + $0x8] sm:$0xf]
        %v3611 = vld [vmem:[%s17 + $0xc] sm:$0xf]
        %v3612 = vld [vmem:[%s17 + $0x10] sm:$0xf]
        %v3613 = vld [vmem:[%s17 + $0x14] sm:$0xf]
        %v3614 = vld [vmem:[%s17 + $0x18] sm:$0xf]
        %v3615 = vld [vmem:[%s17 + $0x1c] sm:$0xf]
        %v3616 = vld [vmem:[%s17 + $0x20] sm:$0xf]
        %v3617 = vld [vmem:[%s17 + $0x24] sm:$0xf]
        %v3618 = vld [vmem:[%s17 + $0x28] sm:$0xf]
        %v3619 = vld [vmem:[%s17 + $0x2c] sm:$0xf]
        %v3620 = vld [vmem:[%s17 + $0x30] sm:$0xf]
        %v3621 = vld [vmem:[%s17 + $0x34] sm:$0xf]
        %v3622 = vld [vmem:[%s17 + $0x38] sm:$0xf]
        %v3623 = vld [vmem:[%s17 + $0x3c] sm:$0xf]
        %v3624 = vld [vmem:[%s17 + $0x40] sm:$0xf]
        %v3625 = vld [vmem:[%s17 + $0x44] sm:$0xf]
        %v3626 = vld [vmem:[%s17 + $0x48] sm:$0xf]
        %v3627 = vld [vmem:[%s17 + $0x4c] sm:$0xf]
        %v3628 = vld [vmem:[%s17 + $0x50] sm:$0xf]
        %v3629 = vld [vmem:[%s17 + $0x54] sm:$0xf]
        %v3630 = vld [vmem:[%s17 + $0x58] sm:$0xf]
        %v3631 = vld [vmem:[%s17 + $0x5c] sm:$0xf]
        %v3632 = vld [vmem:[%s17 + $0x60] sm:$0xf]
        %v3633 = vld [vmem:[%s17 + $0x64] sm:$0xf]
        %v3634 = vld [vmem:[%s17 + $0x68] sm:$0xf]
        %v3635 = vld [vmem:[%s17 + $0x6c] sm:$0xf]
        %v3636 = vld [vmem:[%s17 + $0x70] sm:$0xf]
        %v3637 = vld [vmem:[%s17 + $0x74] sm:$0xf]
        %v3638 = vld [vmem:[%s17 + $0x78] sm:$0xf]
        %v3639 = vld [vmem:[%s17 + $0x7c] sm:$0xf]
        %v3640 = vpack.c.bf16 %v3594, %v3592
        %v3641 = vpack.c.bf16 %v3595, %v3593
        %v3642 = vpack.c.bf16 %v3598, %v3596
        %v3643 = vpack.c.bf16 %v3599, %v3597
        %v3644 = vpack.c.bf16 %v3602, %v3600
        %v3645 = vpack.c.bf16 %v3603, %v3601
        %v3646 = vpack.c.bf16 %v3606, %v3604
        %v3647 = vpack.c.bf16 %v3607, %v3605
        %v3648 = vld [vmem:[%s18] sm:$0x1]
        %v3650 = vlaneseq
        %v3651 = vshrl.u32 %v3650, 7
        %v3652 = vsub.s32 0, %v3651
        %v3653 = vrot.slane %v3648, %v3652
        %v3687 = vunpack.c.l.b16 %v3608
        %v3688 = vunpack.c.l.b16 %v3609
        %v3689 = vunpack.c.l.b16 %v3610
        %v3690 = vunpack.c.l.b16 %v3611
        %v3691 = vunpack.c.l.b16 %v3612
        %v3692 = vunpack.c.l.b16 %v3613
        %v3693 = vunpack.c.l.b16 %v3614
        %v3694 = vunpack.c.l.b16 %v3615
        %v3695 = vunpack.c.l.b16 %v3616
        %v3696 = vunpack.c.l.b16 %v3617
        %v3697 = vunpack.c.l.b16 %v3618
        %v3698 = vunpack.c.l.b16 %v3619
        %v3699 = vunpack.c.l.b16 %v3620
        %v3700 = vunpack.c.l.b16 %v3621
        %v3701 = vunpack.c.l.b16 %v3622
        %v3702 = vunpack.c.l.b16 %v3623
        %v3703 = vunpack.c.l.b16 %v3624
        %v3704 = vunpack.c.l.b16 %v3625
        %v3705 = vunpack.c.l.b16 %v3626
        %v3706 = vunpack.c.l.b16 %v3627
        %v3707 = vunpack.c.l.b16 %v3628
        %v3708 = vunpack.c.l.b16 %v3629
        %v3709 = vunpack.c.l.b16 %v3630
        %v3710 = vunpack.c.l.b16 %v3631
        %v3711 = vunpack.c.l.b16 %v3632
        %v3712 = vunpack.c.l.b16 %v3633
        %v3713 = vunpack.c.l.b16 %v3634
        %v3714 = vunpack.c.l.b16 %v3635
        %v3715 = vunpack.c.l.b16 %v3636
        %v3716 = vunpack.c.l.b16 %v3637
        %v3717 = vunpack.c.l.b16 %v3638
        %v3718 = vunpack.c.l.b16 %v3639
        %v3719 = vpack.c.b16 %v3688, %v3687
        %v3720 = vpack.c.b16 %v3690, %v3689
        %v3721 = vpack.c.b16 %v3692, %v3691
        %v3722 = vpack.c.b16 %v3694, %v3693
        %v3723 = vpack.c.b16 %v3696, %v3695
        %v3724 = vpack.c.b16 %v3698, %v3697
        %v3725 = vpack.c.b16 %v3700, %v3699
        %v3726 = vpack.c.b16 %v3702, %v3701
        %v3727 = vpack.c.b16 %v3704, %v3703
        %v3728 = vpack.c.b16 %v3706, %v3705
        %v3729 = vpack.c.b16 %v3708, %v3707
        %v3730 = vpack.c.b16 %v3710, %v3709
        %v3731 = vpack.c.b16 %v3712, %v3711
        %v3732 = vpack.c.b16 %v3714, %v3713
        %v3733 = vpack.c.b16 %v3716, %v3715
        %v3734 = vpack.c.b16 %v3718, %v3717
        %3751 = vmatprep.subr.bf16.mxu0 0
        %3752 = vmatpush1.bf16.msra.mxu0 %v3719
        %3753 = vmatprep.subr.bf16.mxu0 0
        %3754 = vmatpush1.bf16.msra.mxu0 %v3720
        %3755 = vmatprep.subr.bf16.mxu0 0
        %3756 = vmatpush1.bf16.msra.mxu0 %v3721
        %3757 = vmatprep.subr.bf16.mxu0 0
        %3758 = vmatpush1.bf16.msra.mxu0 %v3722
        %3759 = vmatprep.subr.bf16.mxu0 0
        %3760 = vmatpush1.bf16.msra.mxu0 %v3723
        %3761 = vmatprep.subr.bf16.mxu0 0
        %3762 = vmatpush1.bf16.msra.mxu0 %v3724
        %3763 = vmatprep.subr.bf16.mxu0 0
        %3764 = vmatpush1.bf16.msra.mxu0 %v3725
        %3765 = vmatprep.subr.bf16.mxu0 0
        %3766 = vmatpush1.bf16.msra.mxu0 %v3726
        %3767 = vmatprep.subr.bf16.mxu0 0
        %3768 = vmatpush1.bf16.msra.mxu0 %v3727
        %3769 = vmatprep.subr.bf16.mxu0 0
        %3770 = vmatpush1.bf16.msra.mxu0 %v3728
        %3771 = vmatprep.subr.bf16.mxu0 0
        %3772 = vmatpush1.bf16.msra.mxu0 %v3729
        %3773 = vmatprep.subr.bf16.mxu0 0
        %3774 = vmatpush1.bf16.msra.mxu0 %v3730
        %3775 = vmatprep.subr.bf16.mxu0 0
        %3776 = vmatpush1.bf16.msra.mxu0 %v3731
        %3777 = vmatprep.subr.bf16.mxu0 0
        %3778 = vmatpush1.bf16.msra.mxu0 %v3732
        %3779 = vmatprep.subr.bf16.mxu0 0
        %3780 = vmatpush1.bf16.msra.mxu0 %v3733
        %3781 = vmatprep.subr.bf16.mxu0 0
        %3782 = vmatpush1.bf16.msra.mxu0 %v3734
        %3783 = vmatprep.mubr.bf16.mxu0 %v3641
        %3784 = vmatmul.mubr.bf16.gmra.mrb[0].mxu0 %v3640
        %v3785 = vpop.f32.mrb[0].mxu0
        %v3786 = vadd.f32 %v3653, %v3785
        %v3787 = vpop.f32.mrb[0].mxu0
        %v3788 = vpop.f32.mrb[0].mxu0
        %v3789 = vadd.f32 %v3653, %v3788
        %v3790 = vpop.f32.mrb[0].mxu0
        %3791 = vmatprep.mubr.bf16.mxu0 %v3643
        %3792 = vmatmul.mubr.bf16.gmra.mrb[0].mxu0 %v3642
        %v3793 = vpop.f32.mrb[0].mxu0
        %v3794 = vadd.f32 %v3653, %v3793
        %v3795 = vpop.f32.mrb[0].mxu0
        %v3796 = vpop.f32.mrb[0].mxu0
        %v3797 = vadd.f32 %v3653, %v3796
        %v3798 = vpop.f32.mrb[0].mxu0
        %3799 = vmatprep.mubr.bf16.mxu0 %v3645
        %3800 = vmatmul.mubr.bf16.gmra.mrb[0].mxu0 %v3644
        %v3801 = vpop.f32.mrb[0].mxu0
        %v3802 = vadd.f32 %v3653, %v3801
        %v3803 = vpop.f32.mrb[0].mxu0
        %v3804 = vpop.f32.mrb[0].mxu0
        %v3805 = vadd.f32 %v3653, %v3804
        %v3806 = vpop.f32.mrb[0].mxu0
        %3807 = vmatprep.mubr.bf16.mxu0 %v3647
        %3808 = vmatmul.mubr.bf16.gmra.mrb[0].mxu0 %v3646
        %v3809 = vpop.f32.mrb[0].mxu0
        %v3810 = vadd.f32 %v3653, %v3809
        %v3811 = vpop.f32.mrb[0].mxu0
        %v3812 = vpop.f32.mrb[0].mxu0
        %v3813 = vadd.f32 %v3653, %v3812
        %v3814 = vpop.f32.mrb[0].mxu0
        %3815 = vdwg.mxu0
        %v3816 = vld [vmem:[%s19] sm:$0xff]
        %v3817 = vld [vmem:[%s19 + $0x8] sm:$0xff]
        %v3818 = vld [vmem:[%s19 + $0x10] sm:$0xff]
        %v3819 = vld [vmem:[%s19 + $0x18] sm:$0xff]
        %v3820 = vld [vmem:[%s19 + $0x20] sm:$0xff]
        %v3821 = vld [vmem:[%s19 + $0x28] sm:$0xff]
        %v3822 = vld [vmem:[%s19 + $0x30] sm:$0xff]
        %v3823 = vld [vmem:[%s19 + $0x38] sm:$0xff]
        %v3824 = vld [vmem:[%s20] sm:$0x1]
        %v3826 = vlaneseq
        %v3827 = vshrl.u32 %v3826, 7
        %v3828 = vsub.s32 0, %v3827
        %v3829 = vrot.slane %v3824, %v3828
        %v3831 = vmul.f32 %v3829, %v3786
        %v3832 = vmul.f32 %v3829, %v3789
        %v3833 = vmul.f32 %v3829, %v3794
        %v3834 = vmul.f32 %v3829, %v3797
        %v3835 = vmul.f32 %v3829, %v3802
        %v3836 = vmul.f32 %v3829, %v3805
        %v3837 = vmul.f32 %v3829, %v3810
        %v3838 = vmul.f32 %v3829, %v3813
        %3840 = vset.pattern.permute.xlu0 0
        %3841 = vperm.xlu0 %3840, %v3816
        %v3842 = vpop.permute.xlu0 %3841
        %3845 = vset.pattern.permute.xlu0 0
        %3846 = vperm.xlu0 %3845, %v3817
        %v3847 = vpop.permute.xlu0 %3846
        %3850 = vset.pattern.permute.xlu0 0
        %3851 = vperm.xlu0 %3850, %v3818
        %v3852 = vpop.permute.xlu0 %3851
        %3855 = vset.pattern.permute.xlu0 0
        %3856 = vperm.xlu0 %3855, %v3819
        %v3857 = vpop.permute.xlu0 %3856
        %3860 = vset.pattern.permute.xlu0 0
        %3861 = vperm.xlu0 %3860, %v3820
        %v3862 = vpop.permute.xlu0 %3861
        %3865 = vset.pattern.permute.xlu0 0
        %3866 = vperm.xlu0 %3865, %v3821
        %v3867 = vpop.permute.xlu0 %3866
        %3870 = vset.pattern.permute.xlu0 0
        %3871 = vperm.xlu0 %3870, %v3822
        %v3872 = vpop.permute.xlu0 %3871
        %3875 = vset.pattern.permute.xlu0 0
        %3876 = vperm.xlu0 %3875, %v3823
        %v3877 = vpop.permute.xlu0 %3876
        %v3879 = vadd.f32 %v3842, %v3831
        %v3880 = vadd.f32 %v3847, %v3832
        %v3881 = vadd.f32 %v3852, %v3833
        %v3882 = vadd.f32 %v3857, %v3834
        %v3883 = vadd.f32 %v3862, %v3835
        %v3884 = vadd.f32 %v3867, %v3836
        %v3885 = vadd.f32 %v3872, %v3837
        %v3886 = vadd.f32 %v3877, %v3838
        %3887 = vst [vmem:[%s21] sm:$0xff] %v3879
        %3888 = vst [vmem:[%s21 + $0x8] sm:$0xff] %v3880
        %3889 = vst [vmem:[%s21 + $0x10] sm:$0xff] %v3881
        %3890 = vst [vmem:[%s21 + $0x18] sm:$0xff] %v3882
        %3891 = vst [vmem:[%s21 + $0x20] sm:$0xff] %v3883
        %3892 = vst [vmem:[%s21 + $0x28] sm:$0xff] %v3884
        %3893 = vst [vmem:[%s21 + $0x30] sm:$0xff] %v3885
        %3894 = vst [vmem:[%s21 + $0x38] sm:$0xff] %v3886
      $region112: #{npde_gnn_forward.1} parent=103 // pred_fallthru
        _
      // Predicated region
      $region113: #{npde_gnn_forward.1} parent=103 // pred_check
        %p3895 = pneg %p516
      $region114: #{npde_gnn_forward.1} parent=103 // pred_check_branch
        %3897 = sbr.rel (%p3895) target = $region116
      $region115: #{npde_gnn_forward.1} parent=103 // pred_region
        _
      $region116: #{npde_gnn_forward.1} parent=103 // pred_fallthru
        _
      // Predicated region
      $region117: #{npde_gnn_forward.1} parent=103 // pred_check
        %p3898 = pneg %p516
      $region118: #{npde_gnn_forward.1} parent=103 // pred_check_branch
        %3900 = sbr.rel (%p3898) target = $region120
      $region119: #{npde_gnn_forward.1} parent=103 // pred_region
        _
      $region120: #{npde_gnn_forward.1} parent=103 // pred_fallthru
        _
    $region104: #{npde_gnn_forward.1} parent=5 // pred_fallthru
      _
    %p3901 = scmp.le.s32.totalorder 2, %s27
    // Predicated region
    $region121: #{npde_gnn_forward.1} parent=5 // pred_check
      %p3902 = pneg %p3901
    $region122: #{npde_gnn_forward.1} parent=5 // pred_check_branch
      %3904 = sbr.rel (%p3902) target = $region124
    $region123: #{npde_gnn_forward.1} parent=5 // pred_region
      %s3905 = ssub.s32 %s27, 2
    $region124: #{npde_gnn_forward.1} parent=5 // pred_fallthru
      _
  $region6: #{npde_gnn_forward.1} parent=0 // loop_footer
    %s31 = sadd.s32 1, %s27
  $region7: #{npde_gnn_forward.1} parent=0 // loop_footer_branch
    %26 = sbr.rel target = $region3
  $region8: #{npde_gnn_forward.1} parent=0 // loop_exit
    _

</llo_original>
